<compile_context>
chip_gen: v5e
topology: v5e:2x2
jax: 0.10.0
libtpu: 0.0.40
codegen_flags: <defaults>
</compile_context>

<pallas_src>
import functools

import jax
import jax.numpy as jnp
from jax.experimental import pallas as pl
from jax.experimental.pallas import tpu as pltpu

_DEFAULT_TILE_L = 2048


def _vmem_limit_bytes():
    """Physical VMEM minus headroom for compiler scratch / double buffers."""
    try:
        cap = pltpu.get_tpu_info().vmem_capacity_bytes
    except Exception:
        cap = 64 * 1024 * 1024            # conservative: v7x per-TC physical size
    return int(min(max(cap - 16 * 1024 * 1024, 32 * 1024 * 1024),
                   112 * 1024 * 1024))


# ----------------------- kernel 1: conv stack + max pool -----------------------

def _conv_max_kernel(x_ref, w1_ref, b1_ref, w2_ref, b2_ref, w3_ref, b3_ref, o_ref):
    """conv1..3 (BN scale pre-folded into weights) -> relu -> running max over L."""
    @pl.when(pl.program_id(1) == 0)
    def _():
        o_ref[...] = jnp.zeros_like(o_ref)   # ReLU output >= 0, so 0 is a safe identity

    x = x_ref[0]                                                       # (C, tile_l) bf16
    h = jnp.dot(w1_ref[...], x, preferred_element_type=jnp.float32)    # (64, tile_l) f32
    h = jnp.maximum(h + b1_ref[...], 0.0)
    h = jnp.dot(w2_ref[...], h.astype(jnp.bfloat16),
                preferred_element_type=jnp.float32)                    # (128, tile_l)
    h = jnp.maximum(h + b2_ref[...], 0.0)
    h = jnp.dot(w3_ref[...], h.astype(jnp.bfloat16),
                preferred_element_type=jnp.float32)                    # (1024, tile_l)
    h = jnp.maximum(h + b3_ref[...], 0.0)

    m = jnp.max(h, axis=-1, keepdims=True)                             # (1024, 1)
    o_ref[0] = jnp.maximum(o_ref[0], m)


def fused_conv_bn_relu_max(x_bcl, w1t, b1, w2t, b2, w3t, b3, *, tile_l=_DEFAULT_TILE_L):
    """x in native (B, C, L); weights are bf16, BN-scale-folded, transposed to (cout, cin)."""
    B, C, L = x_bcl.shape
    if L <= tile_l:
        tile_l, n_l = L, 1
    else:
        tile_l = max(128, (tile_l // 128) * 128)        # lane-dense block width
        n_l = pl.cdiv(L, tile_l)
        l_pad = n_l * tile_l
        if l_pad != L:
            # Edge replication: padded columns duplicate a real point, so they can never
            # change the max and no in-kernel remainder mask is needed.
            x_bcl = jnp.pad(x_bcl, ((0, 0), (0, 0), (0, l_pad - L)), mode="edge")
    l_total = n_l * tile_l

    col = lambda v: v.reshape(-1, 1).astype(jnp.float32)
    const = lambda b, l: (0, 0)

    flops = 2 * B * l_total * (C * 64 + 64 * 128 + 128 * 1024)
    bytes_accessed = (B * C * l_total * 2
                      + 2 * (64 * C + 128 * 64 + 1024 * 128)
                      + 4 * (64 + 128 + 1024)
                      + B * 1024 * 4)

    out = pl.pallas_call(
        _conv_max_kernel,
        out_shape=jax.ShapeDtypeStruct((B, 1024, 1), jnp.float32),
        grid=(B, n_l),
        in_specs=[
            pl.BlockSpec((1, C, tile_l), lambda b, l: (b, 0, l)),
            pl.BlockSpec(w1t.shape, const), pl.BlockSpec((64, 1), const),
            pl.BlockSpec(w2t.shape, const), pl.BlockSpec((128, 1), const),
            pl.BlockSpec(w3t.shape, const), pl.BlockSpec((1024, 1), const),
        ],
        out_specs=pl.BlockSpec((1, 1024, 1), lambda b, l: (b, 0, 0)),
        compiler_params=pltpu.CompilerParams(
            dimension_semantics=("parallel", "arbitrary"),
            vmem_limit_bytes=_vmem_limit_bytes()),
        cost_estimate=pl.CostEstimate(flops=flops, transcendentals=0,
                                      bytes_accessed=bytes_accessed),
    )(x_bcl.astype(jnp.bfloat16),
      w1t, col(b1), w2t, col(b2), w3t, col(b3))
    return out.reshape(B, 1024)


# ----------------------- kernel 2: fused fc1/fc2/fc3 head ----------------------

def _fc_head_kernel(x_ref, w1_ref, b1_ref, w2_ref, b2_ref, w3_ref, b3_ref, o_ref):
    h = jnp.dot(x_ref[...], w1_ref[...], preferred_element_type=jnp.float32)
    h = jnp.maximum(h + b1_ref[...], 0.0)
    h = jnp.dot(h.astype(jnp.bfloat16), w2_ref[...], preferred_element_type=jnp.float32)
    h = jnp.maximum(h + b2_ref[...], 0.0)
    h = jnp.dot(h.astype(jnp.bfloat16), w3_ref[...], preferred_element_type=jnp.float32)
    o_ref[...] = h + b3_ref[...]


def fused_fc_head(pooled_bf16, w1, b1, w2, b2, w3, b3, *, tile_b=256):
    B = pooled_bf16.shape[0]
    N = w3.shape[1]
    n_pad = ((N + 127) // 128) * 128                    # lane-dense output slab
    if n_pad != N:
        w3 = jnp.pad(w3, ((0, 0), (0, n_pad - N)))
        b3 = jnp.pad(b3, ((0, n_pad - N),))

    tile_b = min(tile_b, B)
    n_b = pl.cdiv(B, tile_b)
    b_pad = n_b * tile_b
    if b_pad != B:
        pooled_bf16 = jnp.pad(pooled_bf16, ((0, b_pad - B), (0, 0)))

    row = lambda v: v.reshape(1, -1).astype(jnp.float32)
    const = lambda i: (0, 0)

    flops = 2 * b_pad * (1024 * 512 + 512 * 256 + 256 * n_pad)
    bytes_accessed = (b_pad * 1024 * 2
                      + 2 * (1024 * 512 + 512 * 256 + 256 * n_pad)
                      + 4 * (512 + 256 + n_pad)
                      + b_pad * n_pad * 4)

    out = pl.pallas_call(
        _fc_head_kernel,
        out_shape=jax.ShapeDtypeStruct((b_pad, n_pad), jnp.float32),
        grid=(n_b,),
        in_specs=[
            pl.BlockSpec((tile_b, 1024), lambda i: (i, 0)),
            pl.BlockSpec((1024, 512), const), pl.BlockSpec((1, 512), const),
            pl.BlockSpec((512, 256), const), pl.BlockSpec((1, 256), const),
            pl.BlockSpec((256, n_pad), const), pl.BlockSpec((1, n_pad), const),
        ],
        out_specs=pl.BlockSpec((tile_b, n_pad), lambda i: (i, 0)),
        compiler_params=pltpu.CompilerParams(
            dimension_semantics=("parallel",),
            vmem_limit_bytes=_vmem_limit_bytes()),
        cost_estimate=pl.CostEstimate(flops=flops, transcendentals=0,
                                      bytes_accessed=bytes_accessed),
    )(pooled_bf16,
      w1.astype(jnp.bfloat16), row(b1),
      w2.astype(jnp.bfloat16), row(b2),
      w3.astype(jnp.bfloat16), row(b3))
    return out[:B, :N]


# --------------------------- parameter construction ---------------------------

def init_params(key, channel):
    layer_dims = {
        "conv1": (channel, 64),
        "conv2": (64, 128),
        "conv3": (128, 1024),
        "fc1": (1024, 512),
        "fc2": (512, 256),
        "fc3": (256, channel * channel),
    }
    bn_dims = {"bn1": 64, "bn2": 128, "bn3": 1024, "bn4": 512, "bn5": 256}

    params = {}
    keys = jax.random.split(key, len(layer_dims) * 2 + len(bn_dims) * 4)
    ki = 0
    for name, (cin, cout) in layer_dims.items():
        w = jax.random.normal(keys[ki], (cin, cout), jnp.float32) * (1.0 / jnp.sqrt(cin)); ki += 1
        b = jax.random.normal(keys[ki], (cout,), jnp.float32) * 0.05; ki += 1
        params[name + "_w"] = w
        params[name + "_b"] = b
    for name, c in bn_dims.items():
        params[name + "_gamma"] = jax.random.uniform(keys[ki], (c,), jnp.float32, 0.5, 1.5); ki += 1
        params[name + "_beta"] = jax.random.normal(keys[ki], (c,), jnp.float32) * 0.1; ki += 1
        params[name + "_mean"] = jax.random.normal(keys[ki], (c,), jnp.float32) * 0.1; ki += 1
        params[name + "_var"] = jax.random.uniform(keys[ki], (c,), jnp.float32, 0.5, 1.5); ki += 1
    return params


def fold_bn(params, layer, bn, eps=1e-5):
    """Fold conv/fc bias + inference BatchNorm into (scale, shift)."""
    s = params[bn + "_gamma"] / jnp.sqrt(params[bn + "_var"] + eps)
    shift = s * (params[layer + "_b"] - params[bn + "_mean"]) + params[bn + "_beta"]
    return s, shift


def _scaled_w(params, layer, scale):
    """Fold the BN scale into the weight columns in f32, then cast once to bf16."""
    return (params[layer + "_w"] * scale[None, :]).astype(jnp.bfloat16)


# -------------------------------- forward pass --------------------------------

def stnkd_forward(x, params, channel, tile_l=_DEFAULT_TILE_L):
    B, C, L = x.shape
    assert C == channel

    s1, sh1 = fold_bn(params, "conv1", "bn1")
    s2, sh2 = fold_bn(params, "conv2", "bn2")
    s3, sh3 = fold_bn(params, "conv3", "bn3")
    # Channel-major kernel: BN-scale-folded weights transposed to (cout, cin).
    w1t = jnp.transpose(_scaled_w(params, "conv1", s1))
    w2t = jnp.transpose(_scaled_w(params, "conv2", s2))
    w3t = jnp.transpose(_scaled_w(params, "conv3", s3))
    pooled = fused_conv_bn_relu_max(x, w1t, sh1, w2t, sh2, w3t, sh3,
                                    tile_l=tile_l)          # (B, 1024) f32

    s4, sh4 = fold_bn(params, "fc1", "bn4")
    s5, sh5 = fold_bn(params, "fc2", "bn5")
    w4 = params["fc1_w"] * s4[None, :]
    w5 = params["fc2_w"] * s5[None, :]
    iden = jnp.eye(channel, dtype=jnp.float32).reshape(-1)
    b6 = params["fc3_b"] + iden                              # batch-constant identity fold
    out = fused_fc_head(pooled.astype(jnp.bfloat16),
                        w4, sh4, w5, sh5, params["fc3_w"], b6)
    return out.reshape(B, channel, channel)


# pure-JAX reference with identical folding / bf16-operand / f32-accumulate math
def stnkd_reference(x, params, channel):
    B, C, L = x.shape
    s1, sh1 = fold_bn(params, "conv1", "bn1")
    s2, sh2 = fold_bn(params, "conv2", "bn2")
    s3, sh3 = fold_bn(params, "conv3", "bn3")
    s4, sh4 = fold_bn(params, "fc1", "bn4")
    s5, sh5 = fold_bn(params, "fc2", "bn5")

    def lin(h, w_bf16, shift, relu=True):
        y = jnp.dot(h.astype(jnp.bfloat16), w_bf16, preferred_element_type=jnp.float32)
        y = y + shift
        return jnp.maximum(y, 0.0) if relu else y

    h = jnp.transpose(x, (0, 2, 1)).reshape(B * L, C)
    h = lin(h, _scaled_w(params, "conv1", s1), sh1)
    h = lin(h, _scaled_w(params, "conv2", s2), sh2)
    h = lin(h, _scaled_w(params, "conv3", s3), sh3)
    h = jnp.max(h.reshape(B, L, 1024), axis=1)
    h = lin(h, (params["fc1_w"] * s4[None, :]).astype(jnp.bfloat16), sh4)
    h = lin(h, (params["fc2_w"] * s5[None, :]).astype(jnp.bfloat16), sh5)
    iden = jnp.eye(channel, dtype=jnp.float32).reshape(-1)
    h = lin(h, params["fc3_w"].astype(jnp.bfloat16), params["fc3_b"] + iden, relu=False)
    return h.reshape(B, channel, channel)


if __name__ == "__main__":
    channel = 4        # small STNkd config for the test; module default is 64
    B, L = 2, 16

    key = jax.random.PRNGKey(0)
    kx, kp, kx2 = jax.random.split(key, 3)
    x = jax.random.normal(kx, (B, channel, L), jnp.float32)    # PyTorch NCL layout
    params = init_params(kp, channel)

    # single-tile path
    fwd = jax.jit(functools.partial(stnkd_forward, channel=channel))
    out = jax.block_until_ready(fwd(x, params))
    ref = stnkd_reference(x, params, channel)
    assert out.shape == (B, channel, channel)
    assert jnp.allclose(out, ref, atol=2e-3, rtol=2e-3), float(jnp.max(jnp.abs(out - ref)))

    # multi-tile L path with a non-divisible remainder (edge-padded columns, accumulation)
    L2 = 300
    x2 = jax.random.normal(kx2, (B, channel, L2), jnp.float32)
    fwd2 = jax.jit(functools.partial(stnkd_forward, channel=channel, tile_l=128))
    out2 = jax.block_until_ready(fwd2(x2, params))
    ref2 = stnkd_reference(x2, params, channel)
    assert out2.shape == (B, channel, channel)
    assert jnp.allclose(out2, ref2, atol=2e-3, rtol=2e-3), float(jnp.max(jnp.abs(out2 - ref2)))

    print("KERNEL_OK")
</pallas_src>

<mosaic_0001>
module attributes {stable_mosaic.version = 11 : i64} {
  func.func @_conv_max_kernel(%arg0: i32, %arg1: i32, %arg2: memref<1x4x16xbf16, #tpu.memory_space<vmem>>, %arg3: memref<64x4xbf16, #tpu.memory_space<vmem>>, %arg4: memref<64x1xf32, #tpu.memory_space<vmem>>, %arg5: memref<128x64xbf16, #tpu.memory_space<vmem>>, %arg6: memref<128x1xf32, #tpu.memory_space<vmem>>, %arg7: memref<1024x128xbf16, #tpu.memory_space<vmem>>, %arg8: memref<1024x1xf32, #tpu.memory_space<vmem>>, %arg9: memref<1x1024x1xf32, #tpu.memory_space<vmem>>) attributes {dimension_semantics = [#tpu.dimension_semantics<parallel>, #tpu.dimension_semantics<arbitrary>], iteration_bounds = array<i64: 2, 1>, scalar_prefetch = 0 : i64, scratch_operands = 0 : i64, tpu.core_type = #tpu.core_type<tc>, window_params = [{transform_indices = @transform_0, window_bounds = array<i64: 1, 4, 16>}, {pipeline_mode = #tpu.pipeline_mode<synchronous>, transform_indices = @transform_1, window_bounds = array<i64: 64, 4>}, {pipeline_mode = #tpu.pipeline_mode<synchronous>, transform_indices = @transform_2, window_bounds = array<i64: 64, 1>}, {pipeline_mode = #tpu.pipeline_mode<synchronous>, transform_indices = @transform_3, window_bounds = array<i64: 128, 64>}, {pipeline_mode = #tpu.pipeline_mode<synchronous>, transform_indices = @transform_4, window_bounds = array<i64: 128, 1>}, {pipeline_mode = #tpu.pipeline_mode<synchronous>, transform_indices = @transform_5, window_bounds = array<i64: 1024, 128>}, {pipeline_mode = #tpu.pipeline_mode<synchronous>, transform_indices = @transform_6, window_bounds = array<i64: 1024, 1>}, {transform_indices = @transform_7, window_bounds = array<i64: 1, 1024, 1>}]} {
    %c0_i32 = arith.constant 0 : i32
    %0 = arith.cmpi eq, %arg1, %c0_i32 : i32
    %1 = arith.extui %0 : i1 to i32
    %c0_i32_0 = arith.constant 0 : i32
    %2 = arith.cmpi ne, %1, %c0_i32_0 : i32
    scf.if %2 {
      %cst_27 = arith.constant 0.000000e+00 : f32
      %36 = vector.broadcast %cst_27 : f32 to vector<1x1024x1xf32>
      %c0_28 = arith.constant 0 : index
      %c0_29 = arith.constant 0 : index
      %c0_30 = arith.constant 0 : index
      %37 = vector.load %arg9[%c0_28, %c0_29, %c0_30] : memref<1x1024x1xf32, #tpu.memory_space<vmem>>, vector<1x1024x1xf32>
      tpu.vector_store %arg9[%c0_28, %c0_29, %c0_30], %36 {strides = array<i32>} : memref<1x1024x1xf32, #tpu.memory_space<vmem>>, vector<1x1024x1xf32>,
    } else {
    }
    %c0 = arith.constant 0 : index
    %c0_1 = arith.constant 0 : index
    %c0_2 = arith.constant 0 : index
    %3 = vector.load %arg2[%c0, %c0_1, %c0_2] : memref<1x4x16xbf16, #tpu.memory_space<vmem>>, vector<1x4x16xbf16>
    %4 = vector.shape_cast %3 : vector<1x4x16xbf16> to vector<4x16xbf16>
    %c0_3 = arith.constant 0 : index
    %c0_4 = arith.constant 0 : index
    %5 = vector.load %arg3[%c0_3, %c0_4] : memref<64x4xbf16, #tpu.memory_space<vmem>>, vector<64x4xbf16>
    %cst = arith.constant dense<0.000000e+00> : vector<64x16xf32>
    %6 = tpu.matmul %5, %4, %cst {dimension_numbers = #tpu.dot_dimension_numbers<[1], [0], [0], [1], [0, 0, 1, 1], [], []>} : vector<64x4xbf16>, vector<4x16xbf16>, vector<64x16xf32> -> vector<64x16xf32>
    %c0_5 = arith.constant 0 : index
    %c0_6 = arith.constant 0 : index
    %7 = vector.load %arg4[%c0_5, %c0_6] : memref<64x1xf32, #tpu.memory_space<vmem>>, vector<64x1xf32>
    %8 = vector.broadcast %7 : vector<64x1xf32> to vector<64x16xf32>
    %9 = arith.addf %6, %8 : vector<64x16xf32>
    %cst_7 = arith.constant 0.000000e+00 : f32
    %10 = vector.broadcast %cst_7 : f32 to vector<64x16xf32>
    %11 = arith.maximumf %9, %10 : vector<64x16xf32>
    %c0_8 = arith.constant 0 : index
    %c0_9 = arith.constant 0 : index
    %12 = vector.load %arg5[%c0_8, %c0_9] : memref<128x64xbf16, #tpu.memory_space<vmem>>, vector<128x64xbf16>
    %13 = arith.truncf %11 : vector<64x16xf32> to vector<64x16xbf16>
    %cst_10 = arith.constant dense<0.000000e+00> : vector<128x16xf32>
    %14 = tpu.matmul %12, %13, %cst_10 {dimension_numbers = #tpu.dot_dimension_numbers<[1], [0], [0], [1], [0, 0, 1, 1], [], []>} : vector<128x64xbf16>, vector<64x16xbf16>, vector<128x16xf32> -> vector<128x16xf32>
    %c0_11 = arith.constant 0 : index
    %c0_12 = arith.constant 0 : index
    %15 = vector.load %arg6[%c0_11, %c0_12] : memref<128x1xf32, #tpu.memory_space<vmem>>, vector<128x1xf32>
    %16 = vector.broadcast %15 : vector<128x1xf32> to vector<128x16xf32>
    %17 = arith.addf %14, %16 : vector<128x16xf32>
    %cst_13 = arith.constant 0.000000e+00 : f32
    %18 = vector.broadcast %cst_13 : f32 to vector<128x16xf32>
    %19 = arith.maximumf %17, %18 : vector<128x16xf32>
    %c0_14 = arith.constant 0 : index
    %c0_15 = arith.constant 0 : index
    %20 = vector.load %arg7[%c0_14, %c0_15] : memref<1024x128xbf16, #tpu.memory_space<vmem>>, vector<1024x128xbf16>
    %21 = arith.truncf %19 : vector<128x16xf32> to vector<128x16xbf16>
    %cst_16 = arith.constant dense<0.000000e+00> : vector<1024x16xf32>
    %22 = tpu.matmul %20, %21, %cst_16 {dimension_numbers = #tpu.dot_dimension_numbers<[1], [0], [0], [1], [0, 0, 1, 1], [], []>} : vector<1024x128xbf16>, vector<128x16xbf16>, vector<1024x16xf32> -> vector<1024x16xf32>
    %c0_17 = arith.constant 0 : index
    %c0_18 = arith.constant 0 : index
    %23 = vector.load %arg8[%c0_17, %c0_18] : memref<1024x1xf32, #tpu.memory_space<vmem>>, vector<1024x1xf32>
    %24 = vector.broadcast %23 : vector<1024x1xf32> to vector<1024x16xf32>
    %25 = arith.addf %22, %24 : vector<1024x16xf32>
    %cst_19 = arith.constant 0.000000e+00 : f32
    %26 = vector.broadcast %cst_19 : f32 to vector<1024x16xf32>
    %27 = arith.maximumf %25, %26 : vector<1024x16xf32>
    %cst_20 = arith.constant dense<0xFF800000> : vector<1024xf32>
    %28 = vector.multi_reduction <maximumf>, %27, %cst_20 [1] : vector<1024x16xf32> to vector<1024xf32>
    %29 = vector.shape_cast %28 : vector<1024xf32> to vector<1024x1xf32>
    %c0_21 = arith.constant 0 : index
    %c0_22 = arith.constant 0 : index
    %c0_23 = arith.constant 0 : index
    %30 = vector.load %arg9[%c0_21, %c0_22, %c0_23] : memref<1x1024x1xf32, #tpu.memory_space<vmem>>, vector<1x1024x1xf32>
    %31 = vector.shape_cast %30 : vector<1x1024x1xf32> to vector<1024x1xf32>
    %32 = arith.maximumf %31, %29 : vector<1024x1xf32>
    %c0_24 = arith.constant 0 : index
    %c0_25 = arith.constant 0 : index
    %c0_26 = arith.constant 0 : index
    %33 = vector.load %arg9[%c0_24, %c0_25, %c0_26] : memref<1x1024x1xf32, #tpu.memory_space<vmem>>, vector<1x1024x1xf32>
    %34 = vector.shape_cast %33 : vector<1x1024x1xf32> to vector<1024x1xf32>
    %35 = vector.shape_cast %32 : vector<1024x1xf32> to vector<1x1024x1xf32>
    tpu.vector_store %arg9[%c0_24, %c0_25, %c0_26], %35 {strides = array<i32>} : memref<1x1024x1xf32, #tpu.memory_space<vmem>>, vector<1x1024x1xf32>,
    return
  }
  func.func @transform_0(%arg0: i32, %arg1: i32) -> (i32, i32, i32) {
    %c0_i32 = arith.constant 0 : i32
    %c0_i32_0 = arith.constant 0 : i32
    return %arg0, %c0_i32, %arg1 : i32, i32, i32
  }
  func.func @transform_1(%arg0: i32, %arg1: i32) -> (i32, i32) {
    %c0_i32 = arith.constant 0 : i32
    %c0_i32_0 = arith.constant 0 : i32
    %c0_i32_1 = arith.constant 0 : i32
    return %c0_i32, %c0_i32_0 : i32, i32
  }
  func.func @transform_2(%arg0: i32, %arg1: i32) -> (i32, i32) {
    %c0_i32 = arith.constant 0 : i32
    %c0_i32_0 = arith.constant 0 : i32
    %c0_i32_1 = arith.constant 0 : i32
    return %c0_i32, %c0_i32_0 : i32, i32
  }
  func.func @transform_3(%arg0: i32, %arg1: i32) -> (i32, i32) {
    %c0_i32 = arith.constant 0 : i32
    %c0_i32_0 = arith.constant 0 : i32
    %c0_i32_1 = arith.constant 0 : i32
    return %c0_i32, %c0_i32_0 : i32, i32
  }
  func.func @transform_4(%arg0: i32, %arg1: i32) -> (i32, i32) {
    %c0_i32 = arith.constant 0 : i32
    %c0_i32_0 = arith.constant 0 : i32
    %c0_i32_1 = arith.constant 0 : i32
    return %c0_i32, %c0_i32_0 : i32, i32
  }
  func.func @transform_5(%arg0: i32, %arg1: i32) -> (i32, i32) {
    %c0_i32 = arith.constant 0 : i32
    %c0_i32_0 = arith.constant 0 : i32
    %c0_i32_1 = arith.constant 0 : i32
    return %c0_i32, %c0_i32_0 : i32, i32
  }
  func.func @transform_6(%arg0: i32, %arg1: i32) -> (i32, i32) {
    %c0_i32 = arith.constant 0 : i32
    %c0_i32_0 = arith.constant 0 : i32
    %c0_i32_1 = arith.constant 0 : i32
    return %c0_i32, %c0_i32_0 : i32, i32
  }
  func.func @transform_7(%arg0: i32, %arg1: i32) -> (i32, i32, i32) {
    %c0_i32 = arith.constant 0 : i32
    %c0_i32_0 = arith.constant 0 : i32
    %c0_i32_1 = arith.constant 0 : i32
    return %arg0, %c0_i32, %c0_i32_0 : i32, i32, i32
  }
}

module attributes {stable_mosaic.version = 11 : i64} {
  func.func @_fc_head_kernel(%arg0: i32, %arg1: memref<2x1024xbf16, #tpu.memory_space<vmem>>, %arg2: memref<1024x512xbf16, #tpu.memory_space<vmem>>, %arg3: memref<1x512xf32, #tpu.memory_space<vmem>>, %arg4: memref<512x256xbf16, #tpu.memory_space<vmem>>, %arg5: memref<1x256xf32, #tpu.memory_space<vmem>>, %arg6: memref<256x128xbf16, #tpu.memory_space<vmem>>, %arg7: memref<1x128xf32, #tpu.memory_space<vmem>>, %arg8: memref<2x128xf32, #tpu.memory_space<vmem>>) attributes {dimension_semantics = [#tpu.dimension_semantics<parallel>], iteration_bounds = array<i64: 1>, scalar_prefetch = 0 : i64, scratch_operands = 0 : i64, tpu.core_type = #tpu.core_type<tc>, window_params = [{transform_indices = @transform_0, window_bounds = array<i64: 2, 1024>}, {pipeline_mode = #tpu.pipeline_mode<synchronous>, transform_indices = @transform_1, window_bounds = array<i64: 1024, 512>}, {pipeline_mode = #tpu.pipeline_mode<synchronous>, transform_indices = @transform_2, window_bounds = array<i64: 1, 512>}, {pipeline_mode = #tpu.pipeline_mode<synchronous>, transform_indices = @transform_3, window_bounds = array<i64: 512, 256>}, {pipeline_mode = #tpu.pipeline_mode<synchronous>, transform_indices = @transform_4, window_bounds = array<i64: 1, 256>}, {pipeline_mode = #tpu.pipeline_mode<synchronous>, transform_indices = @transform_5, window_bounds = array<i64: 256, 128>}, {pipeline_mode = #tpu.pipeline_mode<synchronous>, transform_indices = @transform_6, window_bounds = array<i64: 1, 128>}, {transform_indices = @transform_7, window_bounds = array<i64: 2, 128>}]} {
    %c0 = arith.constant 0 : index
    %c0_0 = arith.constant 0 : index
    %0 = vector.load %arg1[%c0, %c0_0] : memref<2x1024xbf16, #tpu.memory_space<vmem>>, vector<2x1024xbf16>
    %c0_1 = arith.constant 0 : index
    %c0_2 = arith.constant 0 : index
    %1 = vector.load %arg2[%c0_1, %c0_2] : memref<1024x512xbf16, #tpu.memory_space<vmem>>, vector<1024x512xbf16>
    %cst = arith.constant dense<0.000000e+00> : vector<2x512xf32>
    %2 = tpu.matmul %0, %1, %cst {dimension_numbers = #tpu.dot_dimension_numbers<[1], [0], [0], [1], [0, 0, 1, 1], [], []>} : vector<2x1024xbf16>, vector<1024x512xbf16>, vector<2x512xf32> -> vector<2x512xf32>
    %c0_3 = arith.constant 0 : index
    %c0_4 = arith.constant 0 : index
    %3 = vector.load %arg3[%c0_3, %c0_4] : memref<1x512xf32, #tpu.memory_space<vmem>>, vector<1x512xf32>
    %4 = vector.broadcast %3 : vector<1x512xf32> to vector<2x512xf32>
    %5 = arith.addf %2, %4 : vector<2x512xf32>
    %cst_5 = arith.constant 0.000000e+00 : f32
    %6 = vector.broadcast %cst_5 : f32 to vector<2x512xf32>
    %7 = arith.maximumf %5, %6 : vector<2x512xf32>
    %8 = arith.truncf %7 : vector<2x512xf32> to vector<2x512xbf16>
    %c0_6 = arith.constant 0 : index
    %c0_7 = arith.constant 0 : index
    %9 = vector.load %arg4[%c0_6, %c0_7] : memref<512x256xbf16, #tpu.memory_space<vmem>>, vector<512x256xbf16>
    %cst_8 = arith.constant dense<0.000000e+00> : vector<2x256xf32>
    %10 = tpu.matmul %8, %9, %cst_8 {dimension_numbers = #tpu.dot_dimension_numbers<[1], [0], [0], [1], [0, 0, 1, 1], [], []>} : vector<2x512xbf16>, vector<512x256xbf16>, vector<2x256xf32> -> vector<2x256xf32>
    %c0_9 = arith.constant 0 : index
    %c0_10 = arith.constant 0 : index
    %11 = vector.load %arg5[%c0_9, %c0_10] : memref<1x256xf32, #tpu.memory_space<vmem>>, vector<1x256xf32>
    %12 = vector.broadcast %11 : vector<1x256xf32> to vector<2x256xf32>
    %13 = arith.addf %10, %12 : vector<2x256xf32>
    %cst_11 = arith.constant 0.000000e+00 : f32
    %14 = vector.broadcast %cst_11 : f32 to vector<2x256xf32>
    %15 = arith.maximumf %13, %14 : vector<2x256xf32>
    %16 = arith.truncf %15 : vector<2x256xf32> to vector<2x256xbf16>
    %c0_12 = arith.constant 0 : index
    %c0_13 = arith.constant 0 : index
    %17 = vector.load %arg6[%c0_12, %c0_13] : memref<256x128xbf16, #tpu.memory_space<vmem>>, vector<256x128xbf16>
    %cst_14 = arith.constant dense<0.000000e+00> : vector<2x128xf32>
    %18 = tpu.matmul %16, %17, %cst_14 {dimension_numbers = #tpu.dot_dimension_numbers<[1], [0], [0], [1], [0, 0, 1, 1], [], []>} : vector<2x256xbf16>, vector<256x128xbf16>, vector<2x128xf32> -> vector<2x128xf32>
    %c0_15 = arith.constant 0 : index
    %c0_16 = arith.constant 0 : index
    %19 = vector.load %arg7[%c0_15, %c0_16] : memref<1x128xf32, #tpu.memory_space<vmem>>, vector<1x128xf32>
    %20 = vector.broadcast %19 : vector<1x128xf32> to vector<2x128xf32>
    %21 = arith.addf %18, %20 : vector<2x128xf32>
    %c0_17 = arith.constant 0 : index
    %c0_18 = arith.constant 0 : index
    %22 = vector.load %arg8[%c0_17, %c0_18] : memref<2x128xf32, #tpu.memory_space<vmem>>, vector<2x128xf32>
    tpu.vector_store %arg8[%c0_17, %c0_18], %21 {strides = array<i32>} : memref<2x128xf32, #tpu.memory_space<vmem>>, vector<2x128xf32>,
    return
  }
  func.func @transform_0(%arg0: i32) -> (i32, i32) {
    %c0_i32 = arith.constant 0 : i32
    %c0_i32_0 = arith.constant 0 : i32
    return %arg0, %c0_i32 : i32, i32
  }
  func.func @transform_1(%arg0: i32) -> (i32, i32) {
    %c0_i32 = arith.constant 0 : i32
    %c0_i32_0 = arith.constant 0 : i32
    %c0_i32_1 = arith.constant 0 : i32
    return %c0_i32, %c0_i32_0 : i32, i32
  }
  func.func @transform_2(%arg0: i32) -> (i32, i32) {
    %c0_i32 = arith.constant 0 : i32
    %c0_i32_0 = arith.constant 0 : i32
    %c0_i32_1 = arith.constant 0 : i32
    return %c0_i32, %c0_i32_0 : i32, i32
  }
  func.func @transform_3(%arg0: i32) -> (i32, i32) {
    %c0_i32 = arith.constant 0 : i32
    %c0_i32_0 = arith.constant 0 : i32
    %c0_i32_1 = arith.constant 0 : i32
    return %c0_i32, %c0_i32_0 : i32, i32
  }
  func.func @transform_4(%arg0: i32) -> (i32, i32) {
    %c0_i32 = arith.constant 0 : i32
    %c0_i32_0 = arith.constant 0 : i32
    %c0_i32_1 = arith.constant 0 : i32
    return %c0_i32, %c0_i32_0 : i32, i32
  }
  func.func @transform_5(%arg0: i32) -> (i32, i32) {
    %c0_i32 = arith.constant 0 : i32
    %c0_i32_0 = arith.constant 0 : i32
    %c0_i32_1 = arith.constant 0 : i32
    return %c0_i32, %c0_i32_0 : i32, i32
  }
  func.func @transform_6(%arg0: i32) -> (i32, i32) {
    %c0_i32 = arith.constant 0 : i32
    %c0_i32_0 = arith.constant 0 : i32
    %c0_i32_1 = arith.constant 0 : i32
    return %c0_i32, %c0_i32_0 : i32, i32
  }
  func.func @transform_7(%arg0: i32) -> (i32, i32) {
    %c0_i32 = arith.constant 0 : i32
    %c0_i32_0 = arith.constant 0 : i32
    return %arg0, %c0_i32 : i32, i32
  }
}

</mosaic_0001>

<llo_original>
// kernel: stnkd_forward.2
$region0: #{stnkd_forward.2}
  #allocation0 [shape = 'u32[]', space=smem, size = 0x4, offset = 0x4, fixed_abs, tag = 'smem constant byte address 0x4 - core index']
  #allocation1 [shape = 'u32[72,128]{1,0:T(1,128)}', space=vmem, size = 0x9000, scoped, tag = 'internal scratch']
  %s0 = inlined_call_operand.vmem [shape: bf16[2,4,16], index: 0, kind: input, shape index: {}]
  %s1 = inlined_call_operand.vmem [shape: bf16[64,4], index: 1, kind: input, shape index: {}]
  %s2 = inlined_call_operand.vmem [shape: f32[64,1], index: 2, kind: input, shape index: {}]
  %s3 = inlined_call_operand.vmem [shape: bf16[128,64], index: 3, kind: input, shape index: {}]
  %s4 = inlined_call_operand.vmem [shape: f32[128,1], index: 4, kind: input, shape index: {}]
  %s5 = inlined_call_operand.vmem [shape: bf16[1024,128], index: 5, kind: input, shape index: {}]
  %s6 = inlined_call_operand.vmem [shape: f32[1024,1], index: 6, kind: input, shape index: {}]
  %s7 = inlined_call_operand.vmem [shape: f32[2,1024,1], index: 7, kind: output, shape index: {}]
  %s8 = sld [smem:[#allocation0]]
  $region65: #{stnkd_forward.2} parent=0
    _
  %s10 = ssub.s32 1, %s8
  %s11 = scalar_select 0, %s10, %s8
  loop: start=0, step=1, limit=4
  $region2: #{stnkd_forward.2} parent=0 // loop_pre_header
    _
  $region3: #{stnkd_forward.2} parent=0 // loop_header
    %s13 = sphi 0, %s17
    %p14 = scmp.ge.s32.totalorder %s13, 4
    %s20 = sphi 0, %s32
    %s21 = sphi 0, %s28
    %s22 = sphi 0, %s20
    %s23 = sphi 0, %s21
    %s24 = sphi 0, %s22
    %s25 = sphi 0, %s23
    %s37 = sphi 0, %s39
    %s40 = sphi 0, %s37
    %s41 = sphi 0, %s40
    %s57 = sphi 0, %s41
    %s61 = sphi 0, %s61
    %s63 = sphi 0, %s61
    %s64 = sphi 0, %s63
    %s78 = sphi 0, %s64
    %s82 = sphi 0, %s82
    %s84 = sphi 0, %s82
    %s85 = sphi 0, %s84
    %s99 = sphi 0, %s85
    %s103 = sphi 0, %s103
    %s105 = sphi 0, %s103
    %s106 = sphi 0, %s105
    %s120 = sphi 0, %s106
    %s124 = sphi 0, %s124
    %s126 = sphi 0, %s124
    %s127 = sphi 0, %s126
    %s141 = sphi 0, %s127
    %s145 = sphi 0, %s145
    %s147 = sphi 0, %s145
    %s148 = sphi 0, %s147
    %s162 = sphi 0, %s148
    %s166 = sphi 0, %s166
    %s168 = sphi 0, %s166
    %s169 = sphi 0, %s168
    %s183 = sphi 0, %s169
    %s189 = sphi 0, %s191
    %s192 = sphi 0, %s189
    %s193 = sphi 0, %s192
    %s209 = sphi 0, %s193
  $region4: #{stnkd_forward.2} parent=0 // loop_header_branch
    %16 = sbr.rel (%p14) target = $region8
  $region5: #{stnkd_forward.2} parent=0 // loop_body
    %s18 = ssub.s32 %s13, 1
    %s19 = ssub.s32 %s13, 2
    %s26 = sadd.s32 1, %s21
    %p27 = scmp.ge.s32.totalorder %s26, 1
    %s28 = scalar_select %p27, 0, %s26
    %s29 = sadd.s32 1, %s20
    %s30 = scalar_select %p27, %s29, %s20
    %p31 = scmp.ge.s32.totalorder %s30, 2
    %s32 = scalar_select %p31, 0, %s30
    %s33 = ssub.s32 %s20, %s32
    %s34 = ssub.s32 %s21, %s28
    %s35 = sor.u32 %s33, %s34
    %p36 = scmp.eq.s32.totalorder %s35, 0
    %s38 = sadd.s32 %s37, 1
    %s39 = scalar_select %p36, %s37, %s38
    %p42 = pneg %p36
    %p43 = scmp.eq.s32.totalorder %s13, 1
    %p44 = por %p42, %p43
    %p45 = scmp.ne.s32.totalorder %s37, %s40
    %p46 = scmp.eq.s32.totalorder %s13, 0
    %p47 = por %p45, %p46
    %p48 = scmp.ne.s32.totalorder %s37, %s40
    %p49 = scmp.eq.s32.totalorder %s18, 1
    %p50 = por %p48, %p49
    %p51 = scmp.ne.s32.totalorder %s40, %s41
    %p52 = scmp.eq.s32.totalorder %s18, 0
    %p53 = por %p51, %p52
    %p54 = scmp.ne.s32.totalorder %s40, %s41
    %p55 = scmp.eq.s32.totalorder %s19, 1
    %p56 = por %p54, %p55
    %p58 = scmp.ne.s32.totalorder %s41, %s57
    %p59 = scmp.eq.s32.totalorder %s19, 0
    %p60 = por %p58, %p59
    %s62 = sadd.s32 %s61, 1
    %p65 = scmp.eq.s32.totalorder %s13, 1
    %p66 = scmp.ne.s32.totalorder %s61, %s63
    %p67 = scmp.eq.s32.totalorder %s13, 0
    %p68 = por %p66, %p67
    %p69 = scmp.ne.s32.totalorder %s61, %s63
    %p70 = scmp.eq.s32.totalorder %s18, 1
    %p71 = por %p69, %p70
    %p72 = scmp.ne.s32.totalorder %s63, %s64
    %p73 = scmp.eq.s32.totalorder %s18, 0
    %p74 = por %p72, %p73
    %p75 = scmp.ne.s32.totalorder %s63, %s64
    %p76 = scmp.eq.s32.totalorder %s19, 1
    %p77 = por %p75, %p76
    %p79 = scmp.ne.s32.totalorder %s64, %s78
    %p80 = scmp.eq.s32.totalorder %s19, 0
    %p81 = por %p79, %p80
    %s83 = sadd.s32 %s82, 1
    %p86 = scmp.eq.s32.totalorder %s13, 1
    %p87 = scmp.ne.s32.totalorder %s82, %s84
    %p88 = scmp.eq.s32.totalorder %s13, 0
    %p89 = por %p87, %p88
    %p90 = scmp.ne.s32.totalorder %s82, %s84
    %p91 = scmp.eq.s32.totalorder %s18, 1
    %p92 = por %p90, %p91
    %p93 = scmp.ne.s32.totalorder %s84, %s85
    %p94 = scmp.eq.s32.totalorder %s18, 0
    %p95 = por %p93, %p94
    %p96 = scmp.ne.s32.totalorder %s84, %s85
    %p97 = scmp.eq.s32.totalorder %s19, 1
    %p98 = por %p96, %p97
    %p100 = scmp.ne.s32.totalorder %s85, %s99
    %p101 = scmp.eq.s32.totalorder %s19, 0
    %p102 = por %p100, %p101
    %s104 = sadd.s32 %s103, 1
    %p107 = scmp.eq.s32.totalorder %s13, 1
    %p108 = scmp.ne.s32.totalorder %s103, %s105
    %p109 = scmp.eq.s32.totalorder %s13, 0
    %p110 = por %p108, %p109
    %p111 = scmp.ne.s32.totalorder %s103, %s105
    %p112 = scmp.eq.s32.totalorder %s18, 1
    %p113 = por %p111, %p112
    %p114 = scmp.ne.s32.totalorder %s105, %s106
    %p115 = scmp.eq.s32.totalorder %s18, 0
    %p116 = por %p114, %p115
    %p117 = scmp.ne.s32.totalorder %s105, %s106
    %p118 = scmp.eq.s32.totalorder %s19, 1
    %p119 = por %p117, %p118
    %p121 = scmp.ne.s32.totalorder %s106, %s120
    %p122 = scmp.eq.s32.totalorder %s19, 0
    %p123 = por %p121, %p122
    %s125 = sadd.s32 %s124, 1
    %p128 = scmp.eq.s32.totalorder %s13, 1
    %p129 = scmp.ne.s32.totalorder %s124, %s126
    %p130 = scmp.eq.s32.totalorder %s13, 0
    %p131 = por %p129, %p130
    %p132 = scmp.ne.s32.totalorder %s124, %s126
    %p133 = scmp.eq.s32.totalorder %s18, 1
    %p134 = por %p132, %p133
    %p135 = scmp.ne.s32.totalorder %s126, %s127
    %p136 = scmp.eq.s32.totalorder %s18, 0
    %p137 = por %p135, %p136
    %p138 = scmp.ne.s32.totalorder %s126, %s127
    %p139 = scmp.eq.s32.totalorder %s19, 1
    %p140 = por %p138, %p139
    %p142 = scmp.ne.s32.totalorder %s127, %s141
    %p143 = scmp.eq.s32.totalorder %s19, 0
    %p144 = por %p142, %p143
    %s146 = sadd.s32 %s145, 1
    %p149 = scmp.eq.s32.totalorder %s13, 1
    %p150 = scmp.ne.s32.totalorder %s145, %s147
    %p151 = scmp.eq.s32.totalorder %s13, 0
    %p152 = por %p150, %p151
    %p153 = scmp.ne.s32.totalorder %s145, %s147
    %p154 = scmp.eq.s32.totalorder %s18, 1
    %p155 = por %p153, %p154
    %p156 = scmp.ne.s32.totalorder %s147, %s148
    %p157 = scmp.eq.s32.totalorder %s18, 0
    %p158 = por %p156, %p157
    %p159 = scmp.ne.s32.totalorder %s147, %s148
    %p160 = scmp.eq.s32.totalorder %s19, 1
    %p161 = por %p159, %p160
    %p163 = scmp.ne.s32.totalorder %s148, %s162
    %p164 = scmp.eq.s32.totalorder %s19, 0
    %p165 = por %p163, %p164
    %s167 = sadd.s32 %s166, 1
    %p170 = scmp.eq.s32.totalorder %s13, 1
    %p171 = scmp.ne.s32.totalorder %s166, %s168
    %p172 = scmp.eq.s32.totalorder %s13, 0
    %p173 = por %p171, %p172
    %p174 = scmp.ne.s32.totalorder %s166, %s168
    %p175 = scmp.eq.s32.totalorder %s18, 1
    %p176 = por %p174, %p175
    %p177 = scmp.ne.s32.totalorder %s168, %s169
    %p178 = scmp.eq.s32.totalorder %s18, 0
    %p179 = por %p177, %p178
    %p180 = scmp.ne.s32.totalorder %s168, %s169
    %p181 = scmp.eq.s32.totalorder %s19, 1
    %p182 = por %p180, %p181
    %p184 = scmp.ne.s32.totalorder %s169, %s183
    %p185 = scmp.eq.s32.totalorder %s19, 0
    %p186 = por %p184, %p185
    %s187 = ssub.s32 %s20, %s32
    %p188 = scmp.eq.s32.totalorder %s187, 0
    %s190 = sadd.s32 %s189, 1
    %s191 = scalar_select %p188, %s189, %s190
    %p194 = pneg %p188
    %p195 = scmp.eq.s32.totalorder %s13, 1
    %p196 = por %p194, %p195
    %p197 = scmp.ne.s32.totalorder %s189, %s192
    %p198 = scmp.eq.s32.totalorder %s13, 0
    %p199 = por %p197, %p198
    %p200 = scmp.ne.s32.totalorder %s189, %s192
    %p201 = scmp.eq.s32.totalorder %s18, 1
    %p202 = por %p200, %p201
    %p203 = scmp.ne.s32.totalorder %s192, %s193
    %p204 = scmp.eq.s32.totalorder %s18, 0
    %p205 = por %p203, %p204
    %p206 = scmp.ne.s32.totalorder %s192, %s193
    %p207 = scmp.eq.s32.totalorder %s19, 1
    %p208 = por %p206, %p207
    %p210 = scmp.ne.s32.totalorder %s193, %s209
    %p211 = scmp.eq.s32.totalorder %s19, 0
    %p212 = por %p210, %p211
    %p213 = scmp.le.s32.totalorder 1, %s13
    %p214 = scmp.lt.s32.totalorder %s13, 3
    %p215 = pnand %p213, %p214
    %p216 = pneg %p215
    // Predicated region
    $region9: #{stnkd_forward.2} parent=5 // pred_check
      _
    $region10: #{stnkd_forward.2} parent=5 // pred_check_branch
      %218 = sbr.rel (%p215) target = $region12
    $region11: #{stnkd_forward.2} parent=5 // pred_region
      %s219 = ssub.s32 %s13, 1
      // Predicated region
      $region13: #{stnkd_forward.2} parent=11 // pred_check
        %p220 = pneg %p74
      $region14: #{stnkd_forward.2} parent=11 // pred_check_branch
        %222 = sbr.rel (%p220) target = $region16
      $region15: #{stnkd_forward.2} parent=11 // pred_region
        _
      $region16: #{stnkd_forward.2} parent=11 // pred_fallthru
        _
      // Predicated region
      $region17: #{stnkd_forward.2} parent=11 // pred_check
        %p223 = pneg %p95
      $region18: #{stnkd_forward.2} parent=11 // pred_check_branch
        %225 = sbr.rel (%p223) target = $region20
      $region19: #{stnkd_forward.2} parent=11 // pred_region
        _
      $region20: #{stnkd_forward.2} parent=11 // pred_fallthru
        _
      // Predicated region
      $region21: #{stnkd_forward.2} parent=11 // pred_check
        %p226 = pneg %p116
      $region22: #{stnkd_forward.2} parent=11 // pred_check_branch
        %228 = sbr.rel (%p226) target = $region24
      $region23: #{stnkd_forward.2} parent=11 // pred_region
        _
      $region24: #{stnkd_forward.2} parent=11 // pred_fallthru
        _
      // Predicated region
      $region25: #{stnkd_forward.2} parent=11 // pred_check
        %p229 = pneg %p137
      $region26: #{stnkd_forward.2} parent=11 // pred_check_branch
        %231 = sbr.rel (%p229) target = $region28
      $region27: #{stnkd_forward.2} parent=11 // pred_region
        _
      $region28: #{stnkd_forward.2} parent=11 // pred_fallthru
        _
      // Predicated region
      $region29: #{stnkd_forward.2} parent=11 // pred_check
        %p232 = pneg %p158
      $region30: #{stnkd_forward.2} parent=11 // pred_check_branch
        %234 = sbr.rel (%p232) target = $region32
      $region31: #{stnkd_forward.2} parent=11 // pred_region
        _
      $region32: #{stnkd_forward.2} parent=11 // pred_fallthru
        _
      // Predicated region
      $region33: #{stnkd_forward.2} parent=11 // pred_check
        %p235 = pneg %p179
      $region34: #{stnkd_forward.2} parent=11 // pred_check_branch
        %237 = sbr.rel (%p235) target = $region36
      $region35: #{stnkd_forward.2} parent=11 // pred_region
        _
      $region36: #{stnkd_forward.2} parent=11 // pred_fallthru
        _
    $region12: #{stnkd_forward.2} parent=5 // pred_fallthru
      _
    %p238 = scmp.lt.s32.totalorder %s13, 2
    // Predicated region
    $region37: #{stnkd_forward.2} parent=5 // pred_check
      %p239 = pneg %p238
    $region38: #{stnkd_forward.2} parent=5 // pred_check_branch
      %241 = sbr.rel (%p239) target = $region40
    $region39: #{stnkd_forward.2} parent=5 // pred_region
      // Predicated region
      $region41: #{stnkd_forward.2} parent=39 // pred_check
        %p242 = pneg %p47
      $region42: #{stnkd_forward.2} parent=39 // pred_check_branch
        %244 = sbr.rel (%p242) target = $region44
      $region43: #{stnkd_forward.2} parent=39 // pred_region
        %p245 = scmp.lt.s32.totalorder %s20, 1
        %s246 = scalar_select %p245, %s20, 1
        %p247 = scmp.lt.s32.totalorder %s21, 0
        %s248 = scalar_select %p247, %s21, 0
        %s249 = sadd.s32 %s248, %s246
        %s250 = smul.addr %s249, 2
        %s251 = scalar_lea.vmem %s0, %s250
      $region44: #{stnkd_forward.2} parent=39 // pred_fallthru
        _
    $region40: #{stnkd_forward.2} parent=5 // pred_fallthru
      _
    %p252 = scmp.le.s32.totalorder 1, %s13
    %p253 = scmp.lt.s32.totalorder %s13, 3
    %p254 = pnand %p252, %p253
    %p255 = pneg %p254
    // Predicated region
    $region45: #{stnkd_forward.2} parent=5 // pred_check
      _
    $region46: #{stnkd_forward.2} parent=5 // pred_check_branch
      %257 = sbr.rel (%p254) target = $region48
    $region47: #{stnkd_forward.2} parent=5 // pred_region
      %s258 = ssub.s32 %s13, 1
      %p259 = scmp.lt.s32.totalorder %s22, 1
      %s260 = scalar_select %p259, %s22, 1
      %p261 = scmp.lt.s32.totalorder %s23, 0
      %s262 = scalar_select %p261, %s23, 0
      %s263 = sadd.s32 %s262, %s260
      %s264 = smul.addr %s263, 2
      %s265 = scalar_lea.vmem %s0, %s264
      %p266 = pneg %p53
      %p267 = pneg %p50
      %p268 = pneg %p74
      %p269 = pneg %p71
      %p270 = pneg %p95
      %p271 = pneg %p92
      %p272 = pneg %p116
      %p273 = pneg %p113
      %p274 = pneg %p137
      %p275 = pneg %p134
      %p276 = pneg %p158
      %p277 = pneg %p155
      %p278 = pneg %p179
      %p279 = pneg %p176
      %p280 = pneg %p205
      %p281 = pneg %p202
      %p282 = scmp.lt.s32.totalorder %s22, 1
      %s283 = scalar_select %p282, %s22, 1
      %s284 = smul.addr %s283, 128
      %s285 = smul.addr %s284, 8
      %s286 = scalar_lea.vmem %s7, %s285
      %p287 = scmp.lt.s32.totalorder %s22, 1
      %s288 = scalar_select %p287, %s22, 1
      %p289 = scmp.lt.s32.totalorder %s23, 0
      %s290 = scalar_select %p289, %s23, 0
      %s291 = sadd.s32 %s290, %s288
      %s292 = smul.addr %s291, 2
      %s293 = scalar_lea.vmem %s0, %s292
      %p294 = scmp.lt.s32.totalorder %s22, 1
      %s295 = scalar_select %p294, %s22, 1
      %s296 = smul.addr %s295, 128
      %s297 = smul.addr %s296, 8
      %s298 = scalar_lea.vmem %s7, %s297
      %p300 = scmp.eq.s32.totalorder %s23, 0
      // Predicated region
      $region49: #{stnkd_forward.2} parent=47 // pred_check
        %p301 = pneg %p300
      $region50: #{stnkd_forward.2} parent=47 // pred_check_branch
        %303 = sbr.rel (%p301) target = $region52
      $region51: #{stnkd_forward.2} parent=47 // pred_region
        %vm304 = vcmask 7168
        %305 = vst.msk [vmem:[%s298] sm:$0xff] %vm304, 0.0
        %306 = vst.msk [vmem:[%s298 + $0x8] sm:$0xff] %vm304, 0.0
        %307 = vst.msk [vmem:[%s298 + $0x10] sm:$0xff] %vm304, 0.0
        %308 = vst.msk [vmem:[%s298 + $0x18] sm:$0xff] %vm304, 0.0
        %309 = vst.msk [vmem:[%s298 + $0x20] sm:$0xff] %vm304, 0.0
        %310 = vst.msk [vmem:[%s298 + $0x28] sm:$0xff] %vm304, 0.0
        %311 = vst.msk [vmem:[%s298 + $0x30] sm:$0xff] %vm304, 0.0
        %312 = vst.msk [vmem:[%s298 + $0x38] sm:$0xff] %vm304, 0.0
        %313 = vst.msk [vmem:[%s298 + $0x40] sm:$0xff] %vm304, 0.0
        %314 = vst.msk [vmem:[%s298 + $0x48] sm:$0xff] %vm304, 0.0
        %315 = vst.msk [vmem:[%s298 + $0x50] sm:$0xff] %vm304, 0.0
        %316 = vst.msk [vmem:[%s298 + $0x58] sm:$0xff] %vm304, 0.0
        %317 = vst.msk [vmem:[%s298 + $0x60] sm:$0xff] %vm304, 0.0
        %318 = vst.msk [vmem:[%s298 + $0x68] sm:$0xff] %vm304, 0.0
        %319 = vst.msk [vmem:[%s298 + $0x70] sm:$0xff] %vm304, 0.0
        %320 = vst.msk [vmem:[%s298 + $0x78] sm:$0xff] %vm304, 0.0
        %321 = vst.msk [vmem:[%s298 + $0x80] sm:$0xff] %vm304, 0.0
        %322 = vst.msk [vmem:[%s298 + $0x88] sm:$0xff] %vm304, 0.0
        %323 = vst.msk [vmem:[%s298 + $0x90] sm:$0xff] %vm304, 0.0
        %324 = vst.msk [vmem:[%s298 + $0x98] sm:$0xff] %vm304, 0.0
        %325 = vst.msk [vmem:[%s298 + $0xa0] sm:$0xff] %vm304, 0.0
        %326 = vst.msk [vmem:[%s298 + $0xa8] sm:$0xff] %vm304, 0.0
        %327 = vst.msk [vmem:[%s298 + $0xb0] sm:$0xff] %vm304, 0.0
        %328 = vst.msk [vmem:[%s298 + $0xb8] sm:$0xff] %vm304, 0.0
        %329 = vst.msk [vmem:[%s298 + $0xc0] sm:$0xff] %vm304, 0.0
        %330 = vst.msk [vmem:[%s298 + $0xc8] sm:$0xff] %vm304, 0.0
        %331 = vst.msk [vmem:[%s298 + $0xd0] sm:$0xff] %vm304, 0.0
        %332 = vst.msk [vmem:[%s298 + $0xd8] sm:$0xff] %vm304, 0.0
        %333 = vst.msk [vmem:[%s298 + $0xe0] sm:$0xff] %vm304, 0.0
        %334 = vst.msk [vmem:[%s298 + $0xe8] sm:$0xff] %vm304, 0.0
        %335 = vst.msk [vmem:[%s298 + $0xf0] sm:$0xff] %vm304, 0.0
        %336 = vst.msk [vmem:[%s298 + $0xf8] sm:$0xff] %vm304, 0.0
        %337 = vst.msk [vmem:[%s298 + $0x100] sm:$0xff] %vm304, 0.0
        %338 = vst.msk [vmem:[%s298 + $0x108] sm:$0xff] %vm304, 0.0
        %339 = vst.msk [vmem:[%s298 + $0x110] sm:$0xff] %vm304, 0.0
        %340 = vst.msk [vmem:[%s298 + $0x118] sm:$0xff] %vm304, 0.0
        %341 = vst.msk [vmem:[%s298 + $0x120] sm:$0xff] %vm304, 0.0
        %342 = vst.msk [vmem:[%s298 + $0x128] sm:$0xff] %vm304, 0.0
        %343 = vst.msk [vmem:[%s298 + $0x130] sm:$0xff] %vm304, 0.0
        %344 = vst.msk [vmem:[%s298 + $0x138] sm:$0xff] %vm304, 0.0
        %345 = vst.msk [vmem:[%s298 + $0x140] sm:$0xff] %vm304, 0.0
        %346 = vst.msk [vmem:[%s298 + $0x148] sm:$0xff] %vm304, 0.0
        %347 = vst.msk [vmem:[%s298 + $0x150] sm:$0xff] %vm304, 0.0
        %348 = vst.msk [vmem:[%s298 + $0x158] sm:$0xff] %vm304, 0.0
        %349 = vst.msk [vmem:[%s298 + $0x160] sm:$0xff] %vm304, 0.0
        %350 = vst.msk [vmem:[%s298 + $0x168] sm:$0xff] %vm304, 0.0
        %351 = vst.msk [vmem:[%s298 + $0x170] sm:$0xff] %vm304, 0.0
        %352 = vst.msk [vmem:[%s298 + $0x178] sm:$0xff] %vm304, 0.0
        %353 = vst.msk [vmem:[%s298 + $0x180] sm:$0xff] %vm304, 0.0
        %354 = vst.msk [vmem:[%s298 + $0x188] sm:$0xff] %vm304, 0.0
        %355 = vst.msk [vmem:[%s298 + $0x190] sm:$0xff] %vm304, 0.0
        %356 = vst.msk [vmem:[%s298 + $0x198] sm:$0xff] %vm304, 0.0
        %357 = vst.msk [vmem:[%s298 + $0x1a0] sm:$0xff] %vm304, 0.0
        %358 = vst.msk [vmem:[%s298 + $0x1a8] sm:$0xff] %vm304, 0.0
        %359 = vst.msk [vmem:[%s298 + $0x1b0] sm:$0xff] %vm304, 0.0
        %360 = vst.msk [vmem:[%s298 + $0x1b8] sm:$0xff] %vm304, 0.0
        %361 = vst.msk [vmem:[%s298 + $0x1c0] sm:$0xff] %vm304, 0.0
        %362 = vst.msk [vmem:[%s298 + $0x1c8] sm:$0xff] %vm304, 0.0
        %363 = vst.msk [vmem:[%s298 + $0x1d0] sm:$0xff] %vm304, 0.0
        %364 = vst.msk [vmem:[%s298 + $0x1d8] sm:$0xff] %vm304, 0.0
        %365 = vst.msk [vmem:[%s298 + $0x1e0] sm:$0xff] %vm304, 0.0
        %366 = vst.msk [vmem:[%s298 + $0x1e8] sm:$0xff] %vm304, 0.0
        %367 = vst.msk [vmem:[%s298 + $0x1f0] sm:$0xff] %vm304, 0.0
        %368 = vst.msk [vmem:[%s298 + $0x1f8] sm:$0xff] %vm304, 0.0
        %369 = vst.msk [vmem:[%s298 + $0x200] sm:$0xff] %vm304, 0.0
        %370 = vst.msk [vmem:[%s298 + $0x208] sm:$0xff] %vm304, 0.0
        %371 = vst.msk [vmem:[%s298 + $0x210] sm:$0xff] %vm304, 0.0
        %372 = vst.msk [vmem:[%s298 + $0x218] sm:$0xff] %vm304, 0.0
        %373 = vst.msk [vmem:[%s298 + $0x220] sm:$0xff] %vm304, 0.0
        %374 = vst.msk [vmem:[%s298 + $0x228] sm:$0xff] %vm304, 0.0
        %375 = vst.msk [vmem:[%s298 + $0x230] sm:$0xff] %vm304, 0.0
        %376 = vst.msk [vmem:[%s298 + $0x238] sm:$0xff] %vm304, 0.0
        %377 = vst.msk [vmem:[%s298 + $0x240] sm:$0xff] %vm304, 0.0
        %378 = vst.msk [vmem:[%s298 + $0x248] sm:$0xff] %vm304, 0.0
        %379 = vst.msk [vmem:[%s298 + $0x250] sm:$0xff] %vm304, 0.0
        %380 = vst.msk [vmem:[%s298 + $0x258] sm:$0xff] %vm304, 0.0
        %381 = vst.msk [vmem:[%s298 + $0x260] sm:$0xff] %vm304, 0.0
        %382 = vst.msk [vmem:[%s298 + $0x268] sm:$0xff] %vm304, 0.0
        %383 = vst.msk [vmem:[%s298 + $0x270] sm:$0xff] %vm304, 0.0
        %384 = vst.msk [vmem:[%s298 + $0x278] sm:$0xff] %vm304, 0.0
        %385 = vst.msk [vmem:[%s298 + $0x280] sm:$0xff] %vm304, 0.0
        %386 = vst.msk [vmem:[%s298 + $0x288] sm:$0xff] %vm304, 0.0
        %387 = vst.msk [vmem:[%s298 + $0x290] sm:$0xff] %vm304, 0.0
        %388 = vst.msk [vmem:[%s298 + $0x298] sm:$0xff] %vm304, 0.0
        %389 = vst.msk [vmem:[%s298 + $0x2a0] sm:$0xff] %vm304, 0.0
        %390 = vst.msk [vmem:[%s298 + $0x2a8] sm:$0xff] %vm304, 0.0
        %391 = vst.msk [vmem:[%s298 + $0x2b0] sm:$0xff] %vm304, 0.0
        %392 = vst.msk [vmem:[%s298 + $0x2b8] sm:$0xff] %vm304, 0.0
        %393 = vst.msk [vmem:[%s298 + $0x2c0] sm:$0xff] %vm304, 0.0
        %394 = vst.msk [vmem:[%s298 + $0x2c8] sm:$0xff] %vm304, 0.0
        %395 = vst.msk [vmem:[%s298 + $0x2d0] sm:$0xff] %vm304, 0.0
        %396 = vst.msk [vmem:[%s298 + $0x2d8] sm:$0xff] %vm304, 0.0
        %397 = vst.msk [vmem:[%s298 + $0x2e0] sm:$0xff] %vm304, 0.0
        %398 = vst.msk [vmem:[%s298 + $0x2e8] sm:$0xff] %vm304, 0.0
        %399 = vst.msk [vmem:[%s298 + $0x2f0] sm:$0xff] %vm304, 0.0
        %400 = vst.msk [vmem:[%s298 + $0x2f8] sm:$0xff] %vm304, 0.0
        %401 = vst.msk [vmem:[%s298 + $0x300] sm:$0xff] %vm304, 0.0
        %402 = vst.msk [vmem:[%s298 + $0x308] sm:$0xff] %vm304, 0.0
        %403 = vst.msk [vmem:[%s298 + $0x310] sm:$0xff] %vm304, 0.0
        %404 = vst.msk [vmem:[%s298 + $0x318] sm:$0xff] %vm304, 0.0
        %405 = vst.msk [vmem:[%s298 + $0x320] sm:$0xff] %vm304, 0.0
        %406 = vst.msk [vmem:[%s298 + $0x328] sm:$0xff] %vm304, 0.0
        %407 = vst.msk [vmem:[%s298 + $0x330] sm:$0xff] %vm304, 0.0
        %408 = vst.msk [vmem:[%s298 + $0x338] sm:$0xff] %vm304, 0.0
        %409 = vst.msk [vmem:[%s298 + $0x340] sm:$0xff] %vm304, 0.0
        %410 = vst.msk [vmem:[%s298 + $0x348] sm:$0xff] %vm304, 0.0
        %411 = vst.msk [vmem:[%s298 + $0x350] sm:$0xff] %vm304, 0.0
        %412 = vst.msk [vmem:[%s298 + $0x358] sm:$0xff] %vm304, 0.0
        %413 = vst.msk [vmem:[%s298 + $0x360] sm:$0xff] %vm304, 0.0
        %414 = vst.msk [vmem:[%s298 + $0x368] sm:$0xff] %vm304, 0.0
        %415 = vst.msk [vmem:[%s298 + $0x370] sm:$0xff] %vm304, 0.0
        %416 = vst.msk [vmem:[%s298 + $0x378] sm:$0xff] %vm304, 0.0
        %417 = vst.msk [vmem:[%s298 + $0x380] sm:$0xff] %vm304, 0.0
        %418 = vst.msk [vmem:[%s298 + $0x388] sm:$0xff] %vm304, 0.0
        %419 = vst.msk [vmem:[%s298 + $0x390] sm:$0xff] %vm304, 0.0
        %420 = vst.msk [vmem:[%s298 + $0x398] sm:$0xff] %vm304, 0.0
        %421 = vst.msk [vmem:[%s298 + $0x3a0] sm:$0xff] %vm304, 0.0
        %422 = vst.msk [vmem:[%s298 + $0x3a8] sm:$0xff] %vm304, 0.0
        %423 = vst.msk [vmem:[%s298 + $0x3b0] sm:$0xff] %vm304, 0.0
        %424 = vst.msk [vmem:[%s298 + $0x3b8] sm:$0xff] %vm304, 0.0
        %425 = vst.msk [vmem:[%s298 + $0x3c0] sm:$0xff] %vm304, 0.0
        %426 = vst.msk [vmem:[%s298 + $0x3c8] sm:$0xff] %vm304, 0.0
        %427 = vst.msk [vmem:[%s298 + $0x3d0] sm:$0xff] %vm304, 0.0
        %428 = vst.msk [vmem:[%s298 + $0x3d8] sm:$0xff] %vm304, 0.0
        %429 = vst.msk [vmem:[%s298 + $0x3e0] sm:$0xff] %vm304, 0.0
        %430 = vst.msk [vmem:[%s298 + $0x3e8] sm:$0xff] %vm304, 0.0
        %431 = vst.msk [vmem:[%s298 + $0x3f0] sm:$0xff] %vm304, 0.0
        %432 = vst.msk [vmem:[%s298 + $0x3f8] sm:$0xff] %vm304, 0.0
      $region52: #{stnkd_forward.2} parent=47 // pred_fallthru
        _
      %v433 = vld [vmem:[%s293] sm:$0x3]
      %v434 = vld [vmem:[%s1] sm:$0xf]
      %v435 = vld [vmem:[%s1 + $0x4] sm:$0xf]
      %v436 = vld [vmem:[%s1 + $0x8] sm:$0xf]
      %v437 = vld [vmem:[%s1 + $0xc] sm:$0xf]
      %v438 = vld [vmem:[%s1 + $0x10] sm:$0xf]
      %v439 = vld [vmem:[%s1 + $0x14] sm:$0xf]
      %v440 = vld [vmem:[%s1 + $0x18] sm:$0xf]
      %v441 = vld [vmem:[%s1 + $0x1c] sm:$0xf]
      %v442 = vld [vmem:[%s2] sm:$0xff]
      %v443 = vld [vmem:[%s2 + $0x8] sm:$0xff]
      %v444 = vld [vmem:[%s2 + $0x10] sm:$0xff]
      %v445 = vld [vmem:[%s2 + $0x18] sm:$0xff]
      %v446 = vld [vmem:[%s2 + $0x20] sm:$0xff]
      %v447 = vld [vmem:[%s2 + $0x28] sm:$0xff]
      %v448 = vld [vmem:[%s2 + $0x30] sm:$0xff]
      %v449 = vld [vmem:[%s2 + $0x38] sm:$0xff]
      %451 = vset.pattern.permute.xlu0 0
      %452 = vperm.xlu0 %451, %v442
      %v453 = vpop.permute.xlu0 %452
      %456 = vset.pattern.permute.xlu0 0
      %457 = vperm.xlu0 %456, %v443
      %v458 = vpop.permute.xlu0 %457
      %461 = vset.pattern.permute.xlu0 0
      %462 = vperm.xlu0 %461, %v444
      %v463 = vpop.permute.xlu0 %462
      %466 = vset.pattern.permute.xlu0 0
      %467 = vperm.xlu0 %466, %v445
      %v468 = vpop.permute.xlu0 %467
      %471 = vset.pattern.permute.xlu0 0
      %472 = vperm.xlu0 %471, %v446
      %v473 = vpop.permute.xlu0 %472
      %476 = vset.pattern.permute.xlu0 0
      %477 = vperm.xlu0 %476, %v447
      %v478 = vpop.permute.xlu0 %477
      %481 = vset.pattern.permute.xlu0 0
      %482 = vperm.xlu0 %481, %v448
      %v483 = vpop.permute.xlu0 %482
      %486 = vset.pattern.permute.xlu0 0
      %487 = vperm.xlu0 %486, %v449
      %v488 = vpop.permute.xlu0 %487
      %v498 = vunpack.c.l.b16 %v434
      %v499 = vunpack.c.l.b16 %v435
      %v500 = vunpack.c.l.b16 %v436
      %v501 = vunpack.c.l.b16 %v437
      %v502 = vunpack.c.l.b16 %v438
      %v503 = vunpack.c.l.b16 %v439
      %v504 = vunpack.c.l.b16 %v440
      %v505 = vunpack.c.l.b16 %v441
      %v506 = vpack.c.b16 %v499, %v498
      %v507 = vpack.c.b16 %v501, %v500
      %v508 = vpack.c.b16 %v503, %v502
      %v509 = vpack.c.b16 %v505, %v504
      %vm510 = vcmask 31744
      %v512 = vsel %vm510, %v506, 0
      %v515 = vsel %vm510, %v507, 0
      %v518 = vsel %vm510, %v508, 0
      %v521 = vsel %vm510, %v509, 0
      %vm523 = vcmask 1041408
      %v525 = vsel %vm523, %v433, 0
      %527 = vmatpush.bf16.msra.mxu0 0
      %528 = vmatpush.bf16.msra.mxu0 0
      %529 = vmatpush.bf16.msra.mxu0 0
      %530 = vmatpush.bf16.msra.mxu0 0
      %531 = vmatpush.bf16.msra.mxu0 0
      %532 = vmatpush.bf16.msra.mxu0 0
      %533 = vmatpush.bf16.msra.mxu0 0
      %534 = vmatpush.bf16.msra.mxu0 %v525
      %535 = vmatmul.bf16.gmra.mxu0 %v512
      %v536 = vpop.f32.mrf.mxu0
      %v537 = vadd.f32 %v453, %v536
      %v538 = vpop.f32.mrf.mxu0
      %v539 = vadd.f32 %v458, %v538
      %540 = vmatmul.bf16.gmra.mxu0 %v515
      %v541 = vpop.f32.mrf.mxu0
      %v542 = vadd.f32 %v463, %v541
      %v543 = vpop.f32.mrf.mxu0
      %v544 = vadd.f32 %v468, %v543
      %545 = vmatmul.bf16.gmra.mxu0 %v518
      %v546 = vpop.f32.mrf.mxu0
      %v547 = vadd.f32 %v473, %v546
      %v548 = vpop.f32.mrf.mxu0
      %v549 = vadd.f32 %v478, %v548
      %550 = vmatmul.bf16.gmra.mxu0 %v521
      %v551 = vpop.f32.mrf.mxu0
      %v552 = vadd.f32 %v483, %v551
      %v553 = vpop.f32.mrf.mxu0
      %v554 = vadd.f32 %v488, %v553
      %555 = vdwg.mxu0
      %v556 = vmax.f32 %v537, 0.0
      %v557 = vmax.f32 %v539, 0.0
      %v558 = vmax.f32 %v542, 0.0
      %v559 = vmax.f32 %v544, 0.0
      %v560 = vmax.f32 %v547, 0.0
      %v561 = vmax.f32 %v549, 0.0
      %v562 = vmax.f32 %v552, 0.0
      %v563 = vmax.f32 %v554, 0.0
      %v564 = vld [vmem:[%s3] sm:$0xf]
      %v565 = vld [vmem:[%s3 + $0x4] sm:$0xf]
      %v566 = vld [vmem:[%s3 + $0x8] sm:$0xf]
      %v567 = vld [vmem:[%s3 + $0xc] sm:$0xf]
      %v568 = vld [vmem:[%s3 + $0x10] sm:$0xf]
      %v569 = vld [vmem:[%s3 + $0x14] sm:$0xf]
      %v570 = vld [vmem:[%s3 + $0x18] sm:$0xf]
      %v571 = vld [vmem:[%s3 + $0x1c] sm:$0xf]
      %v572 = vld [vmem:[%s3 + $0x20] sm:$0xf]
      %v573 = vld [vmem:[%s3 + $0x24] sm:$0xf]
      %v574 = vld [vmem:[%s3 + $0x28] sm:$0xf]
      %v575 = vld [vmem:[%s3 + $0x2c] sm:$0xf]
      %v576 = vld [vmem:[%s3 + $0x30] sm:$0xf]
      %v577 = vld [vmem:[%s3 + $0x34] sm:$0xf]
      %v578 = vld [vmem:[%s3 + $0x38] sm:$0xf]
      %v579 = vld [vmem:[%s3 + $0x3c] sm:$0xf]
      %v580 = vpack.c.bf16 %v557, %v556
      %v581 = vpack.c.bf16 %v559, %v558
      %v582 = vpack.c.bf16 %v561, %v560
      %v583 = vpack.c.bf16 %v563, %v562
      %v584 = vld [vmem:[%s4] sm:$0xff]
      %v585 = vld [vmem:[%s4 + $0x8] sm:$0xff]
      %v586 = vld [vmem:[%s4 + $0x10] sm:$0xff]
      %v587 = vld [vmem:[%s4 + $0x18] sm:$0xff]
      %v588 = vld [vmem:[%s4 + $0x20] sm:$0xff]
      %v589 = vld [vmem:[%s4 + $0x28] sm:$0xff]
      %v590 = vld [vmem:[%s4 + $0x30] sm:$0xff]
      %v591 = vld [vmem:[%s4 + $0x38] sm:$0xff]
      %v592 = vld [vmem:[%s4 + $0x40] sm:$0xff]
      %v593 = vld [vmem:[%s4 + $0x48] sm:$0xff]
      %v594 = vld [vmem:[%s4 + $0x50] sm:$0xff]
      %v595 = vld [vmem:[%s4 + $0x58] sm:$0xff]
      %v596 = vld [vmem:[%s4 + $0x60] sm:$0xff]
      %v597 = vld [vmem:[%s4 + $0x68] sm:$0xff]
      %v598 = vld [vmem:[%s4 + $0x70] sm:$0xff]
      %v599 = vld [vmem:[%s4 + $0x78] sm:$0xff]
      %601 = vset.pattern.permute.xlu0 0
      %602 = vperm.xlu0 %601, %v584
      %v603 = vpop.permute.xlu0 %602
      %606 = vset.pattern.permute.xlu0 0
      %607 = vperm.xlu0 %606, %v585
      %v608 = vpop.permute.xlu0 %607
      %611 = vset.pattern.permute.xlu0 0
      %612 = vperm.xlu0 %611, %v586
      %v613 = vpop.permute.xlu0 %612
      %616 = vset.pattern.permute.xlu0 0
      %617 = vperm.xlu0 %616, %v587
      %v618 = vpop.permute.xlu0 %617
      %621 = vset.pattern.permute.xlu0 0
      %622 = vperm.xlu0 %621, %v588
      %v623 = vpop.permute.xlu0 %622
      %626 = vset.pattern.permute.xlu0 0
      %627 = vperm.xlu0 %626, %v589
      %v628 = vpop.permute.xlu0 %627
      %631 = vset.pattern.permute.xlu0 0
      %632 = vperm.xlu0 %631, %v590
      %v633 = vpop.permute.xlu0 %632
      %636 = vset.pattern.permute.xlu0 0
      %637 = vperm.xlu0 %636, %v591
      %v638 = vpop.permute.xlu0 %637
      %641 = vset.pattern.permute.xlu0 0
      %642 = vperm.xlu0 %641, %v592
      %v643 = vpop.permute.xlu0 %642
      %646 = vset.pattern.permute.xlu0 0
      %647 = vperm.xlu0 %646, %v593
      %v648 = vpop.permute.xlu0 %647
      %651 = vset.pattern.permute.xlu0 0
      %652 = vperm.xlu0 %651, %v594
      %v653 = vpop.permute.xlu0 %652
      %656 = vset.pattern.permute.xlu0 0
      %657 = vperm.xlu0 %656, %v595
      %v658 = vpop.permute.xlu0 %657
      %661 = vset.pattern.permute.xlu0 0
      %662 = vperm.xlu0 %661, %v596
      %v663 = vpop.permute.xlu0 %662
      %666 = vset.pattern.permute.xlu0 0
      %667 = vperm.xlu0 %666, %v597
      %v668 = vpop.permute.xlu0 %667
      %671 = vset.pattern.permute.xlu0 0
      %672 = vperm.xlu0 %671, %v598
      %v673 = vpop.permute.xlu0 %672
      %676 = vset.pattern.permute.xlu0 0
      %677 = vperm.xlu0 %676, %v599
      %v678 = vpop.permute.xlu0 %677
      %v696 = vunpack.c.l.b16 %v564
      %v697 = vunpack.c.l.b16 %v565
      %v698 = vunpack.c.l.b16 %v566
      %v699 = vunpack.c.l.b16 %v567
      %v700 = vunpack.c.l.b16 %v568
      %v701 = vunpack.c.l.b16 %v569
      %v702 = vunpack.c.l.b16 %v570
      %v703 = vunpack.c.l.b16 %v571
      %v704 = vunpack.c.l.b16 %v572
      %v705 = vunpack.c.l.b16 %v573
      %v706 = vunpack.c.l.b16 %v574
      %v707 = vunpack.c.l.b16 %v575
      %v708 = vunpack.c.l.b16 %v576
      %v709 = vunpack.c.l.b16 %v577
      %v710 = vunpack.c.l.b16 %v578
      %v711 = vunpack.c.l.b16 %v579
      %v712 = vpack.c.b16 %v697, %v696
      %v713 = vpack.c.b16 %v699, %v698
      %v714 = vpack.c.b16 %v701, %v700
      %v715 = vpack.c.b16 %v703, %v702
      %v716 = vpack.c.b16 %v705, %v704
      %v717 = vpack.c.b16 %v707, %v706
      %v718 = vpack.c.b16 %v709, %v708
      %v719 = vpack.c.b16 %v711, %v710
      %vm720 = vcmask 523264
      %v722 = vsel %vm720, %v712, 0
      %v725 = vsel %vm720, %v713, 0
      %v728 = vsel %vm720, %v714, 0
      %v731 = vsel %vm720, %v715, 0
      %v734 = vsel %vm720, %v716, 0
      %v737 = vsel %vm720, %v717, 0
      %v740 = vsel %vm720, %v718, 0
      %v743 = vsel %vm720, %v719, 0
      %745 = vmatpush.bf16.msra.mxu0 0
      %746 = vmatpush.bf16.msra.mxu0 0
      %747 = vmatpush.bf16.msra.mxu0 0
      %748 = vmatpush.bf16.msra.mxu0 0
      %749 = vmatpush.bf16.msra.mxu0 %v583
      %750 = vmatpush.bf16.msra.mxu0 %v582
      %751 = vmatpush.bf16.msra.mxu0 %v581
      %752 = vmatpush.bf16.msra.mxu0 %v580
      %753 = vmatmul.bf16.gmra.mxu0 %v722
      %v754 = vpop.f32.mrf.mxu0
      %v755 = vadd.f32 %v603, %v754
      %v756 = vpop.f32.mrf.mxu0
      %v757 = vadd.f32 %v608, %v756
      %758 = vmatmul.bf16.gmra.mxu0 %v725
      %v759 = vpop.f32.mrf.mxu0
      %v760 = vadd.f32 %v613, %v759
      %v761 = vpop.f32.mrf.mxu0
      %v762 = vadd.f32 %v618, %v761
      %763 = vmatmul.bf16.gmra.mxu0 %v728
      %v764 = vpop.f32.mrf.mxu0
      %v765 = vadd.f32 %v623, %v764
      %v766 = vpop.f32.mrf.mxu0
      %v767 = vadd.f32 %v628, %v766
      %768 = vmatmul.bf16.gmra.mxu0 %v731
      %v769 = vpop.f32.mrf.mxu0
      %v770 = vadd.f32 %v633, %v769
      %v771 = vpop.f32.mrf.mxu0
      %v772 = vadd.f32 %v638, %v771
      %773 = vmatmul.bf16.gmra.mxu0 %v734
      %v774 = vpop.f32.mrf.mxu0
      %v775 = vadd.f32 %v643, %v774
      %v776 = vpop.f32.mrf.mxu0
      %v777 = vadd.f32 %v648, %v776
      %778 = vmatmul.bf16.gmra.mxu0 %v737
      %v779 = vpop.f32.mrf.mxu0
      %v780 = vadd.f32 %v653, %v779
      %v781 = vpop.f32.mrf.mxu0
      %v782 = vadd.f32 %v658, %v781
      %783 = vmatmul.bf16.gmra.mxu0 %v740
      %v784 = vpop.f32.mrf.mxu0
      %v785 = vadd.f32 %v663, %v784
      %v786 = vpop.f32.mrf.mxu0
      %v787 = vadd.f32 %v668, %v786
      %788 = vmatmul.bf16.gmra.mxu0 %v743
      %v789 = vpop.f32.mrf.mxu0
      %v790 = vadd.f32 %v673, %v789
      %v791 = vpop.f32.mrf.mxu0
      %v792 = vadd.f32 %v678, %v791
      %793 = vdwg.mxu0
      %v794 = vmax.f32 %v755, 0.0
      %v795 = vmax.f32 %v757, 0.0
      %v796 = vmax.f32 %v760, 0.0
      %v797 = vmax.f32 %v762, 0.0
      %v798 = vmax.f32 %v765, 0.0
      %v799 = vmax.f32 %v767, 0.0
      %v800 = vmax.f32 %v770, 0.0
      %v801 = vmax.f32 %v772, 0.0
      %v802 = vmax.f32 %v775, 0.0
      %v803 = vmax.f32 %v777, 0.0
      %v804 = vmax.f32 %v780, 0.0
      %v805 = vmax.f32 %v782, 0.0
      %v806 = vmax.f32 %v785, 0.0
      %v807 = vmax.f32 %v787, 0.0
      %v808 = vmax.f32 %v790, 0.0
      %v809 = vmax.f32 %v792, 0.0
      %v810 = vld [vmem:[%s5] sm:$0xf]
      %v811 = vld [vmem:[%s5 + $0x4] sm:$0xf]
      %v812 = vld [vmem:[%s5 + $0x8] sm:$0xf]
      %v813 = vld [vmem:[%s5 + $0xc] sm:$0xf]
      %v814 = vld [vmem:[%s5 + $0x10] sm:$0xf]
      %v815 = vld [vmem:[%s5 + $0x14] sm:$0xf]
      %v816 = vld [vmem:[%s5 + $0x18] sm:$0xf]
      %v817 = vld [vmem:[%s5 + $0x1c] sm:$0xf]
      %v818 = vld [vmem:[%s5 + $0x20] sm:$0xf]
      %v819 = vld [vmem:[%s5 + $0x24] sm:$0xf]
      %v820 = vld [vmem:[%s5 + $0x28] sm:$0xf]
      %v821 = vld [vmem:[%s5 + $0x2c] sm:$0xf]
      %v822 = vld [vmem:[%s5 + $0x30] sm:$0xf]
      %v823 = vld [vmem:[%s5 + $0x34] sm:$0xf]
      %v824 = vld [vmem:[%s5 + $0x38] sm:$0xf]
      %v825 = vld [vmem:[%s5 + $0x3c] sm:$0xf]
      %v826 = vld [vmem:[%s5 + $0x40] sm:$0xf]
      %v827 = vld [vmem:[%s5 + $0x44] sm:$0xf]
      %v828 = vld [vmem:[%s5 + $0x48] sm:$0xf]
      %v829 = vld [vmem:[%s5 + $0x4c] sm:$0xf]
      %v830 = vld [vmem:[%s5 + $0x50] sm:$0xf]
      %v831 = vld [vmem:[%s5 + $0x54] sm:$0xf]
      %v832 = vld [vmem:[%s5 + $0x58] sm:$0xf]
      %v833 = vld [vmem:[%s5 + $0x5c] sm:$0xf]
      %v834 = vld [vmem:[%s5 + $0x60] sm:$0xf]
      %v835 = vld [vmem:[%s5 + $0x64] sm:$0xf]
      %v836 = vld [vmem:[%s5 + $0x68] sm:$0xf]
      %v837 = vld [vmem:[%s5 + $0x6c] sm:$0xf]
      %v838 = vld [vmem:[%s5 + $0x70] sm:$0xf]
      %v839 = vld [vmem:[%s5 + $0x74] sm:$0xf]
      %v840 = vld [vmem:[%s5 + $0x78] sm:$0xf]
      %v841 = vld [vmem:[%s5 + $0x7c] sm:$0xf]
      %v842 = vld [vmem:[%s5 + $0x80] sm:$0xf]
      %v843 = vld [vmem:[%s5 + $0x84] sm:$0xf]
      %v844 = vld [vmem:[%s5 + $0x88] sm:$0xf]
      %v845 = vld [vmem:[%s5 + $0x8c] sm:$0xf]
      %v846 = vld [vmem:[%s5 + $0x90] sm:$0xf]
      %v847 = vld [vmem:[%s5 + $0x94] sm:$0xf]
      %v848 = vld [vmem:[%s5 + $0x98] sm:$0xf]
      %v849 = vld [vmem:[%s5 + $0x9c] sm:$0xf]
      %v850 = vld [vmem:[%s5 + $0xa0] sm:$0xf]
      %v851 = vld [vmem:[%s5 + $0xa4] sm:$0xf]
      %v852 = vld [vmem:[%s5 + $0xa8] sm:$0xf]
      %v853 = vld [vmem:[%s5 + $0xac] sm:$0xf]
      %v854 = vld [vmem:[%s5 + $0xb0] sm:$0xf]
      %v855 = vld [vmem:[%s5 + $0xb4] sm:$0xf]
      %v856 = vld [vmem:[%s5 + $0xb8] sm:$0xf]
      %v857 = vld [vmem:[%s5 + $0xbc] sm:$0xf]
      %v858 = vld [vmem:[%s5 + $0xc0] sm:$0xf]
      %v859 = vld [vmem:[%s5 + $0xc4] sm:$0xf]
      %v860 = vld [vmem:[%s5 + $0xc8] sm:$0xf]
      %v861 = vld [vmem:[%s5 + $0xcc] sm:$0xf]
      %v862 = vld [vmem:[%s5 + $0xd0] sm:$0xf]
      %v863 = vld [vmem:[%s5 + $0xd4] sm:$0xf]
      %v864 = vld [vmem:[%s5 + $0xd8] sm:$0xf]
      %v865 = vld [vmem:[%s5 + $0xdc] sm:$0xf]
      %v866 = vld [vmem:[%s5 + $0xe0] sm:$0xf]
      %v867 = vld [vmem:[%s5 + $0xe4] sm:$0xf]
      %v868 = vld [vmem:[%s5 + $0xe8] sm:$0xf]
      %v869 = vld [vmem:[%s5 + $0xec] sm:$0xf]
      %v870 = vld [vmem:[%s5 + $0xf0] sm:$0xf]
      %v871 = vld [vmem:[%s5 + $0xf4] sm:$0xf]
      %v872 = vld [vmem:[%s5 + $0xf8] sm:$0xf]
      %v873 = vld [vmem:[%s5 + $0xfc] sm:$0xf]
      %v874 = vld [vmem:[%s5 + $0x100] sm:$0xf]
      %v875 = vld [vmem:[%s5 + $0x104] sm:$0xf]
      %v876 = vld [vmem:[%s5 + $0x108] sm:$0xf]
      %v877 = vld [vmem:[%s5 + $0x10c] sm:$0xf]
      %v878 = vld [vmem:[%s5 + $0x110] sm:$0xf]
      %v879 = vld [vmem:[%s5 + $0x114] sm:$0xf]
      %v880 = vld [vmem:[%s5 + $0x118] sm:$0xf]
      %v881 = vld [vmem:[%s5 + $0x11c] sm:$0xf]
      %v882 = vld [vmem:[%s5 + $0x120] sm:$0xf]
      %v883 = vld [vmem:[%s5 + $0x124] sm:$0xf]
      %v884 = vld [vmem:[%s5 + $0x128] sm:$0xf]
      %v885 = vld [vmem:[%s5 + $0x12c] sm:$0xf]
      %v886 = vld [vmem:[%s5 + $0x130] sm:$0xf]
      %v887 = vld [vmem:[%s5 + $0x134] sm:$0xf]
      %v888 = vld [vmem:[%s5 + $0x138] sm:$0xf]
      %v889 = vld [vmem:[%s5 + $0x13c] sm:$0xf]
      %v890 = vld [vmem:[%s5 + $0x140] sm:$0xf]
      %v891 = vld [vmem:[%s5 + $0x144] sm:$0xf]
      %v892 = vld [vmem:[%s5 + $0x148] sm:$0xf]
      %v893 = vld [vmem:[%s5 + $0x14c] sm:$0xf]
      %v894 = vld [vmem:[%s5 + $0x150] sm:$0xf]
      %v895 = vld [vmem:[%s5 + $0x154] sm:$0xf]
      %v896 = vld [vmem:[%s5 + $0x158] sm:$0xf]
      %v897 = vld [vmem:[%s5 + $0x15c] sm:$0xf]
      %v898 = vld [vmem:[%s5 + $0x160] sm:$0xf]
      %v899 = vld [vmem:[%s5 + $0x164] sm:$0xf]
      %v900 = vld [vmem:[%s5 + $0x168] sm:$0xf]
      %v901 = vld [vmem:[%s5 + $0x16c] sm:$0xf]
      %v902 = vld [vmem:[%s5 + $0x170] sm:$0xf]
      %v903 = vld [vmem:[%s5 + $0x174] sm:$0xf]
      %v904 = vld [vmem:[%s5 + $0x178] sm:$0xf]
      %v905 = vld [vmem:[%s5 + $0x17c] sm:$0xf]
      %v906 = vld [vmem:[%s5 + $0x180] sm:$0xf]
      %v907 = vld [vmem:[%s5 + $0x184] sm:$0xf]
      %v908 = vld [vmem:[%s5 + $0x188] sm:$0xf]
      %v909 = vld [vmem:[%s5 + $0x18c] sm:$0xf]
      %v910 = vld [vmem:[%s5 + $0x190] sm:$0xf]
      %v911 = vld [vmem:[%s5 + $0x194] sm:$0xf]
      %v912 = vld [vmem:[%s5 + $0x198] sm:$0xf]
      %v913 = vld [vmem:[%s5 + $0x19c] sm:$0xf]
      %v914 = vld [vmem:[%s5 + $0x1a0] sm:$0xf]
      %v915 = vld [vmem:[%s5 + $0x1a4] sm:$0xf]
      %v916 = vld [vmem:[%s5 + $0x1a8] sm:$0xf]
      %v917 = vld [vmem:[%s5 + $0x1ac] sm:$0xf]
      %v918 = vld [vmem:[%s5 + $0x1b0] sm:$0xf]
      %v919 = vld [vmem:[%s5 + $0x1b4] sm:$0xf]
      %v920 = vld [vmem:[%s5 + $0x1b8] sm:$0xf]
      %v921 = vld [vmem:[%s5 + $0x1bc] sm:$0xf]
      %v922 = vld [vmem:[%s5 + $0x1c0] sm:$0xf]
      %v923 = vld [vmem:[%s5 + $0x1c4] sm:$0xf]
      %v924 = vld [vmem:[%s5 + $0x1c8] sm:$0xf]
      %v925 = vld [vmem:[%s5 + $0x1cc] sm:$0xf]
      %v926 = vld [vmem:[%s5 + $0x1d0] sm:$0xf]
      %v927 = vld [vmem:[%s5 + $0x1d4] sm:$0xf]
      %v928 = vld [vmem:[%s5 + $0x1d8] sm:$0xf]
      %v929 = vld [vmem:[%s5 + $0x1dc] sm:$0xf]
      %v930 = vld [vmem:[%s5 + $0x1e0] sm:$0xf]
      %v931 = vld [vmem:[%s5 + $0x1e4] sm:$0xf]
      %v932 = vld [vmem:[%s5 + $0x1e8] sm:$0xf]
      %v933 = vld [vmem:[%s5 + $0x1ec] sm:$0xf]
      %v934 = vld [vmem:[%s5 + $0x1f0] sm:$0xf]
      %v935 = vld [vmem:[%s5 + $0x1f4] sm:$0xf]
      %v936 = vld [vmem:[%s5 + $0x1f8] sm:$0xf]
      %v937 = vld [vmem:[%s5 + $0x1fc] sm:$0xf]
      %v938 = vpack.c.bf16 %v795, %v794
      %v939 = vpack.c.bf16 %v797, %v796
      %v940 = vpack.c.bf16 %v799, %v798
      %v941 = vpack.c.bf16 %v801, %v800
      %v942 = vpack.c.bf16 %v803, %v802
      %v943 = vpack.c.bf16 %v805, %v804
      %v944 = vpack.c.bf16 %v807, %v806
      %v945 = vpack.c.bf16 %v809, %v808
      %v946 = vld [vmem:[%s6] sm:$0xff]
      %v947 = vld [vmem:[%s6 + $0x8] sm:$0xff]
      %v948 = vld [vmem:[%s6 + $0x10] sm:$0xff]
      %v949 = vld [vmem:[%s6 + $0x18] sm:$0xff]
      %v950 = vld [vmem:[%s6 + $0x20] sm:$0xff]
      %v951 = vld [vmem:[%s6 + $0x28] sm:$0xff]
      %v952 = vld [vmem:[%s6 + $0x30] sm:$0xff]
      %v953 = vld [vmem:[%s6 + $0x38] sm:$0xff]
      %v954 = vld [vmem:[%s6 + $0x40] sm:$0xff]
      %v955 = vld [vmem:[%s6 + $0x48] sm:$0xff]
      %v956 = vld [vmem:[%s6 + $0x50] sm:$0xff]
      %v957 = vld [vmem:[%s6 + $0x58] sm:$0xff]
      %v958 = vld [vmem:[%s6 + $0x60] sm:$0xff]
      %v959 = vld [vmem:[%s6 + $0x68] sm:$0xff]
      %v960 = vld [vmem:[%s6 + $0x70] sm:$0xff]
      %v961 = vld [vmem:[%s6 + $0x78] sm:$0xff]
      %v962 = vld [vmem:[%s6 + $0x80] sm:$0xff]
      %v963 = vld [vmem:[%s6 + $0x88] sm:$0xff]
      %v964 = vld [vmem:[%s6 + $0x90] sm:$0xff]
      %v965 = vld [vmem:[%s6 + $0x98] sm:$0xff]
      %v966 = vld [vmem:[%s6 + $0xa0] sm:$0xff]
      %v967 = vld [vmem:[%s6 + $0xa8] sm:$0xff]
      %v968 = vld [vmem:[%s6 + $0xb0] sm:$0xff]
      %v969 = vld [vmem:[%s6 + $0xb8] sm:$0xff]
      %v970 = vld [vmem:[%s6 + $0xc0] sm:$0xff]
      %v971 = vld [vmem:[%s6 + $0xc8] sm:$0xff]
      %v972 = vld [vmem:[%s6 + $0xd0] sm:$0xff]
      %v973 = vld [vmem:[%s6 + $0xd8] sm:$0xff]
      %v974 = vld [vmem:[%s6 + $0xe0] sm:$0xff]
      %v975 = vld [vmem:[%s6 + $0xe8] sm:$0xff]
      %v976 = vld [vmem:[%s6 + $0xf0] sm:$0xff]
      %v977 = vld [vmem:[%s6 + $0xf8] sm:$0xff]
      %v978 = vld [vmem:[%s6 + $0x100] sm:$0xff]
      %v979 = vld [vmem:[%s6 + $0x108] sm:$0xff]
      %v980 = vld [vmem:[%s6 + $0x110] sm:$0xff]
      %v981 = vld [vmem:[%s6 + $0x118] sm:$0xff]
      %v982 = vld [vmem:[%s6 + $0x120] sm:$0xff]
      %v983 = vld [vmem:[%s6 + $0x128] sm:$0xff]
      %v984 = vld [vmem:[%s6 + $0x130] sm:$0xff]
      %v985 = vld [vmem:[%s6 + $0x138] sm:$0xff]
      %v986 = vld [vmem:[%s6 + $0x140] sm:$0xff]
      %v987 = vld [vmem:[%s6 + $0x148] sm:$0xff]
      %v988 = vld [vmem:[%s6 + $0x150] sm:$0xff]
      %v989 = vld [vmem:[%s6 + $0x158] sm:$0xff]
      %v990 = vld [vmem:[%s6 + $0x160] sm:$0xff]
      %v991 = vld [vmem:[%s6 + $0x168] sm:$0xff]
      %v992 = vld [vmem:[%s6 + $0x170] sm:$0xff]
      %v993 = vld [vmem:[%s6 + $0x178] sm:$0xff]
      %v994 = vld [vmem:[%s6 + $0x180] sm:$0xff]
      %v995 = vld [vmem:[%s6 + $0x188] sm:$0xff]
      %v996 = vld [vmem:[%s6 + $0x190] sm:$0xff]
      %v997 = vld [vmem:[%s6 + $0x198] sm:$0xff]
      %v998 = vld [vmem:[%s6 + $0x1a0] sm:$0xff]
      %v999 = vld [vmem:[%s6 + $0x1a8] sm:$0xff]
      %v1000 = vld [vmem:[%s6 + $0x1b0] sm:$0xff]
      %v1001 = vld [vmem:[%s6 + $0x1b8] sm:$0xff]
      %v1002 = vld [vmem:[%s6 + $0x1c0] sm:$0xff]
      %v1003 = vld [vmem:[%s6 + $0x1c8] sm:$0xff]
      %v1004 = vld [vmem:[%s6 + $0x1d0] sm:$0xff]
      %v1005 = vld [vmem:[%s6 + $0x1d8] sm:$0xff]
      %v1006 = vld [vmem:[%s6 + $0x1e0] sm:$0xff]
      %v1007 = vld [vmem:[%s6 + $0x1e8] sm:$0xff]
      %v1008 = vld [vmem:[%s6 + $0x1f0] sm:$0xff]
      %v1009 = vld [vmem:[%s6 + $0x1f8] sm:$0xff]
      %v1010 = vld [vmem:[%s6 + $0x200] sm:$0xff]
      %v1011 = vld [vmem:[%s6 + $0x208] sm:$0xff]
      %v1012 = vld [vmem:[%s6 + $0x210] sm:$0xff]
      %v1013 = vld [vmem:[%s6 + $0x218] sm:$0xff]
      %v1014 = vld [vmem:[%s6 + $0x220] sm:$0xff]
      %v1015 = vld [vmem:[%s6 + $0x228] sm:$0xff]
      %v1016 = vld [vmem:[%s6 + $0x230] sm:$0xff]
      %v1017 = vld [vmem:[%s6 + $0x238] sm:$0xff]
      %v1018 = vld [vmem:[%s6 + $0x240] sm:$0xff]
      %v1019 = vld [vmem:[%s6 + $0x248] sm:$0xff]
      %v1020 = vld [vmem:[%s6 + $0x250] sm:$0xff]
      %v1021 = vld [vmem:[%s6 + $0x258] sm:$0xff]
      %v1022 = vld [vmem:[%s6 + $0x260] sm:$0xff]
      %v1023 = vld [vmem:[%s6 + $0x268] sm:$0xff]
      %v1024 = vld [vmem:[%s6 + $0x270] sm:$0xff]
      %v1025 = vld [vmem:[%s6 + $0x278] sm:$0xff]
      %v1026 = vld [vmem:[%s6 + $0x280] sm:$0xff]
      %v1027 = vld [vmem:[%s6 + $0x288] sm:$0xff]
      %v1028 = vld [vmem:[%s6 + $0x290] sm:$0xff]
      %v1029 = vld [vmem:[%s6 + $0x298] sm:$0xff]
      %v1030 = vld [vmem:[%s6 + $0x2a0] sm:$0xff]
      %v1031 = vld [vmem:[%s6 + $0x2a8] sm:$0xff]
      %v1032 = vld [vmem:[%s6 + $0x2b0] sm:$0xff]
      %v1033 = vld [vmem:[%s6 + $0x2b8] sm:$0xff]
      %v1034 = vld [vmem:[%s6 + $0x2c0] sm:$0xff]
      %v1035 = vld [vmem:[%s6 + $0x2c8] sm:$0xff]
      %v1036 = vld [vmem:[%s6 + $0x2d0] sm:$0xff]
      %v1037 = vld [vmem:[%s6 + $0x2d8] sm:$0xff]
      %v1038 = vld [vmem:[%s6 + $0x2e0] sm:$0xff]
      %v1039 = vld [vmem:[%s6 + $0x2e8] sm:$0xff]
      %v1040 = vld [vmem:[%s6 + $0x2f0] sm:$0xff]
      %v1041 = vld [vmem:[%s6 + $0x2f8] sm:$0xff]
      %v1042 = vld [vmem:[%s6 + $0x300] sm:$0xff]
      %v1043 = vld [vmem:[%s6 + $0x308] sm:$0xff]
      %v1044 = vld [vmem:[%s6 + $0x310] sm:$0xff]
      %v1045 = vld [vmem:[%s6 + $0x318] sm:$0xff]
      %v1046 = vld [vmem:[%s6 + $0x320] sm:$0xff]
      %v1047 = vld [vmem:[%s6 + $0x328] sm:$0xff]
      %v1048 = vld [vmem:[%s6 + $0x330] sm:$0xff]
      %v1049 = vld [vmem:[%s6 + $0x338] sm:$0xff]
      %v1050 = vld [vmem:[%s6 + $0x340] sm:$0xff]
      %v1051 = vld [vmem:[%s6 + $0x348] sm:$0xff]
      %v1052 = vld [vmem:[%s6 + $0x350] sm:$0xff]
      %v1053 = vld [vmem:[%s6 + $0x358] sm:$0xff]
      %v1054 = vld [vmem:[%s6 + $0x360] sm:$0xff]
      %v1055 = vld [vmem:[%s6 + $0x368] sm:$0xff]
      %v1056 = vld [vmem:[%s6 + $0x370] sm:$0xff]
      %v1057 = vld [vmem:[%s6 + $0x378] sm:$0xff]
      %v1058 = vld [vmem:[%s6 + $0x380] sm:$0xff]
      %v1059 = vld [vmem:[%s6 + $0x388] sm:$0xff]
      %v1060 = vld [vmem:[%s6 + $0x390] sm:$0xff]
      %v1061 = vld [vmem:[%s6 + $0x398] sm:$0xff]
      %v1062 = vld [vmem:[%s6 + $0x3a0] sm:$0xff]
      %v1063 = vld [vmem:[%s6 + $0x3a8] sm:$0xff]
      %v1064 = vld [vmem:[%s6 + $0x3b0] sm:$0xff]
      %v1065 = vld [vmem:[%s6 + $0x3b8] sm:$0xff]
      %v1066 = vld [vmem:[%s6 + $0x3c0] sm:$0xff]
      %v1067 = vld [vmem:[%s6 + $0x3c8] sm:$0xff]
      %v1068 = vld [vmem:[%s6 + $0x3d0] sm:$0xff]
      %v1069 = vld [vmem:[%s6 + $0x3d8] sm:$0xff]
      %v1070 = vld [vmem:[%s6 + $0x3e0] sm:$0xff]
      %v1071 = vld [vmem:[%s6 + $0x3e8] sm:$0xff]
      %v1072 = vld [vmem:[%s6 + $0x3f0] sm:$0xff]
      %v1073 = vld [vmem:[%s6 + $0x3f8] sm:$0xff]
      %1075 = vset.pattern.permute.xlu0 0
      %1076 = vperm.xlu0 %1075, %v946
      %v1077 = vpop.permute.xlu0 %1076
      %1080 = vset.pattern.permute.xlu0 0
      %1081 = vperm.xlu0 %1080, %v947
      %v1082 = vpop.permute.xlu0 %1081
      %1085 = vset.pattern.permute.xlu0 0
      %1086 = vperm.xlu0 %1085, %v948
      %v1087 = vpop.permute.xlu0 %1086
      %1090 = vset.pattern.permute.xlu0 0
      %1091 = vperm.xlu0 %1090, %v949
      %v1092 = vpop.permute.xlu0 %1091
      %1095 = vset.pattern.permute.xlu0 0
      %1096 = vperm.xlu0 %1095, %v950
      %v1097 = vpop.permute.xlu0 %1096
      %1100 = vset.pattern.permute.xlu0 0
      %1101 = vperm.xlu0 %1100, %v951
      %v1102 = vpop.permute.xlu0 %1101
      %1105 = vset.pattern.permute.xlu0 0
      %1106 = vperm.xlu0 %1105, %v952
      %v1107 = vpop.permute.xlu0 %1106
      %1110 = vset.pattern.permute.xlu0 0
      %1111 = vperm.xlu0 %1110, %v953
      %v1112 = vpop.permute.xlu0 %1111
      %1115 = vset.pattern.permute.xlu0 0
      %1116 = vperm.xlu0 %1115, %v954
      %v1117 = vpop.permute.xlu0 %1116
      %1120 = vset.pattern.permute.xlu0 0
      %1121 = vperm.xlu0 %1120, %v955
      %v1122 = vpop.permute.xlu0 %1121
      %1125 = vset.pattern.permute.xlu0 0
      %1126 = vperm.xlu0 %1125, %v956
      %v1127 = vpop.permute.xlu0 %1126
      %1130 = vset.pattern.permute.xlu0 0
      %1131 = vperm.xlu0 %1130, %v957
      %v1132 = vpop.permute.xlu0 %1131
      %1135 = vset.pattern.permute.xlu0 0
      %1136 = vperm.xlu0 %1135, %v958
      %v1137 = vpop.permute.xlu0 %1136
      %1140 = vset.pattern.permute.xlu0 0
      %1141 = vperm.xlu0 %1140, %v959
      %v1142 = vpop.permute.xlu0 %1141
      %1145 = vset.pattern.permute.xlu0 0
      %1146 = vperm.xlu0 %1145, %v960
      %v1147 = vpop.permute.xlu0 %1146
      %1150 = vset.pattern.permute.xlu0 0
      %1151 = vperm.xlu0 %1150, %v961
      %v1152 = vpop.permute.xlu0 %1151
      %1155 = vset.pattern.permute.xlu0 0
      %1156 = vperm.xlu0 %1155, %v962
      %v1157 = vpop.permute.xlu0 %1156
      %1160 = vset.pattern.permute.xlu0 0
      %1161 = vperm.xlu0 %1160, %v963
      %v1162 = vpop.permute.xlu0 %1161
      %1165 = vset.pattern.permute.xlu0 0
      %1166 = vperm.xlu0 %1165, %v964
      %v1167 = vpop.permute.xlu0 %1166
      %1170 = vset.pattern.permute.xlu0 0
      %1171 = vperm.xlu0 %1170, %v965
      %v1172 = vpop.permute.xlu0 %1171
      %1175 = vset.pattern.permute.xlu0 0
      %1176 = vperm.xlu0 %1175, %v966
      %v1177 = vpop.permute.xlu0 %1176
      %1180 = vset.pattern.permute.xlu0 0
      %1181 = vperm.xlu0 %1180, %v967
      %v1182 = vpop.permute.xlu0 %1181
      %1185 = vset.pattern.permute.xlu0 0
      %1186 = vperm.xlu0 %1185, %v968
      %v1187 = vpop.permute.xlu0 %1186
      %1190 = vset.pattern.permute.xlu0 0
      %1191 = vperm.xlu0 %1190, %v969
      %v1192 = vpop.permute.xlu0 %1191
      %1195 = vset.pattern.permute.xlu0 0
      %1196 = vperm.xlu0 %1195, %v970
      %v1197 = vpop.permute.xlu0 %1196
      %1200 = vset.pattern.permute.xlu0 0
      %1201 = vperm.xlu0 %1200, %v971
      %v1202 = vpop.permute.xlu0 %1201
      %1205 = vset.pattern.permute.xlu0 0
      %1206 = vperm.xlu0 %1205, %v972
      %v1207 = vpop.permute.xlu0 %1206
      %1210 = vset.pattern.permute.xlu0 0
      %1211 = vperm.xlu0 %1210, %v973
      %v1212 = vpop.permute.xlu0 %1211
      %1215 = vset.pattern.permute.xlu0 0
      %1216 = vperm.xlu0 %1215, %v974
      %v1217 = vpop.permute.xlu0 %1216
      %1220 = vset.pattern.permute.xlu0 0
      %1221 = vperm.xlu0 %1220, %v975
      %v1222 = vpop.permute.xlu0 %1221
      %1225 = vset.pattern.permute.xlu0 0
      %1226 = vperm.xlu0 %1225, %v976
      %v1227 = vpop.permute.xlu0 %1226
      %1230 = vset.pattern.permute.xlu0 0
      %1231 = vperm.xlu0 %1230, %v977
      %v1232 = vpop.permute.xlu0 %1231
      %1235 = vset.pattern.permute.xlu0 0
      %1236 = vperm.xlu0 %1235, %v978
      %v1237 = vpop.permute.xlu0 %1236
      %1240 = vset.pattern.permute.xlu0 0
      %1241 = vperm.xlu0 %1240, %v979
      %v1242 = vpop.permute.xlu0 %1241
      %1245 = vset.pattern.permute.xlu0 0
      %1246 = vperm.xlu0 %1245, %v980
      %v1247 = vpop.permute.xlu0 %1246
      %1250 = vset.pattern.permute.xlu0 0
      %1251 = vperm.xlu0 %1250, %v981
      %v1252 = vpop.permute.xlu0 %1251
      %1255 = vset.pattern.permute.xlu0 0
      %1256 = vperm.xlu0 %1255, %v982
      %v1257 = vpop.permute.xlu0 %1256
      %1260 = vset.pattern.permute.xlu0 0
      %1261 = vperm.xlu0 %1260, %v983
      %v1262 = vpop.permute.xlu0 %1261
      %1265 = vset.pattern.permute.xlu0 0
      %1266 = vperm.xlu0 %1265, %v984
      %v1267 = vpop.permute.xlu0 %1266
      %1270 = vset.pattern.permute.xlu0 0
      %1271 = vperm.xlu0 %1270, %v985
      %v1272 = vpop.permute.xlu0 %1271
      %1275 = vset.pattern.permute.xlu0 0
      %1276 = vperm.xlu0 %1275, %v986
      %v1277 = vpop.permute.xlu0 %1276
      %1280 = vset.pattern.permute.xlu0 0
      %1281 = vperm.xlu0 %1280, %v987
      %v1282 = vpop.permute.xlu0 %1281
      %1285 = vset.pattern.permute.xlu0 0
      %1286 = vperm.xlu0 %1285, %v988
      %v1287 = vpop.permute.xlu0 %1286
      %1290 = vset.pattern.permute.xlu0 0
      %1291 = vperm.xlu0 %1290, %v989
      %v1292 = vpop.permute.xlu0 %1291
      %1295 = vset.pattern.permute.xlu0 0
      %1296 = vperm.xlu0 %1295, %v990
      %v1297 = vpop.permute.xlu0 %1296
      %1300 = vset.pattern.permute.xlu0 0
      %1301 = vperm.xlu0 %1300, %v991
      %v1302 = vpop.permute.xlu0 %1301
      %1305 = vset.pattern.permute.xlu0 0
      %1306 = vperm.xlu0 %1305, %v992
      %v1307 = vpop.permute.xlu0 %1306
      %1310 = vset.pattern.permute.xlu0 0
      %1311 = vperm.xlu0 %1310, %v993
      %v1312 = vpop.permute.xlu0 %1311
      %1315 = vset.pattern.permute.xlu0 0
      %1316 = vperm.xlu0 %1315, %v994
      %v1317 = vpop.permute.xlu0 %1316
      %1320 = vset.pattern.permute.xlu0 0
      %1321 = vperm.xlu0 %1320, %v995
      %v1322 = vpop.permute.xlu0 %1321
      %1325 = vset.pattern.permute.xlu0 0
      %1326 = vperm.xlu0 %1325, %v996
      %v1327 = vpop.permute.xlu0 %1326
      %1330 = vset.pattern.permute.xlu0 0
      %1331 = vperm.xlu0 %1330, %v997
      %v1332 = vpop.permute.xlu0 %1331
      %1335 = vset.pattern.permute.xlu0 0
      %1336 = vperm.xlu0 %1335, %v998
      %v1337 = vpop.permute.xlu0 %1336
      %1340 = vset.pattern.permute.xlu0 0
      %1341 = vperm.xlu0 %1340, %v999
      %v1342 = vpop.permute.xlu0 %1341
      %1345 = vset.pattern.permute.xlu0 0
      %1346 = vperm.xlu0 %1345, %v1000
      %v1347 = vpop.permute.xlu0 %1346
      %1350 = vset.pattern.permute.xlu0 0
      %1351 = vperm.xlu0 %1350, %v1001
      %v1352 = vpop.permute.xlu0 %1351
      %1355 = vset.pattern.permute.xlu0 0
      %1356 = vperm.xlu0 %1355, %v1002
      %v1357 = vpop.permute.xlu0 %1356
      %1360 = vset.pattern.permute.xlu0 0
      %1361 = vperm.xlu0 %1360, %v1003
      %v1362 = vpop.permute.xlu0 %1361
      %1365 = vset.pattern.permute.xlu0 0
      %1366 = vperm.xlu0 %1365, %v1004
      %v1367 = vpop.permute.xlu0 %1366
      %1370 = vset.pattern.permute.xlu0 0
      %1371 = vperm.xlu0 %1370, %v1005
      %v1372 = vpop.permute.xlu0 %1371
      %1375 = vset.pattern.permute.xlu0 0
      %1376 = vperm.xlu0 %1375, %v1006
      %v1377 = vpop.permute.xlu0 %1376
      %1380 = vset.pattern.permute.xlu0 0
      %1381 = vperm.xlu0 %1380, %v1007
      %v1382 = vpop.permute.xlu0 %1381
      %1385 = vset.pattern.permute.xlu0 0
      %1386 = vperm.xlu0 %1385, %v1008
      %v1387 = vpop.permute.xlu0 %1386
      %1390 = vset.pattern.permute.xlu0 0
      %1391 = vperm.xlu0 %1390, %v1009
      %v1392 = vpop.permute.xlu0 %1391
      %1395 = vset.pattern.permute.xlu0 0
      %1396 = vperm.xlu0 %1395, %v1010
      %v1397 = vpop.permute.xlu0 %1396
      %1400 = vset.pattern.permute.xlu0 0
      %1401 = vperm.xlu0 %1400, %v1011
      %v1402 = vpop.permute.xlu0 %1401
      %1405 = vset.pattern.permute.xlu0 0
      %1406 = vperm.xlu0 %1405, %v1012
      %v1407 = vpop.permute.xlu0 %1406
      %1410 = vset.pattern.permute.xlu0 0
      %1411 = vperm.xlu0 %1410, %v1013
      %v1412 = vpop.permute.xlu0 %1411
      %1415 = vset.pattern.permute.xlu0 0
      %1416 = vperm.xlu0 %1415, %v1014
      %v1417 = vpop.permute.xlu0 %1416
      %1420 = vset.pattern.permute.xlu0 0
      %1421 = vperm.xlu0 %1420, %v1015
      %v1422 = vpop.permute.xlu0 %1421
      %1425 = vset.pattern.permute.xlu0 0
      %1426 = vperm.xlu0 %1425, %v1016
      %v1427 = vpop.permute.xlu0 %1426
      %1430 = vset.pattern.permute.xlu0 0
      %1431 = vperm.xlu0 %1430, %v1017
      %v1432 = vpop.permute.xlu0 %1431
      %1435 = vset.pattern.permute.xlu0 0
      %1436 = vperm.xlu0 %1435, %v1018
      %v1437 = vpop.permute.xlu0 %1436
      %1440 = vset.pattern.permute.xlu0 0
      %1441 = vperm.xlu0 %1440, %v1019
      %v1442 = vpop.permute.xlu0 %1441
      %1445 = vset.pattern.permute.xlu0 0
      %1446 = vperm.xlu0 %1445, %v1020
      %v1447 = vpop.permute.xlu0 %1446
      %1450 = vset.pattern.permute.xlu0 0
      %1451 = vperm.xlu0 %1450, %v1021
      %v1452 = vpop.permute.xlu0 %1451
      %1455 = vset.pattern.permute.xlu0 0
      %1456 = vperm.xlu0 %1455, %v1022
      %v1457 = vpop.permute.xlu0 %1456
      %1460 = vset.pattern.permute.xlu0 0
      %1461 = vperm.xlu0 %1460, %v1023
      %v1462 = vpop.permute.xlu0 %1461
      %1465 = vset.pattern.permute.xlu0 0
      %1466 = vperm.xlu0 %1465, %v1024
      %v1467 = vpop.permute.xlu0 %1466
      %1470 = vset.pattern.permute.xlu0 0
      %1471 = vperm.xlu0 %1470, %v1025
      %v1472 = vpop.permute.xlu0 %1471
      %1475 = vset.pattern.permute.xlu0 0
      %1476 = vperm.xlu0 %1475, %v1026
      %v1477 = vpop.permute.xlu0 %1476
      %1480 = vset.pattern.permute.xlu0 0
      %1481 = vperm.xlu0 %1480, %v1027
      %v1482 = vpop.permute.xlu0 %1481
      %1485 = vset.pattern.permute.xlu0 0
      %1486 = vperm.xlu0 %1485, %v1028
      %v1487 = vpop.permute.xlu0 %1486
      %1490 = vset.pattern.permute.xlu0 0
      %1491 = vperm.xlu0 %1490, %v1029
      %v1492 = vpop.permute.xlu0 %1491
      %1495 = vset.pattern.permute.xlu0 0
      %1496 = vperm.xlu0 %1495, %v1030
      %v1497 = vpop.permute.xlu0 %1496
      %1500 = vset.pattern.permute.xlu0 0
      %1501 = vperm.xlu0 %1500, %v1031
      %v1502 = vpop.permute.xlu0 %1501
      %1505 = vset.pattern.permute.xlu0 0
      %1506 = vperm.xlu0 %1505, %v1032
      %v1507 = vpop.permute.xlu0 %1506
      %1510 = vset.pattern.permute.xlu0 0
      %1511 = vperm.xlu0 %1510, %v1033
      %v1512 = vpop.permute.xlu0 %1511
      %1515 = vset.pattern.permute.xlu0 0
      %1516 = vperm.xlu0 %1515, %v1034
      %v1517 = vpop.permute.xlu0 %1516
      %1520 = vset.pattern.permute.xlu0 0
      %1521 = vperm.xlu0 %1520, %v1035
      %v1522 = vpop.permute.xlu0 %1521
      %1525 = vset.pattern.permute.xlu0 0
      %1526 = vperm.xlu0 %1525, %v1036
      %v1527 = vpop.permute.xlu0 %1526
      %1530 = vset.pattern.permute.xlu0 0
      %1531 = vperm.xlu0 %1530, %v1037
      %v1532 = vpop.permute.xlu0 %1531
      %1535 = vset.pattern.permute.xlu0 0
      %1536 = vperm.xlu0 %1535, %v1038
      %v1537 = vpop.permute.xlu0 %1536
      %1540 = vset.pattern.permute.xlu0 0
      %1541 = vperm.xlu0 %1540, %v1039
      %v1542 = vpop.permute.xlu0 %1541
      %1545 = vset.pattern.permute.xlu0 0
      %1546 = vperm.xlu0 %1545, %v1040
      %v1547 = vpop.permute.xlu0 %1546
      %1550 = vset.pattern.permute.xlu0 0
      %1551 = vperm.xlu0 %1550, %v1041
      %v1552 = vpop.permute.xlu0 %1551
      %1555 = vset.pattern.permute.xlu0 0
      %1556 = vperm.xlu0 %1555, %v1042
      %v1557 = vpop.permute.xlu0 %1556
      %1560 = vset.pattern.permute.xlu0 0
      %1561 = vperm.xlu0 %1560, %v1043
      %v1562 = vpop.permute.xlu0 %1561
      %1565 = vset.pattern.permute.xlu0 0
      %1566 = vperm.xlu0 %1565, %v1044
      %v1567 = vpop.permute.xlu0 %1566
      %1570 = vset.pattern.permute.xlu0 0
      %1571 = vperm.xlu0 %1570, %v1045
      %v1572 = vpop.permute.xlu0 %1571
      %1575 = vset.pattern.permute.xlu0 0
      %1576 = vperm.xlu0 %1575, %v1046
      %v1577 = vpop.permute.xlu0 %1576
      %1580 = vset.pattern.permute.xlu0 0
      %1581 = vperm.xlu0 %1580, %v1047
      %v1582 = vpop.permute.xlu0 %1581
      %1585 = vset.pattern.permute.xlu0 0
      %1586 = vperm.xlu0 %1585, %v1048
      %v1587 = vpop.permute.xlu0 %1586
      %1590 = vset.pattern.permute.xlu0 0
      %1591 = vperm.xlu0 %1590, %v1049
      %v1592 = vpop.permute.xlu0 %1591
      %1595 = vset.pattern.permute.xlu0 0
      %1596 = vperm.xlu0 %1595, %v1050
      %v1597 = vpop.permute.xlu0 %1596
      %1600 = vset.pattern.permute.xlu0 0
      %1601 = vperm.xlu0 %1600, %v1051
      %v1602 = vpop.permute.xlu0 %1601
      %1605 = vset.pattern.permute.xlu0 0
      %1606 = vperm.xlu0 %1605, %v1052
      %v1607 = vpop.permute.xlu0 %1606
      %1610 = vset.pattern.permute.xlu0 0
      %1611 = vperm.xlu0 %1610, %v1053
      %v1612 = vpop.permute.xlu0 %1611
      %1615 = vset.pattern.permute.xlu0 0
      %1616 = vperm.xlu0 %1615, %v1054
      %v1617 = vpop.permute.xlu0 %1616
      %1620 = vset.pattern.permute.xlu0 0
      %1621 = vperm.xlu0 %1620, %v1055
      %v1622 = vpop.permute.xlu0 %1621
      %1625 = vset.pattern.permute.xlu0 0
      %1626 = vperm.xlu0 %1625, %v1056
      %v1627 = vpop.permute.xlu0 %1626
      %1630 = vset.pattern.permute.xlu0 0
      %1631 = vperm.xlu0 %1630, %v1057
      %v1632 = vpop.permute.xlu0 %1631
      %1635 = vset.pattern.permute.xlu0 0
      %1636 = vperm.xlu0 %1635, %v1058
      %v1637 = vpop.permute.xlu0 %1636
      %1640 = vset.pattern.permute.xlu0 0
      %1641 = vperm.xlu0 %1640, %v1059
      %v1642 = vpop.permute.xlu0 %1641
      %1645 = vset.pattern.permute.xlu0 0
      %1646 = vperm.xlu0 %1645, %v1060
      %v1647 = vpop.permute.xlu0 %1646
      %1650 = vset.pattern.permute.xlu0 0
      %1651 = vperm.xlu0 %1650, %v1061
      %v1652 = vpop.permute.xlu0 %1651
      %1655 = vset.pattern.permute.xlu0 0
      %1656 = vperm.xlu0 %1655, %v1062
      %v1657 = vpop.permute.xlu0 %1656
      %1660 = vset.pattern.permute.xlu0 0
      %1661 = vperm.xlu0 %1660, %v1063
      %v1662 = vpop.permute.xlu0 %1661
      %1665 = vset.pattern.permute.xlu0 0
      %1666 = vperm.xlu0 %1665, %v1064
      %v1667 = vpop.permute.xlu0 %1666
      %1670 = vset.pattern.permute.xlu0 0
      %1671 = vperm.xlu0 %1670, %v1065
      %v1672 = vpop.permute.xlu0 %1671
      %1675 = vset.pattern.permute.xlu0 0
      %1676 = vperm.xlu0 %1675, %v1066
      %v1677 = vpop.permute.xlu0 %1676
      %1680 = vset.pattern.permute.xlu0 0
      %1681 = vperm.xlu0 %1680, %v1067
      %v1682 = vpop.permute.xlu0 %1681
      %1685 = vset.pattern.permute.xlu0 0
      %1686 = vperm.xlu0 %1685, %v1068
      %v1687 = vpop.permute.xlu0 %1686
      %1690 = vset.pattern.permute.xlu0 0
      %1691 = vperm.xlu0 %1690, %v1069
      %v1692 = vpop.permute.xlu0 %1691
      %1695 = vset.pattern.permute.xlu0 0
      %1696 = vperm.xlu0 %1695, %v1070
      %v1697 = vpop.permute.xlu0 %1696
      %1700 = vset.pattern.permute.xlu0 0
      %1701 = vperm.xlu0 %1700, %v1071
      %v1702 = vpop.permute.xlu0 %1701
      %1705 = vset.pattern.permute.xlu0 0
      %1706 = vperm.xlu0 %1705, %v1072
      %v1707 = vpop.permute.xlu0 %1706
      %1710 = vset.pattern.permute.xlu0 0
      %1711 = vperm.xlu0 %1710, %v1073
      %v1712 = vpop.permute.xlu0 %1711
      %v1842 = vunpack.c.l.b16 %v810
      %v1843 = vunpack.c.l.b16 %v811
      %v1844 = vunpack.c.l.b16 %v812
      %v1845 = vunpack.c.l.b16 %v813
      %v1846 = vunpack.c.l.b16 %v814
      %v1847 = vunpack.c.l.b16 %v815
      %v1848 = vunpack.c.l.b16 %v816
      %v1849 = vunpack.c.l.b16 %v817
      %v1850 = vunpack.c.l.b16 %v818
      %v1851 = vunpack.c.l.b16 %v819
      %v1852 = vunpack.c.l.b16 %v820
      %v1853 = vunpack.c.l.b16 %v821
      %v1854 = vunpack.c.l.b16 %v822
      %v1855 = vunpack.c.l.b16 %v823
      %v1856 = vunpack.c.l.b16 %v824
      %v1857 = vunpack.c.l.b16 %v825
      %v1858 = vunpack.c.l.b16 %v826
      %v1859 = vunpack.c.l.b16 %v827
      %v1860 = vunpack.c.l.b16 %v828
      %v1861 = vunpack.c.l.b16 %v829
      %v1862 = vunpack.c.l.b16 %v830
      %v1863 = vunpack.c.l.b16 %v831
      %v1864 = vunpack.c.l.b16 %v832
      %v1865 = vunpack.c.l.b16 %v833
      %v1866 = vunpack.c.l.b16 %v834
      %v1867 = vunpack.c.l.b16 %v835
      %v1868 = vunpack.c.l.b16 %v836
      %v1869 = vunpack.c.l.b16 %v837
      %v1870 = vunpack.c.l.b16 %v838
      %v1871 = vunpack.c.l.b16 %v839
      %v1872 = vunpack.c.l.b16 %v840
      %v1873 = vunpack.c.l.b16 %v841
      %v1874 = vunpack.c.l.b16 %v842
      %v1875 = vunpack.c.l.b16 %v843
      %v1876 = vunpack.c.l.b16 %v844
      %v1877 = vunpack.c.l.b16 %v845
      %v1878 = vunpack.c.l.b16 %v846
      %v1879 = vunpack.c.l.b16 %v847
      %v1880 = vunpack.c.l.b16 %v848
      %v1881 = vunpack.c.l.b16 %v849
      %v1882 = vunpack.c.l.b16 %v850
      %v1883 = vunpack.c.l.b16 %v851
      %v1884 = vunpack.c.l.b16 %v852
      %v1885 = vunpack.c.l.b16 %v853
      %v1886 = vunpack.c.l.b16 %v854
      %v1887 = vunpack.c.l.b16 %v855
      %v1888 = vunpack.c.l.b16 %v856
      %v1889 = vunpack.c.l.b16 %v857
      %v1890 = vunpack.c.l.b16 %v858
      %v1891 = vunpack.c.l.b16 %v859
      %v1892 = vunpack.c.l.b16 %v860
      %v1893 = vunpack.c.l.b16 %v861
      %v1894 = vunpack.c.l.b16 %v862
      %v1895 = vunpack.c.l.b16 %v863
      %v1896 = vunpack.c.l.b16 %v864
      %v1897 = vunpack.c.l.b16 %v865
      %v1898 = vunpack.c.l.b16 %v866
      %v1899 = vunpack.c.l.b16 %v867
      %v1900 = vunpack.c.l.b16 %v868
      %v1901 = vunpack.c.l.b16 %v869
      %v1902 = vunpack.c.l.b16 %v870
      %v1903 = vunpack.c.l.b16 %v871
      %v1904 = vunpack.c.l.b16 %v872
      %v1905 = vunpack.c.l.b16 %v873
      %v1906 = vunpack.c.l.b16 %v874
      %v1907 = vunpack.c.l.b16 %v875
      %v1908 = vunpack.c.l.b16 %v876
      %v1909 = vunpack.c.l.b16 %v877
      %v1910 = vunpack.c.l.b16 %v878
      %v1911 = vunpack.c.l.b16 %v879
      %v1912 = vunpack.c.l.b16 %v880
      %v1913 = vunpack.c.l.b16 %v881
      %v1914 = vunpack.c.l.b16 %v882
      %v1915 = vunpack.c.l.b16 %v883
      %v1916 = vunpack.c.l.b16 %v884
      %v1917 = vunpack.c.l.b16 %v885
      %v1918 = vunpack.c.l.b16 %v886
      %v1919 = vunpack.c.l.b16 %v887
      %v1920 = vunpack.c.l.b16 %v888
      %v1921 = vunpack.c.l.b16 %v889
      %v1922 = vunpack.c.l.b16 %v890
      %v1923 = vunpack.c.l.b16 %v891
      %v1924 = vunpack.c.l.b16 %v892
      %v1925 = vunpack.c.l.b16 %v893
      %v1926 = vunpack.c.l.b16 %v894
      %v1927 = vunpack.c.l.b16 %v895
      %v1928 = vunpack.c.l.b16 %v896
      %v1929 = vunpack.c.l.b16 %v897
      %v1930 = vunpack.c.l.b16 %v898
      %v1931 = vunpack.c.l.b16 %v899
      %v1932 = vunpack.c.l.b16 %v900
      %v1933 = vunpack.c.l.b16 %v901
      %v1934 = vunpack.c.l.b16 %v902
      %v1935 = vunpack.c.l.b16 %v903
      %v1936 = vunpack.c.l.b16 %v904
      %v1937 = vunpack.c.l.b16 %v905
      %v1938 = vunpack.c.l.b16 %v906
      %v1939 = vunpack.c.l.b16 %v907
      %v1940 = vunpack.c.l.b16 %v908
      %v1941 = vunpack.c.l.b16 %v909
      %v1942 = vunpack.c.l.b16 %v910
      %v1943 = vunpack.c.l.b16 %v911
      %v1944 = vunpack.c.l.b16 %v912
      %v1945 = vunpack.c.l.b16 %v913
      %v1946 = vunpack.c.l.b16 %v914
      %v1947 = vunpack.c.l.b16 %v915
      %v1948 = vunpack.c.l.b16 %v916
      %v1949 = vunpack.c.l.b16 %v917
      %v1950 = vunpack.c.l.b16 %v918
      %v1951 = vunpack.c.l.b16 %v919
      %v1952 = vunpack.c.l.b16 %v920
      %v1953 = vunpack.c.l.b16 %v921
      %v1954 = vunpack.c.l.b16 %v922
      %v1955 = vunpack.c.l.b16 %v923
      %v1956 = vunpack.c.l.b16 %v924
      %v1957 = vunpack.c.l.b16 %v925
      %v1958 = vunpack.c.l.b16 %v926
      %v1959 = vunpack.c.l.b16 %v927
      %v1960 = vunpack.c.l.b16 %v928
      %v1961 = vunpack.c.l.b16 %v929
      %v1962 = vunpack.c.l.b16 %v930
      %v1963 = vunpack.c.l.b16 %v931
      %v1964 = vunpack.c.l.b16 %v932
      %v1965 = vunpack.c.l.b16 %v933
      %v1966 = vunpack.c.l.b16 %v934
      %v1967 = vunpack.c.l.b16 %v935
      %v1968 = vunpack.c.l.b16 %v936
      %v1969 = vunpack.c.l.b16 %v937
      %v1970 = vpack.c.b16 %v1843, %v1842
      %v1971 = vpack.c.b16 %v1845, %v1844
      %v1972 = vpack.c.b16 %v1847, %v1846
      %v1973 = vpack.c.b16 %v1849, %v1848
      %v1974 = vpack.c.b16 %v1851, %v1850
      %v1975 = vpack.c.b16 %v1853, %v1852
      %v1976 = vpack.c.b16 %v1855, %v1854
      %v1977 = vpack.c.b16 %v1857, %v1856
      %v1978 = vpack.c.b16 %v1859, %v1858
      %v1979 = vpack.c.b16 %v1861, %v1860
      %v1980 = vpack.c.b16 %v1863, %v1862
      %v1981 = vpack.c.b16 %v1865, %v1864
      %v1982 = vpack.c.b16 %v1867, %v1866
      %v1983 = vpack.c.b16 %v1869, %v1868
      %v1984 = vpack.c.b16 %v1871, %v1870
      %v1985 = vpack.c.b16 %v1873, %v1872
      %v1986 = vpack.c.b16 %v1875, %v1874
      %v1987 = vpack.c.b16 %v1877, %v1876
      %v1988 = vpack.c.b16 %v1879, %v1878
      %v1989 = vpack.c.b16 %v1881, %v1880
      %v1990 = vpack.c.b16 %v1883, %v1882
      %v1991 = vpack.c.b16 %v1885, %v1884
      %v1992 = vpack.c.b16 %v1887, %v1886
      %v1993 = vpack.c.b16 %v1889, %v1888
      %v1994 = vpack.c.b16 %v1891, %v1890
      %v1995 = vpack.c.b16 %v1893, %v1892
      %v1996 = vpack.c.b16 %v1895, %v1894
      %v1997 = vpack.c.b16 %v1897, %v1896
      %v1998 = vpack.c.b16 %v1899, %v1898
      %v1999 = vpack.c.b16 %v1901, %v1900
      %v2000 = vpack.c.b16 %v1903, %v1902
      %v2001 = vpack.c.b16 %v1905, %v1904
      %v2002 = vpack.c.b16 %v1907, %v1906
      %v2003 = vpack.c.b16 %v1909, %v1908
      %v2004 = vpack.c.b16 %v1911, %v1910
      %v2005 = vpack.c.b16 %v1913, %v1912
      %v2006 = vpack.c.b16 %v1915, %v1914
      %v2007 = vpack.c.b16 %v1917, %v1916
      %v2008 = vpack.c.b16 %v1919, %v1918
      %v2009 = vpack.c.b16 %v1921, %v1920
      %v2010 = vpack.c.b16 %v1923, %v1922
      %v2011 = vpack.c.b16 %v1925, %v1924
      %v2012 = vpack.c.b16 %v1927, %v1926
      %v2013 = vpack.c.b16 %v1929, %v1928
      %v2014 = vpack.c.b16 %v1931, %v1930
      %v2015 = vpack.c.b16 %v1933, %v1932
      %v2016 = vpack.c.b16 %v1935, %v1934
      %v2017 = vpack.c.b16 %v1937, %v1936
      %v2018 = vpack.c.b16 %v1939, %v1938
      %v2019 = vpack.c.b16 %v1941, %v1940
      %v2020 = vpack.c.b16 %v1943, %v1942
      %v2021 = vpack.c.b16 %v1945, %v1944
      %v2022 = vpack.c.b16 %v1947, %v1946
      %v2023 = vpack.c.b16 %v1949, %v1948
      %v2024 = vpack.c.b16 %v1951, %v1950
      %v2025 = vpack.c.b16 %v1953, %v1952
      %v2026 = vpack.c.b16 %v1955, %v1954
      %v2027 = vpack.c.b16 %v1957, %v1956
      %v2028 = vpack.c.b16 %v1959, %v1958
      %v2029 = vpack.c.b16 %v1961, %v1960
      %v2030 = vpack.c.b16 %v1963, %v1962
      %v2031 = vpack.c.b16 %v1965, %v1964
      %v2032 = vpack.c.b16 %v1967, %v1966
      %v2033 = vpack.c.b16 %v1969, %v1968
      %2098 = vmatpush.bf16.msra.mxu0 %v945
      %2099 = vmatpush.bf16.msra.mxu0 %v944
      %2100 = vmatpush.bf16.msra.mxu0 %v943
      %2101 = vmatpush.bf16.msra.mxu0 %v942
      %2102 = vmatpush.bf16.msra.mxu0 %v941
      %2103 = vmatpush.bf16.msra.mxu0 %v940
      %2104 = vmatpush.bf16.msra.mxu0 %v939
      %2105 = vmatpush.bf16.msra.mxu0 %v938
      %2106 = vmatmul.bf16.gmra.mxu0 %v1970
      %v2107 = vpop.f32.mrf.mxu0
      %v2108 = vadd.f32 %v1077, %v2107
      %v2109 = vpop.f32.mrf.mxu0
      %v2110 = vadd.f32 %v1082, %v2109
      %2111 = vmatmul.bf16.gmra.mxu0 %v1971
      %v2112 = vpop.f32.mrf.mxu0
      %v2113 = vadd.f32 %v1087, %v2112
      %v2114 = vpop.f32.mrf.mxu0
      %v2115 = vadd.f32 %v1092, %v2114
      %2116 = vmatmul.bf16.gmra.mxu0 %v1972
      %v2117 = vpop.f32.mrf.mxu0
      %v2118 = vadd.f32 %v1097, %v2117
      %v2119 = vpop.f32.mrf.mxu0
      %v2120 = vadd.f32 %v1102, %v2119
      %2121 = vmatmul.bf16.gmra.mxu0 %v1973
      %v2122 = vpop.f32.mrf.mxu0
      %v2123 = vadd.f32 %v1107, %v2122
      %v2124 = vpop.f32.mrf.mxu0
      %v2125 = vadd.f32 %v1112, %v2124
      %2126 = vmatmul.bf16.gmra.mxu0 %v1974
      %v2127 = vpop.f32.mrf.mxu0
      %v2128 = vadd.f32 %v1117, %v2127
      %v2129 = vpop.f32.mrf.mxu0
      %v2130 = vadd.f32 %v1122, %v2129
      %2131 = vmatmul.bf16.gmra.mxu0 %v1975
      %v2132 = vpop.f32.mrf.mxu0
      %v2133 = vadd.f32 %v1127, %v2132
      %v2134 = vpop.f32.mrf.mxu0
      %v2135 = vadd.f32 %v1132, %v2134
      %2136 = vmatmul.bf16.gmra.mxu0 %v1976
      %v2137 = vpop.f32.mrf.mxu0
      %v2138 = vadd.f32 %v1137, %v2137
      %v2139 = vpop.f32.mrf.mxu0
      %v2140 = vadd.f32 %v1142, %v2139
      %2141 = vmatmul.bf16.gmra.mxu0 %v1977
      %v2142 = vpop.f32.mrf.mxu0
      %v2143 = vadd.f32 %v1147, %v2142
      %v2144 = vpop.f32.mrf.mxu0
      %v2145 = vadd.f32 %v1152, %v2144
      %2146 = vmatmul.bf16.gmra.mxu0 %v1978
      %v2147 = vpop.f32.mrf.mxu0
      %v2148 = vadd.f32 %v1157, %v2147
      %v2149 = vpop.f32.mrf.mxu0
      %v2150 = vadd.f32 %v1162, %v2149
      %2151 = vmatmul.bf16.gmra.mxu0 %v1979
      %v2152 = vpop.f32.mrf.mxu0
      %v2153 = vadd.f32 %v1167, %v2152
      %v2154 = vpop.f32.mrf.mxu0
      %v2155 = vadd.f32 %v1172, %v2154
      %2156 = vmatmul.bf16.gmra.mxu0 %v1980
      %v2157 = vpop.f32.mrf.mxu0
      %v2158 = vadd.f32 %v1177, %v2157
      %v2159 = vpop.f32.mrf.mxu0
      %v2160 = vadd.f32 %v1182, %v2159
      %2161 = vmatmul.bf16.gmra.mxu0 %v1981
      %v2162 = vpop.f32.mrf.mxu0
      %v2163 = vadd.f32 %v1187, %v2162
      %v2164 = vpop.f32.mrf.mxu0
      %v2165 = vadd.f32 %v1192, %v2164
      %2166 = vmatmul.bf16.gmra.mxu0 %v1982
      %v2167 = vpop.f32.mrf.mxu0
      %v2168 = vadd.f32 %v1197, %v2167
      %v2169 = vpop.f32.mrf.mxu0
      %v2170 = vadd.f32 %v1202, %v2169
      %2171 = vmatmul.bf16.gmra.mxu0 %v1983
      %v2172 = vpop.f32.mrf.mxu0
      %v2173 = vadd.f32 %v1207, %v2172
      %v2174 = vpop.f32.mrf.mxu0
      %v2175 = vadd.f32 %v1212, %v2174
      %2176 = vmatmul.bf16.gmra.mxu0 %v1984
      %v2177 = vpop.f32.mrf.mxu0
      %v2178 = vadd.f32 %v1217, %v2177
      %v2179 = vpop.f32.mrf.mxu0
      %v2180 = vadd.f32 %v1222, %v2179
      %2181 = vmatmul.bf16.gmra.mxu0 %v1985
      %v2182 = vpop.f32.mrf.mxu0
      %v2183 = vadd.f32 %v1227, %v2182
      %v2184 = vpop.f32.mrf.mxu0
      %v2185 = vadd.f32 %v1232, %v2184
      %2186 = vmatmul.bf16.gmra.mxu0 %v1986
      %v2187 = vpop.f32.mrf.mxu0
      %v2188 = vadd.f32 %v1237, %v2187
      %v2189 = vpop.f32.mrf.mxu0
      %v2190 = vadd.f32 %v1242, %v2189
      %2191 = vmatmul.bf16.gmra.mxu0 %v1987
      %v2192 = vpop.f32.mrf.mxu0
      %v2193 = vadd.f32 %v1247, %v2192
      %v2194 = vpop.f32.mrf.mxu0
      %v2195 = vadd.f32 %v1252, %v2194
      %2196 = vmatmul.bf16.gmra.mxu0 %v1988
      %v2197 = vpop.f32.mrf.mxu0
      %v2198 = vadd.f32 %v1257, %v2197
      %v2199 = vpop.f32.mrf.mxu0
      %v2200 = vadd.f32 %v1262, %v2199
      %2201 = vmatmul.bf16.gmra.mxu0 %v1989
      %v2202 = vpop.f32.mrf.mxu0
      %v2203 = vadd.f32 %v1267, %v2202
      %v2204 = vpop.f32.mrf.mxu0
      %v2205 = vadd.f32 %v1272, %v2204
      %2206 = vmatmul.bf16.gmra.mxu0 %v1990
      %v2207 = vpop.f32.mrf.mxu0
      %v2208 = vadd.f32 %v1277, %v2207
      %v2209 = vpop.f32.mrf.mxu0
      %v2210 = vadd.f32 %v1282, %v2209
      %2211 = vmatmul.bf16.gmra.mxu0 %v1991
      %v2212 = vpop.f32.mrf.mxu0
      %v2213 = vadd.f32 %v1287, %v2212
      %v2214 = vpop.f32.mrf.mxu0
      %v2215 = vadd.f32 %v1292, %v2214
      %2216 = vmatmul.bf16.gmra.mxu0 %v1992
      %v2217 = vpop.f32.mrf.mxu0
      %v2218 = vadd.f32 %v1297, %v2217
      %v2219 = vpop.f32.mrf.mxu0
      %v2220 = vadd.f32 %v1302, %v2219
      %2221 = vmatmul.bf16.gmra.mxu0 %v1993
      %v2222 = vpop.f32.mrf.mxu0
      %v2223 = vadd.f32 %v1307, %v2222
      %v2224 = vpop.f32.mrf.mxu0
      %v2225 = vadd.f32 %v1312, %v2224
      %2226 = vmatmul.bf16.gmra.mxu0 %v1994
      %v2227 = vpop.f32.mrf.mxu0
      %v2228 = vadd.f32 %v1317, %v2227
      %v2229 = vpop.f32.mrf.mxu0
      %v2230 = vadd.f32 %v1322, %v2229
      %2231 = vmatmul.bf16.gmra.mxu0 %v1995
      %v2232 = vpop.f32.mrf.mxu0
      %v2233 = vadd.f32 %v1327, %v2232
      %v2234 = vpop.f32.mrf.mxu0
      %v2235 = vadd.f32 %v1332, %v2234
      %2236 = vmatmul.bf16.gmra.mxu0 %v1996
      %v2237 = vpop.f32.mrf.mxu0
      %v2238 = vadd.f32 %v1337, %v2237
      %v2239 = vpop.f32.mrf.mxu0
      %v2240 = vadd.f32 %v1342, %v2239
      %2241 = vmatmul.bf16.gmra.mxu0 %v1997
      %v2242 = vpop.f32.mrf.mxu0
      %v2243 = vadd.f32 %v1347, %v2242
      %v2244 = vpop.f32.mrf.mxu0
      %v2245 = vadd.f32 %v1352, %v2244
      %2246 = vmatmul.bf16.gmra.mxu0 %v1998
      %v2247 = vpop.f32.mrf.mxu0
      %v2248 = vadd.f32 %v1357, %v2247
      %v2249 = vpop.f32.mrf.mxu0
      %v2250 = vadd.f32 %v1362, %v2249
      %2251 = vmatmul.bf16.gmra.mxu0 %v1999
      %v2252 = vpop.f32.mrf.mxu0
      %v2253 = vadd.f32 %v1367, %v2252
      %v2254 = vpop.f32.mrf.mxu0
      %v2255 = vadd.f32 %v1372, %v2254
      %2256 = vmatmul.bf16.gmra.mxu0 %v2000
      %v2257 = vpop.f32.mrf.mxu0
      %v2258 = vadd.f32 %v1377, %v2257
      %v2259 = vpop.f32.mrf.mxu0
      %v2260 = vadd.f32 %v1382, %v2259
      %2261 = vmatmul.bf16.gmra.mxu0 %v2001
      %v2262 = vpop.f32.mrf.mxu0
      %v2263 = vadd.f32 %v1387, %v2262
      %v2264 = vpop.f32.mrf.mxu0
      %v2265 = vadd.f32 %v1392, %v2264
      %2266 = vmatmul.bf16.gmra.mxu0 %v2002
      %v2267 = vpop.f32.mrf.mxu0
      %v2268 = vadd.f32 %v1397, %v2267
      %v2269 = vpop.f32.mrf.mxu0
      %v2270 = vadd.f32 %v1402, %v2269
      %2271 = vmatmul.bf16.gmra.mxu0 %v2003
      %v2272 = vpop.f32.mrf.mxu0
      %v2273 = vadd.f32 %v1407, %v2272
      %v2274 = vpop.f32.mrf.mxu0
      %v2275 = vadd.f32 %v1412, %v2274
      %2276 = vmatmul.bf16.gmra.mxu0 %v2004
      %v2277 = vpop.f32.mrf.mxu0
      %v2278 = vadd.f32 %v1417, %v2277
      %v2279 = vpop.f32.mrf.mxu0
      %v2280 = vadd.f32 %v1422, %v2279
      %2281 = vmatmul.bf16.gmra.mxu0 %v2005
      %v2282 = vpop.f32.mrf.mxu0
      %v2283 = vadd.f32 %v1427, %v2282
      %v2284 = vpop.f32.mrf.mxu0
      %v2285 = vadd.f32 %v1432, %v2284
      %2286 = vmatmul.bf16.gmra.mxu0 %v2006
      %v2287 = vpop.f32.mrf.mxu0
      %v2288 = vadd.f32 %v1437, %v2287
      %v2289 = vpop.f32.mrf.mxu0
      %v2290 = vadd.f32 %v1442, %v2289
      %2291 = vmatmul.bf16.gmra.mxu0 %v2007
      %v2292 = vpop.f32.mrf.mxu0
      %v2293 = vadd.f32 %v1447, %v2292
      %v2294 = vpop.f32.mrf.mxu0
      %v2295 = vadd.f32 %v1452, %v2294
      %2296 = vmatmul.bf16.gmra.mxu0 %v2008
      %v2297 = vpop.f32.mrf.mxu0
      %v2298 = vadd.f32 %v1457, %v2297
      %v2299 = vpop.f32.mrf.mxu0
      %v2300 = vadd.f32 %v1462, %v2299
      %2301 = vmatmul.bf16.gmra.mxu0 %v2009
      %v2302 = vpop.f32.mrf.mxu0
      %v2303 = vadd.f32 %v1467, %v2302
      %v2304 = vpop.f32.mrf.mxu0
      %v2305 = vadd.f32 %v1472, %v2304
      %2306 = vmatmul.bf16.gmra.mxu0 %v2010
      %v2307 = vpop.f32.mrf.mxu0
      %v2308 = vadd.f32 %v1477, %v2307
      %v2309 = vpop.f32.mrf.mxu0
      %v2310 = vadd.f32 %v1482, %v2309
      %2311 = vmatmul.bf16.gmra.mxu0 %v2011
      %v2312 = vpop.f32.mrf.mxu0
      %v2313 = vadd.f32 %v1487, %v2312
      %v2314 = vpop.f32.mrf.mxu0
      %v2315 = vadd.f32 %v1492, %v2314
      %2316 = vmatmul.bf16.gmra.mxu0 %v2012
      %v2317 = vpop.f32.mrf.mxu0
      %v2318 = vadd.f32 %v1497, %v2317
      %v2319 = vpop.f32.mrf.mxu0
      %v2320 = vadd.f32 %v1502, %v2319
      %2321 = vmatmul.bf16.gmra.mxu0 %v2013
      %v2322 = vpop.f32.mrf.mxu0
      %v2323 = vadd.f32 %v1507, %v2322
      %v2324 = vpop.f32.mrf.mxu0
      %v2325 = vadd.f32 %v1512, %v2324
      %2326 = vmatmul.bf16.gmra.mxu0 %v2014
      %v2327 = vpop.f32.mrf.mxu0
      %v2328 = vadd.f32 %v1517, %v2327
      %v2329 = vpop.f32.mrf.mxu0
      %v2330 = vadd.f32 %v1522, %v2329
      %2331 = vmatmul.bf16.gmra.mxu0 %v2015
      %v2332 = vpop.f32.mrf.mxu0
      %v2333 = vadd.f32 %v1527, %v2332
      %v2334 = vpop.f32.mrf.mxu0
      %v2335 = vadd.f32 %v1532, %v2334
      %2336 = vmatmul.bf16.gmra.mxu0 %v2016
      %v2337 = vpop.f32.mrf.mxu0
      %v2338 = vadd.f32 %v1537, %v2337
      %v2339 = vpop.f32.mrf.mxu0
      %v2340 = vadd.f32 %v1542, %v2339
      %2341 = vmatmul.bf16.gmra.mxu0 %v2017
      %v2342 = vpop.f32.mrf.mxu0
      %v2343 = vadd.f32 %v1547, %v2342
      %v2344 = vpop.f32.mrf.mxu0
      %v2345 = vadd.f32 %v1552, %v2344
      %2346 = vmatmul.bf16.gmra.mxu0 %v2018
      %v2347 = vpop.f32.mrf.mxu0
      %v2348 = vadd.f32 %v1557, %v2347
      %v2349 = vpop.f32.mrf.mxu0
      %v2350 = vadd.f32 %v1562, %v2349
      %2351 = vmatmul.bf16.gmra.mxu0 %v2019
      %v2352 = vpop.f32.mrf.mxu0
      %v2353 = vadd.f32 %v1567, %v2352
      %v2354 = vpop.f32.mrf.mxu0
      %v2355 = vadd.f32 %v1572, %v2354
      %2356 = vmatmul.bf16.gmra.mxu0 %v2020
      %v2357 = vpop.f32.mrf.mxu0
      %v2358 = vadd.f32 %v1577, %v2357
      %v2359 = vpop.f32.mrf.mxu0
      %v2360 = vadd.f32 %v1582, %v2359
      %2361 = vmatmul.bf16.gmra.mxu0 %v2021
      %v2362 = vpop.f32.mrf.mxu0
      %v2363 = vadd.f32 %v1587, %v2362
      %v2364 = vpop.f32.mrf.mxu0
      %v2365 = vadd.f32 %v1592, %v2364
      %2366 = vmatmul.bf16.gmra.mxu0 %v2022
      %v2367 = vpop.f32.mrf.mxu0
      %v2368 = vadd.f32 %v1597, %v2367
      %v2369 = vpop.f32.mrf.mxu0
      %v2370 = vadd.f32 %v1602, %v2369
      %2371 = vmatmul.bf16.gmra.mxu0 %v2023
      %v2372 = vpop.f32.mrf.mxu0
      %v2373 = vadd.f32 %v1607, %v2372
      %v2374 = vpop.f32.mrf.mxu0
      %v2375 = vadd.f32 %v1612, %v2374
      %2376 = vmatmul.bf16.gmra.mxu0 %v2024
      %v2377 = vpop.f32.mrf.mxu0
      %v2378 = vadd.f32 %v1617, %v2377
      %v2379 = vpop.f32.mrf.mxu0
      %v2380 = vadd.f32 %v1622, %v2379
      %2381 = vmatmul.bf16.gmra.mxu0 %v2025
      %v2382 = vpop.f32.mrf.mxu0
      %v2383 = vadd.f32 %v1627, %v2382
      %v2384 = vpop.f32.mrf.mxu0
      %v2385 = vadd.f32 %v1632, %v2384
      %2386 = vmatmul.bf16.gmra.mxu0 %v2026
      %v2387 = vpop.f32.mrf.mxu0
      %v2388 = vadd.f32 %v1637, %v2387
      %v2389 = vpop.f32.mrf.mxu0
      %v2390 = vadd.f32 %v1642, %v2389
      %2391 = vmatmul.bf16.gmra.mxu0 %v2027
      %v2392 = vpop.f32.mrf.mxu0
      %v2393 = vadd.f32 %v1647, %v2392
      %v2394 = vpop.f32.mrf.mxu0
      %v2395 = vadd.f32 %v1652, %v2394
      %2396 = vmatmul.bf16.gmra.mxu0 %v2028
      %v2397 = vpop.f32.mrf.mxu0
      %v2398 = vadd.f32 %v1657, %v2397
      %v2399 = vpop.f32.mrf.mxu0
      %v2400 = vadd.f32 %v1662, %v2399
      %2401 = vmatmul.bf16.gmra.mxu0 %v2029
      %v2402 = vpop.f32.mrf.mxu0
      %v2403 = vadd.f32 %v1667, %v2402
      %v2404 = vpop.f32.mrf.mxu0
      %v2405 = vadd.f32 %v1672, %v2404
      %2406 = vmatmul.bf16.gmra.mxu0 %v2030
      %v2407 = vpop.f32.mrf.mxu0
      %v2408 = vadd.f32 %v1677, %v2407
      %v2409 = vpop.f32.mrf.mxu0
      %v2410 = vadd.f32 %v1682, %v2409
      %2411 = vmatmul.bf16.gmra.mxu0 %v2031
      %v2412 = vpop.f32.mrf.mxu0
      %v2413 = vadd.f32 %v1687, %v2412
      %v2414 = vpop.f32.mrf.mxu0
      %v2415 = vadd.f32 %v1692, %v2414
      %2416 = vmatmul.bf16.gmra.mxu0 %v2032
      %v2417 = vpop.f32.mrf.mxu0
      %v2418 = vadd.f32 %v1697, %v2417
      %v2419 = vpop.f32.mrf.mxu0
      %v2420 = vadd.f32 %v1702, %v2419
      %2421 = vmatmul.bf16.gmra.mxu0 %v2033
      %v2422 = vpop.f32.mrf.mxu0
      %v2423 = vadd.f32 %v1707, %v2422
      %v2424 = vpop.f32.mrf.mxu0
      %v2425 = vadd.f32 %v1712, %v2424
      %2426 = vdwg.mxu0
      %v2427 = vmax.f32 %v2108, 0.0
      %v2428 = vmax.f32 %v2110, 0.0
      %v2429 = vmax.f32 %v2113, 0.0
      %v2430 = vmax.f32 %v2115, 0.0
      %v2431 = vmax.f32 %v2118, 0.0
      %v2432 = vmax.f32 %v2120, 0.0
      %v2433 = vmax.f32 %v2123, 0.0
      %v2434 = vmax.f32 %v2125, 0.0
      %v2435 = vmax.f32 %v2128, 0.0
      %v2436 = vmax.f32 %v2130, 0.0
      %v2437 = vmax.f32 %v2133, 0.0
      %v2438 = vmax.f32 %v2135, 0.0
      %v2439 = vmax.f32 %v2138, 0.0
      %v2440 = vmax.f32 %v2140, 0.0
      %v2441 = vmax.f32 %v2143, 0.0
      %v2442 = vmax.f32 %v2145, 0.0
      %v2443 = vmax.f32 %v2148, 0.0
      %v2444 = vmax.f32 %v2150, 0.0
      %v2445 = vmax.f32 %v2153, 0.0
      %v2446 = vmax.f32 %v2155, 0.0
      %v2447 = vmax.f32 %v2158, 0.0
      %v2448 = vmax.f32 %v2160, 0.0
      %v2449 = vmax.f32 %v2163, 0.0
      %v2450 = vmax.f32 %v2165, 0.0
      %v2451 = vmax.f32 %v2168, 0.0
      %v2452 = vmax.f32 %v2170, 0.0
      %v2453 = vmax.f32 %v2173, 0.0
      %v2454 = vmax.f32 %v2175, 0.0
      %v2455 = vmax.f32 %v2178, 0.0
      %v2456 = vmax.f32 %v2180, 0.0
      %v2457 = vmax.f32 %v2183, 0.0
      %v2458 = vmax.f32 %v2185, 0.0
      %v2459 = vmax.f32 %v2188, 0.0
      %v2460 = vmax.f32 %v2190, 0.0
      %v2461 = vmax.f32 %v2193, 0.0
      %v2462 = vmax.f32 %v2195, 0.0
      %v2463 = vmax.f32 %v2198, 0.0
      %v2464 = vmax.f32 %v2200, 0.0
      %v2465 = vmax.f32 %v2203, 0.0
      %v2466 = vmax.f32 %v2205, 0.0
      %v2467 = vmax.f32 %v2208, 0.0
      %v2468 = vmax.f32 %v2210, 0.0
      %v2469 = vmax.f32 %v2213, 0.0
      %v2470 = vmax.f32 %v2215, 0.0
      %v2471 = vmax.f32 %v2218, 0.0
      %v2472 = vmax.f32 %v2220, 0.0
      %v2473 = vmax.f32 %v2223, 0.0
      %v2474 = vmax.f32 %v2225, 0.0
      %v2475 = vmax.f32 %v2228, 0.0
      %v2476 = vmax.f32 %v2230, 0.0
      %v2477 = vmax.f32 %v2233, 0.0
      %v2478 = vmax.f32 %v2235, 0.0
      %v2479 = vmax.f32 %v2238, 0.0
      %v2480 = vmax.f32 %v2240, 0.0
      %v2481 = vmax.f32 %v2243, 0.0
      %v2482 = vmax.f32 %v2245, 0.0
      %v2483 = vmax.f32 %v2248, 0.0
      %v2484 = vmax.f32 %v2250, 0.0
      %v2485 = vmax.f32 %v2253, 0.0
      %v2486 = vmax.f32 %v2255, 0.0
      %v2487 = vmax.f32 %v2258, 0.0
      %v2488 = vmax.f32 %v2260, 0.0
      %v2489 = vmax.f32 %v2263, 0.0
      %v2490 = vmax.f32 %v2265, 0.0
      %v2491 = vmax.f32 %v2268, 0.0
      %v2492 = vmax.f32 %v2270, 0.0
      %v2493 = vmax.f32 %v2273, 0.0
      %v2494 = vmax.f32 %v2275, 0.0
      %v2495 = vmax.f32 %v2278, 0.0
      %v2496 = vmax.f32 %v2280, 0.0
      %v2497 = vmax.f32 %v2283, 0.0
      %v2498 = vmax.f32 %v2285, 0.0
      %v2499 = vmax.f32 %v2288, 0.0
      %v2500 = vmax.f32 %v2290, 0.0
      %v2501 = vmax.f32 %v2293, 0.0
      %v2502 = vmax.f32 %v2295, 0.0
      %v2503 = vmax.f32 %v2298, 0.0
      %v2504 = vmax.f32 %v2300, 0.0
      %v2505 = vmax.f32 %v2303, 0.0
      %v2506 = vmax.f32 %v2305, 0.0
      %v2507 = vmax.f32 %v2308, 0.0
      %v2508 = vmax.f32 %v2310, 0.0
      %v2509 = vmax.f32 %v2313, 0.0
      %v2510 = vmax.f32 %v2315, 0.0
      %v2511 = vmax.f32 %v2318, 0.0
      %v2512 = vmax.f32 %v2320, 0.0
      %v2513 = vmax.f32 %v2323, 0.0
      %v2514 = vmax.f32 %v2325, 0.0
      %v2515 = vmax.f32 %v2328, 0.0
      %v2516 = vmax.f32 %v2330, 0.0
      %v2517 = vmax.f32 %v2333, 0.0
      %v2518 = vmax.f32 %v2335, 0.0
      %v2519 = vmax.f32 %v2338, 0.0
      %v2520 = vmax.f32 %v2340, 0.0
      %v2521 = vmax.f32 %v2343, 0.0
      %v2522 = vmax.f32 %v2345, 0.0
      %v2523 = vmax.f32 %v2348, 0.0
      %v2524 = vmax.f32 %v2350, 0.0
      %v2525 = vmax.f32 %v2353, 0.0
      %v2526 = vmax.f32 %v2355, 0.0
      %v2527 = vmax.f32 %v2358, 0.0
      %v2528 = vmax.f32 %v2360, 0.0
      %v2529 = vmax.f32 %v2363, 0.0
      %v2530 = vmax.f32 %v2365, 0.0
      %v2531 = vmax.f32 %v2368, 0.0
      %v2532 = vmax.f32 %v2370, 0.0
      %v2533 = vmax.f32 %v2373, 0.0
      %v2534 = vmax.f32 %v2375, 0.0
      %v2535 = vmax.f32 %v2378, 0.0
      %v2536 = vmax.f32 %v2380, 0.0
      %v2537 = vmax.f32 %v2383, 0.0
      %v2538 = vmax.f32 %v2385, 0.0
      %v2539 = vmax.f32 %v2388, 0.0
      %v2540 = vmax.f32 %v2390, 0.0
      %v2541 = vmax.f32 %v2393, 0.0
      %v2542 = vmax.f32 %v2395, 0.0
      %v2543 = vmax.f32 %v2398, 0.0
      %v2544 = vmax.f32 %v2400, 0.0
      %v2545 = vmax.f32 %v2403, 0.0
      %v2546 = vmax.f32 %v2405, 0.0
      %v2547 = vmax.f32 %v2408, 0.0
      %v2548 = vmax.f32 %v2410, 0.0
      %v2549 = vmax.f32 %v2413, 0.0
      %v2550 = vmax.f32 %v2415, 0.0
      %v2551 = vmax.f32 %v2418, 0.0
      %v2552 = vmax.f32 %v2420, 0.0
      %v2553 = vmax.f32 %v2423, 0.0
      %v2554 = vmax.f32 %v2425, 0.0
      %vm2555 = vcmask 130048
      %v2556 = vsel %vm2555, %v2427, -inf
      %2557 = vmax.xlane.f32.xlu0 %v2556
      %v2558 = vpop.xlane.xlu0 %2557
      %v2559 = vsel %vm2555, %v2428, -inf
      %2560 = vmax.xlane.f32.xlu0 %v2559
      %v2561 = vpop.xlane.xlu0 %2560
      %v2562 = vsel %vm2555, %v2429, -inf
      %2563 = vmax.xlane.f32.xlu0 %v2562
      %v2564 = vpop.xlane.xlu0 %2563
      %v2565 = vsel %vm2555, %v2430, -inf
      %2566 = vmax.xlane.f32.xlu0 %v2565
      %v2567 = vpop.xlane.xlu0 %2566
      %v2568 = vsel %vm2555, %v2431, -inf
      %2569 = vmax.xlane.f32.xlu0 %v2568
      %v2570 = vpop.xlane.xlu0 %2569
      %v2571 = vsel %vm2555, %v2432, -inf
      %2572 = vmax.xlane.f32.xlu0 %v2571
      %v2573 = vpop.xlane.xlu0 %2572
      %v2574 = vsel %vm2555, %v2433, -inf
      %2575 = vmax.xlane.f32.xlu0 %v2574
      %v2576 = vpop.xlane.xlu0 %2575
      %v2577 = vsel %vm2555, %v2434, -inf
      %2578 = vmax.xlane.f32.xlu0 %v2577
      %v2579 = vpop.xlane.xlu0 %2578
      %v2580 = vsel %vm2555, %v2435, -inf
      %2581 = vmax.xlane.f32.xlu0 %v2580
      %v2582 = vpop.xlane.xlu0 %2581
      %v2583 = vsel %vm2555, %v2436, -inf
      %2584 = vmax.xlane.f32.xlu0 %v2583
      %v2585 = vpop.xlane.xlu0 %2584
      %v2586 = vsel %vm2555, %v2437, -inf
      %2587 = vmax.xlane.f32.xlu0 %v2586
      %v2588 = vpop.xlane.xlu0 %2587
      %v2589 = vsel %vm2555, %v2438, -inf
      %2590 = vmax.xlane.f32.xlu0 %v2589
      %v2591 = vpop.xlane.xlu0 %2590
      %v2592 = vsel %vm2555, %v2439, -inf
      %2593 = vmax.xlane.f32.xlu0 %v2592
      %v2594 = vpop.xlane.xlu0 %2593
      %v2595 = vsel %vm2555, %v2440, -inf
      %2596 = vmax.xlane.f32.xlu0 %v2595
      %v2597 = vpop.xlane.xlu0 %2596
      %v2598 = vsel %vm2555, %v2441, -inf
      %2599 = vmax.xlane.f32.xlu0 %v2598
      %v2600 = vpop.xlane.xlu0 %2599
      %v2601 = vsel %vm2555, %v2442, -inf
      %2602 = vmax.xlane.f32.xlu0 %v2601
      %v2603 = vpop.xlane.xlu0 %2602
      %v2604 = vsel %vm2555, %v2443, -inf
      %2605 = vmax.xlane.f32.xlu0 %v2604
      %v2606 = vpop.xlane.xlu0 %2605
      %v2607 = vsel %vm2555, %v2444, -inf
      %2608 = vmax.xlane.f32.xlu0 %v2607
      %v2609 = vpop.xlane.xlu0 %2608
      %v2610 = vsel %vm2555, %v2445, -inf
      %2611 = vmax.xlane.f32.xlu0 %v2610
      %v2612 = vpop.xlane.xlu0 %2611
      %v2613 = vsel %vm2555, %v2446, -inf
      %2614 = vmax.xlane.f32.xlu0 %v2613
      %v2615 = vpop.xlane.xlu0 %2614
      %v2616 = vsel %vm2555, %v2447, -inf
      %2617 = vmax.xlane.f32.xlu0 %v2616
      %v2618 = vpop.xlane.xlu0 %2617
      %v2619 = vsel %vm2555, %v2448, -inf
      %2620 = vmax.xlane.f32.xlu0 %v2619
      %v2621 = vpop.xlane.xlu0 %2620
      %v2622 = vsel %vm2555, %v2449, -inf
      %2623 = vmax.xlane.f32.xlu0 %v2622
      %v2624 = vpop.xlane.xlu0 %2623
      %v2625 = vsel %vm2555, %v2450, -inf
      %2626 = vmax.xlane.f32.xlu0 %v2625
      %v2627 = vpop.xlane.xlu0 %2626
      %v2628 = vsel %vm2555, %v2451, -inf
      %2629 = vmax.xlane.f32.xlu0 %v2628
      %v2630 = vpop.xlane.xlu0 %2629
      %v2631 = vsel %vm2555, %v2452, -inf
      %2632 = vmax.xlane.f32.xlu0 %v2631
      %v2633 = vpop.xlane.xlu0 %2632
      %v2634 = vsel %vm2555, %v2453, -inf
      %2635 = vmax.xlane.f32.xlu0 %v2634
      %v2636 = vpop.xlane.xlu0 %2635
      %v2637 = vsel %vm2555, %v2454, -inf
      %2638 = vmax.xlane.f32.xlu0 %v2637
      %v2639 = vpop.xlane.xlu0 %2638
      %v2640 = vsel %vm2555, %v2455, -inf
      %2641 = vmax.xlane.f32.xlu0 %v2640
      %v2642 = vpop.xlane.xlu0 %2641
      %v2643 = vsel %vm2555, %v2456, -inf
      %2644 = vmax.xlane.f32.xlu0 %v2643
      %v2645 = vpop.xlane.xlu0 %2644
      %v2646 = vsel %vm2555, %v2457, -inf
      %2647 = vmax.xlane.f32.xlu0 %v2646
      %v2648 = vpop.xlane.xlu0 %2647
      %v2649 = vsel %vm2555, %v2458, -inf
      %2650 = vmax.xlane.f32.xlu0 %v2649
      %v2651 = vpop.xlane.xlu0 %2650
      %v2652 = vsel %vm2555, %v2459, -inf
      %2653 = vmax.xlane.f32.xlu0 %v2652
      %v2654 = vpop.xlane.xlu0 %2653
      %v2655 = vsel %vm2555, %v2460, -inf
      %2656 = vmax.xlane.f32.xlu0 %v2655
      %v2657 = vpop.xlane.xlu0 %2656
      %v2658 = vsel %vm2555, %v2461, -inf
      %2659 = vmax.xlane.f32.xlu0 %v2658
      %v2660 = vpop.xlane.xlu0 %2659
      %v2661 = vsel %vm2555, %v2462, -inf
      %2662 = vmax.xlane.f32.xlu0 %v2661
      %v2663 = vpop.xlane.xlu0 %2662
      %v2664 = vsel %vm2555, %v2463, -inf
      %2665 = vmax.xlane.f32.xlu0 %v2664
      %v2666 = vpop.xlane.xlu0 %2665
      %v2667 = vsel %vm2555, %v2464, -inf
      %2668 = vmax.xlane.f32.xlu0 %v2667
      %v2669 = vpop.xlane.xlu0 %2668
      %v2670 = vsel %vm2555, %v2465, -inf
      %2671 = vmax.xlane.f32.xlu0 %v2670
      %v2672 = vpop.xlane.xlu0 %2671
      %v2673 = vsel %vm2555, %v2466, -inf
      %2674 = vmax.xlane.f32.xlu0 %v2673
      %v2675 = vpop.xlane.xlu0 %2674
      %v2676 = vsel %vm2555, %v2467, -inf
      %2677 = vmax.xlane.f32.xlu0 %v2676
      %v2678 = vpop.xlane.xlu0 %2677
      %v2679 = vsel %vm2555, %v2468, -inf
      %2680 = vmax.xlane.f32.xlu0 %v2679
      %v2681 = vpop.xlane.xlu0 %2680
      %v2682 = vsel %vm2555, %v2469, -inf
      %2683 = vmax.xlane.f32.xlu0 %v2682
      %v2684 = vpop.xlane.xlu0 %2683
      %v2685 = vsel %vm2555, %v2470, -inf
      %2686 = vmax.xlane.f32.xlu0 %v2685
      %v2687 = vpop.xlane.xlu0 %2686
      %v2688 = vsel %vm2555, %v2471, -inf
      %2689 = vmax.xlane.f32.xlu0 %v2688
      %v2690 = vpop.xlane.xlu0 %2689
      %v2691 = vsel %vm2555, %v2472, -inf
      %2692 = vmax.xlane.f32.xlu0 %v2691
      %v2693 = vpop.xlane.xlu0 %2692
      %v2694 = vsel %vm2555, %v2473, -inf
      %2695 = vmax.xlane.f32.xlu0 %v2694
      %v2696 = vpop.xlane.xlu0 %2695
      %v2697 = vsel %vm2555, %v2474, -inf
      %2698 = vmax.xlane.f32.xlu0 %v2697
      %v2699 = vpop.xlane.xlu0 %2698
      %v2700 = vsel %vm2555, %v2475, -inf
      %2701 = vmax.xlane.f32.xlu0 %v2700
      %v2702 = vpop.xlane.xlu0 %2701
      %v2703 = vsel %vm2555, %v2476, -inf
      %2704 = vmax.xlane.f32.xlu0 %v2703
      %v2705 = vpop.xlane.xlu0 %2704
      %v2706 = vsel %vm2555, %v2477, -inf
      %2707 = vmax.xlane.f32.xlu0 %v2706
      %v2708 = vpop.xlane.xlu0 %2707
      %v2709 = vsel %vm2555, %v2478, -inf
      %2710 = vmax.xlane.f32.xlu0 %v2709
      %v2711 = vpop.xlane.xlu0 %2710
      %v2712 = vsel %vm2555, %v2479, -inf
      %2713 = vmax.xlane.f32.xlu0 %v2712
      %v2714 = vpop.xlane.xlu0 %2713
      %v2715 = vsel %vm2555, %v2480, -inf
      %2716 = vmax.xlane.f32.xlu0 %v2715
      %v2717 = vpop.xlane.xlu0 %2716
      %v2718 = vsel %vm2555, %v2481, -inf
      %2719 = vmax.xlane.f32.xlu0 %v2718
      %v2720 = vpop.xlane.xlu0 %2719
      %v2721 = vsel %vm2555, %v2482, -inf
      %2722 = vmax.xlane.f32.xlu0 %v2721
      %v2723 = vpop.xlane.xlu0 %2722
      %v2724 = vsel %vm2555, %v2483, -inf
      %2725 = vmax.xlane.f32.xlu0 %v2724
      %v2726 = vpop.xlane.xlu0 %2725
      %v2727 = vsel %vm2555, %v2484, -inf
      %2728 = vmax.xlane.f32.xlu0 %v2727
      %v2729 = vpop.xlane.xlu0 %2728
      %v2730 = vsel %vm2555, %v2485, -inf
      %2731 = vmax.xlane.f32.xlu0 %v2730
      %v2732 = vpop.xlane.xlu0 %2731
      %v2733 = vsel %vm2555, %v2486, -inf
      %2734 = vmax.xlane.f32.xlu0 %v2733
      %v2735 = vpop.xlane.xlu0 %2734
      %v2736 = vsel %vm2555, %v2487, -inf
      %2737 = vmax.xlane.f32.xlu0 %v2736
      %v2738 = vpop.xlane.xlu0 %2737
      %v2739 = vsel %vm2555, %v2488, -inf
      %2740 = vmax.xlane.f32.xlu0 %v2739
      %v2741 = vpop.xlane.xlu0 %2740
      %v2742 = vsel %vm2555, %v2489, -inf
      %2743 = vmax.xlane.f32.xlu0 %v2742
      %v2744 = vpop.xlane.xlu0 %2743
      %v2745 = vsel %vm2555, %v2490, -inf
      %2746 = vmax.xlane.f32.xlu0 %v2745
      %v2747 = vpop.xlane.xlu0 %2746
      %v2748 = vsel %vm2555, %v2491, -inf
      %2749 = vmax.xlane.f32.xlu0 %v2748
      %v2750 = vpop.xlane.xlu0 %2749
      %v2751 = vsel %vm2555, %v2492, -inf
      %2752 = vmax.xlane.f32.xlu0 %v2751
      %v2753 = vpop.xlane.xlu0 %2752
      %v2754 = vsel %vm2555, %v2493, -inf
      %2755 = vmax.xlane.f32.xlu0 %v2754
      %v2756 = vpop.xlane.xlu0 %2755
      %v2757 = vsel %vm2555, %v2494, -inf
      %2758 = vmax.xlane.f32.xlu0 %v2757
      %v2759 = vpop.xlane.xlu0 %2758
      %v2760 = vsel %vm2555, %v2495, -inf
      %2761 = vmax.xlane.f32.xlu0 %v2760
      %v2762 = vpop.xlane.xlu0 %2761
      %v2763 = vsel %vm2555, %v2496, -inf
      %2764 = vmax.xlane.f32.xlu0 %v2763
      %v2765 = vpop.xlane.xlu0 %2764
      %v2766 = vsel %vm2555, %v2497, -inf
      %2767 = vmax.xlane.f32.xlu0 %v2766
      %v2768 = vpop.xlane.xlu0 %2767
      %v2769 = vsel %vm2555, %v2498, -inf
      %2770 = vmax.xlane.f32.xlu0 %v2769
      %v2771 = vpop.xlane.xlu0 %2770
      %v2772 = vsel %vm2555, %v2499, -inf
      %2773 = vmax.xlane.f32.xlu0 %v2772
      %v2774 = vpop.xlane.xlu0 %2773
      %v2775 = vsel %vm2555, %v2500, -inf
      %2776 = vmax.xlane.f32.xlu0 %v2775
      %v2777 = vpop.xlane.xlu0 %2776
      %v2778 = vsel %vm2555, %v2501, -inf
      %2779 = vmax.xlane.f32.xlu0 %v2778
      %v2780 = vpop.xlane.xlu0 %2779
      %v2781 = vsel %vm2555, %v2502, -inf
      %2782 = vmax.xlane.f32.xlu0 %v2781
      %v2783 = vpop.xlane.xlu0 %2782
      %v2784 = vsel %vm2555, %v2503, -inf
      %2785 = vmax.xlane.f32.xlu0 %v2784
      %v2786 = vpop.xlane.xlu0 %2785
      %v2787 = vsel %vm2555, %v2504, -inf
      %2788 = vmax.xlane.f32.xlu0 %v2787
      %v2789 = vpop.xlane.xlu0 %2788
      %v2790 = vsel %vm2555, %v2505, -inf
      %2791 = vmax.xlane.f32.xlu0 %v2790
      %v2792 = vpop.xlane.xlu0 %2791
      %v2793 = vsel %vm2555, %v2506, -inf
      %2794 = vmax.xlane.f32.xlu0 %v2793
      %v2795 = vpop.xlane.xlu0 %2794
      %v2796 = vsel %vm2555, %v2507, -inf
      %2797 = vmax.xlane.f32.xlu0 %v2796
      %v2798 = vpop.xlane.xlu0 %2797
      %v2799 = vsel %vm2555, %v2508, -inf
      %2800 = vmax.xlane.f32.xlu0 %v2799
      %v2801 = vpop.xlane.xlu0 %2800
      %v2802 = vsel %vm2555, %v2509, -inf
      %2803 = vmax.xlane.f32.xlu0 %v2802
      %v2804 = vpop.xlane.xlu0 %2803
      %v2805 = vsel %vm2555, %v2510, -inf
      %2806 = vmax.xlane.f32.xlu0 %v2805
      %v2807 = vpop.xlane.xlu0 %2806
      %v2808 = vsel %vm2555, %v2511, -inf
      %2809 = vmax.xlane.f32.xlu0 %v2808
      %v2810 = vpop.xlane.xlu0 %2809
      %v2811 = vsel %vm2555, %v2512, -inf
      %2812 = vmax.xlane.f32.xlu0 %v2811
      %v2813 = vpop.xlane.xlu0 %2812
      %v2814 = vsel %vm2555, %v2513, -inf
      %2815 = vmax.xlane.f32.xlu0 %v2814
      %v2816 = vpop.xlane.xlu0 %2815
      %v2817 = vsel %vm2555, %v2514, -inf
      %2818 = vmax.xlane.f32.xlu0 %v2817
      %v2819 = vpop.xlane.xlu0 %2818
      %v2820 = vsel %vm2555, %v2515, -inf
      %2821 = vmax.xlane.f32.xlu0 %v2820
      %v2822 = vpop.xlane.xlu0 %2821
      %v2823 = vsel %vm2555, %v2516, -inf
      %2824 = vmax.xlane.f32.xlu0 %v2823
      %v2825 = vpop.xlane.xlu0 %2824
      %v2826 = vsel %vm2555, %v2517, -inf
      %2827 = vmax.xlane.f32.xlu0 %v2826
      %v2828 = vpop.xlane.xlu0 %2827
      %v2829 = vsel %vm2555, %v2518, -inf
      %2830 = vmax.xlane.f32.xlu0 %v2829
      %v2831 = vpop.xlane.xlu0 %2830
      %v2832 = vsel %vm2555, %v2519, -inf
      %2833 = vmax.xlane.f32.xlu0 %v2832
      %v2834 = vpop.xlane.xlu0 %2833
      %v2835 = vsel %vm2555, %v2520, -inf
      %2836 = vmax.xlane.f32.xlu0 %v2835
      %v2837 = vpop.xlane.xlu0 %2836
      %v2838 = vsel %vm2555, %v2521, -inf
      %2839 = vmax.xlane.f32.xlu0 %v2838
      %v2840 = vpop.xlane.xlu0 %2839
      %v2841 = vsel %vm2555, %v2522, -inf
      %2842 = vmax.xlane.f32.xlu0 %v2841
      %v2843 = vpop.xlane.xlu0 %2842
      %v2844 = vsel %vm2555, %v2523, -inf
      %2845 = vmax.xlane.f32.xlu0 %v2844
      %v2846 = vpop.xlane.xlu0 %2845
      %v2847 = vsel %vm2555, %v2524, -inf
      %2848 = vmax.xlane.f32.xlu0 %v2847
      %v2849 = vpop.xlane.xlu0 %2848
      %v2850 = vsel %vm2555, %v2525, -inf
      %2851 = vmax.xlane.f32.xlu0 %v2850
      %v2852 = vpop.xlane.xlu0 %2851
      %v2853 = vsel %vm2555, %v2526, -inf
      %2854 = vmax.xlane.f32.xlu0 %v2853
      %v2855 = vpop.xlane.xlu0 %2854
      %v2856 = vsel %vm2555, %v2527, -inf
      %2857 = vmax.xlane.f32.xlu0 %v2856
      %v2858 = vpop.xlane.xlu0 %2857
      %v2859 = vsel %vm2555, %v2528, -inf
      %2860 = vmax.xlane.f32.xlu0 %v2859
      %v2861 = vpop.xlane.xlu0 %2860
      %v2862 = vsel %vm2555, %v2529, -inf
      %2863 = vmax.xlane.f32.xlu0 %v2862
      %v2864 = vpop.xlane.xlu0 %2863
      %v2865 = vsel %vm2555, %v2530, -inf
      %2866 = vmax.xlane.f32.xlu0 %v2865
      %v2867 = vpop.xlane.xlu0 %2866
      %v2868 = vsel %vm2555, %v2531, -inf
      %2869 = vmax.xlane.f32.xlu0 %v2868
      %v2870 = vpop.xlane.xlu0 %2869
      %v2871 = vsel %vm2555, %v2532, -inf
      %2872 = vmax.xlane.f32.xlu0 %v2871
      %v2873 = vpop.xlane.xlu0 %2872
      %v2874 = vsel %vm2555, %v2533, -inf
      %2875 = vmax.xlane.f32.xlu0 %v2874
      %v2876 = vpop.xlane.xlu0 %2875
      %v2877 = vsel %vm2555, %v2534, -inf
      %2878 = vmax.xlane.f32.xlu0 %v2877
      %v2879 = vpop.xlane.xlu0 %2878
      %v2880 = vsel %vm2555, %v2535, -inf
      %2881 = vmax.xlane.f32.xlu0 %v2880
      %v2882 = vpop.xlane.xlu0 %2881
      %v2883 = vsel %vm2555, %v2536, -inf
      %2884 = vmax.xlane.f32.xlu0 %v2883
      %v2885 = vpop.xlane.xlu0 %2884
      %v2886 = vsel %vm2555, %v2537, -inf
      %2887 = vmax.xlane.f32.xlu0 %v2886
      %v2888 = vpop.xlane.xlu0 %2887
      %v2889 = vsel %vm2555, %v2538, -inf
      %2890 = vmax.xlane.f32.xlu0 %v2889
      %v2891 = vpop.xlane.xlu0 %2890
      %v2892 = vsel %vm2555, %v2539, -inf
      %2893 = vmax.xlane.f32.xlu0 %v2892
      %v2894 = vpop.xlane.xlu0 %2893
      %v2895 = vsel %vm2555, %v2540, -inf
      %2896 = vmax.xlane.f32.xlu0 %v2895
      %v2897 = vpop.xlane.xlu0 %2896
      %v2898 = vsel %vm2555, %v2541, -inf
      %2899 = vmax.xlane.f32.xlu0 %v2898
      %v2900 = vpop.xlane.xlu0 %2899
      %v2901 = vsel %vm2555, %v2542, -inf
      %2902 = vmax.xlane.f32.xlu0 %v2901
      %v2903 = vpop.xlane.xlu0 %2902
      %v2904 = vsel %vm2555, %v2543, -inf
      %2905 = vmax.xlane.f32.xlu0 %v2904
      %v2906 = vpop.xlane.xlu0 %2905
      %v2907 = vsel %vm2555, %v2544, -inf
      %2908 = vmax.xlane.f32.xlu0 %v2907
      %v2909 = vpop.xlane.xlu0 %2908
      %v2910 = vsel %vm2555, %v2545, -inf
      %2911 = vmax.xlane.f32.xlu0 %v2910
      %v2912 = vpop.xlane.xlu0 %2911
      %v2913 = vsel %vm2555, %v2546, -inf
      %2914 = vmax.xlane.f32.xlu0 %v2913
      %v2915 = vpop.xlane.xlu0 %2914
      %v2916 = vsel %vm2555, %v2547, -inf
      %2917 = vmax.xlane.f32.xlu0 %v2916
      %v2918 = vpop.xlane.xlu0 %2917
      %v2919 = vsel %vm2555, %v2548, -inf
      %2920 = vmax.xlane.f32.xlu0 %v2919
      %v2921 = vpop.xlane.xlu0 %2920
      %v2922 = vsel %vm2555, %v2549, -inf
      %2923 = vmax.xlane.f32.xlu0 %v2922
      %v2924 = vpop.xlane.xlu0 %2923
      %v2925 = vsel %vm2555, %v2550, -inf
      %2926 = vmax.xlane.f32.xlu0 %v2925
      %v2927 = vpop.xlane.xlu0 %2926
      %v2928 = vsel %vm2555, %v2551, -inf
      %2929 = vmax.xlane.f32.xlu0 %v2928
      %v2930 = vpop.xlane.xlu0 %2929
      %v2931 = vsel %vm2555, %v2552, -inf
      %2932 = vmax.xlane.f32.xlu0 %v2931
      %v2933 = vpop.xlane.xlu0 %2932
      %v2934 = vsel %vm2555, %v2553, -inf
      %2935 = vmax.xlane.f32.xlu0 %v2934
      %v2936 = vpop.xlane.xlu0 %2935
      %v2937 = vsel %vm2555, %v2554, -inf
      %2938 = vmax.xlane.f32.xlu0 %v2937
      %v2939 = vpop.xlane.xlu0 %2938
      %v2940 = vld [vmem:[%s298] sm:$0xff]
      %v2941 = vld [vmem:[%s298 + $0x8] sm:$0xff]
      %v2942 = vld [vmem:[%s298 + $0x10] sm:$0xff]
      %v2943 = vld [vmem:[%s298 + $0x18] sm:$0xff]
      %v2944 = vld [vmem:[%s298 + $0x20] sm:$0xff]
      %v2945 = vld [vmem:[%s298 + $0x28] sm:$0xff]
      %v2946 = vld [vmem:[%s298 + $0x30] sm:$0xff]
      %v2947 = vld [vmem:[%s298 + $0x38] sm:$0xff]
      %v2948 = vld [vmem:[%s298 + $0x40] sm:$0xff]
      %v2949 = vld [vmem:[%s298 + $0x48] sm:$0xff]
      %v2950 = vld [vmem:[%s298 + $0x50] sm:$0xff]
      %v2951 = vld [vmem:[%s298 + $0x58] sm:$0xff]
      %v2952 = vld [vmem:[%s298 + $0x60] sm:$0xff]
      %v2953 = vld [vmem:[%s298 + $0x68] sm:$0xff]
      %v2954 = vld [vmem:[%s298 + $0x70] sm:$0xff]
      %v2955 = vld [vmem:[%s298 + $0x78] sm:$0xff]
      %v2956 = vld [vmem:[%s298 + $0x80] sm:$0xff]
      %v2957 = vld [vmem:[%s298 + $0x88] sm:$0xff]
      %v2958 = vld [vmem:[%s298 + $0x90] sm:$0xff]
      %v2959 = vld [vmem:[%s298 + $0x98] sm:$0xff]
      %v2960 = vld [vmem:[%s298 + $0xa0] sm:$0xff]
      %v2961 = vld [vmem:[%s298 + $0xa8] sm:$0xff]
      %v2962 = vld [vmem:[%s298 + $0xb0] sm:$0xff]
      %v2963 = vld [vmem:[%s298 + $0xb8] sm:$0xff]
      %v2964 = vld [vmem:[%s298 + $0xc0] sm:$0xff]
      %v2965 = vld [vmem:[%s298 + $0xc8] sm:$0xff]
      %v2966 = vld [vmem:[%s298 + $0xd0] sm:$0xff]
      %v2967 = vld [vmem:[%s298 + $0xd8] sm:$0xff]
      %v2968 = vld [vmem:[%s298 + $0xe0] sm:$0xff]
      %v2969 = vld [vmem:[%s298 + $0xe8] sm:$0xff]
      %v2970 = vld [vmem:[%s298 + $0xf0] sm:$0xff]
      %v2971 = vld [vmem:[%s298 + $0xf8] sm:$0xff]
      %v2972 = vld [vmem:[%s298 + $0x100] sm:$0xff]
      %v2973 = vld [vmem:[%s298 + $0x108] sm:$0xff]
      %v2974 = vld [vmem:[%s298 + $0x110] sm:$0xff]
      %v2975 = vld [vmem:[%s298 + $0x118] sm:$0xff]
      %v2976 = vld [vmem:[%s298 + $0x120] sm:$0xff]
      %v2977 = vld [vmem:[%s298 + $0x128] sm:$0xff]
      %v2978 = vld [vmem:[%s298 + $0x130] sm:$0xff]
      %v2979 = vld [vmem:[%s298 + $0x138] sm:$0xff]
      %v2980 = vld [vmem:[%s298 + $0x140] sm:$0xff]
      %v2981 = vld [vmem:[%s298 + $0x148] sm:$0xff]
      %v2982 = vld [vmem:[%s298 + $0x150] sm:$0xff]
      %v2983 = vld [vmem:[%s298 + $0x158] sm:$0xff]
      %v2984 = vld [vmem:[%s298 + $0x160] sm:$0xff]
      %v2985 = vld [vmem:[%s298 + $0x168] sm:$0xff]
      %v2986 = vld [vmem:[%s298 + $0x170] sm:$0xff]
      %v2987 = vld [vmem:[%s298 + $0x178] sm:$0xff]
      %v2988 = vld [vmem:[%s298 + $0x180] sm:$0xff]
      %v2989 = vld [vmem:[%s298 + $0x188] sm:$0xff]
      %v2990 = vld [vmem:[%s298 + $0x190] sm:$0xff]
      %v2991 = vld [vmem:[%s298 + $0x198] sm:$0xff]
      %v2992 = vld [vmem:[%s298 + $0x1a0] sm:$0xff]
      %v2993 = vld [vmem:[%s298 + $0x1a8] sm:$0xff]
      %v2994 = vld [vmem:[%s298 + $0x1b0] sm:$0xff]
      %v2995 = vld [vmem:[%s298 + $0x1b8] sm:$0xff]
      %v2996 = vld [vmem:[%s298 + $0x1c0] sm:$0xff]
      %v2997 = vld [vmem:[%s298 + $0x1c8] sm:$0xff]
      %v2998 = vld [vmem:[%s298 + $0x1d0] sm:$0xff]
      %v2999 = vld [vmem:[%s298 + $0x1d8] sm:$0xff]
      %v3000 = vld [vmem:[%s298 + $0x1e0] sm:$0xff]
      %v3001 = vld [vmem:[%s298 + $0x1e8] sm:$0xff]
      %v3002 = vld [vmem:[%s298 + $0x1f0] sm:$0xff]
      %v3003 = vld [vmem:[%s298 + $0x1f8] sm:$0xff]
      %v3004 = vld [vmem:[%s298 + $0x200] sm:$0xff]
      %v3005 = vld [vmem:[%s298 + $0x208] sm:$0xff]
      %v3006 = vld [vmem:[%s298 + $0x210] sm:$0xff]
      %v3007 = vld [vmem:[%s298 + $0x218] sm:$0xff]
      %v3008 = vld [vmem:[%s298 + $0x220] sm:$0xff]
      %v3009 = vld [vmem:[%s298 + $0x228] sm:$0xff]
      %v3010 = vld [vmem:[%s298 + $0x230] sm:$0xff]
      %v3011 = vld [vmem:[%s298 + $0x238] sm:$0xff]
      %v3012 = vld [vmem:[%s298 + $0x240] sm:$0xff]
      %v3013 = vld [vmem:[%s298 + $0x248] sm:$0xff]
      %v3014 = vld [vmem:[%s298 + $0x250] sm:$0xff]
      %v3015 = vld [vmem:[%s298 + $0x258] sm:$0xff]
      %v3016 = vld [vmem:[%s298 + $0x260] sm:$0xff]
      %v3017 = vld [vmem:[%s298 + $0x268] sm:$0xff]
      %v3018 = vld [vmem:[%s298 + $0x270] sm:$0xff]
      %v3019 = vld [vmem:[%s298 + $0x278] sm:$0xff]
      %v3020 = vld [vmem:[%s298 + $0x280] sm:$0xff]
      %v3021 = vld [vmem:[%s298 + $0x288] sm:$0xff]
      %v3022 = vld [vmem:[%s298 + $0x290] sm:$0xff]
      %v3023 = vld [vmem:[%s298 + $0x298] sm:$0xff]
      %v3024 = vld [vmem:[%s298 + $0x2a0] sm:$0xff]
      %v3025 = vld [vmem:[%s298 + $0x2a8] sm:$0xff]
      %v3026 = vld [vmem:[%s298 + $0x2b0] sm:$0xff]
      %v3027 = vld [vmem:[%s298 + $0x2b8] sm:$0xff]
      %v3028 = vld [vmem:[%s298 + $0x2c0] sm:$0xff]
      %v3029 = vld [vmem:[%s298 + $0x2c8] sm:$0xff]
      %v3030 = vld [vmem:[%s298 + $0x2d0] sm:$0xff]
      %v3031 = vld [vmem:[%s298 + $0x2d8] sm:$0xff]
      %v3032 = vld [vmem:[%s298 + $0x2e0] sm:$0xff]
      %v3033 = vld [vmem:[%s298 + $0x2e8] sm:$0xff]
      %v3034 = vld [vmem:[%s298 + $0x2f0] sm:$0xff]
      %v3035 = vld [vmem:[%s298 + $0x2f8] sm:$0xff]
      %v3036 = vld [vmem:[%s298 + $0x300] sm:$0xff]
      %v3037 = vld [vmem:[%s298 + $0x308] sm:$0xff]
      %v3038 = vld [vmem:[%s298 + $0x310] sm:$0xff]
      %v3039 = vld [vmem:[%s298 + $0x318] sm:$0xff]
      %v3040 = vld [vmem:[%s298 + $0x320] sm:$0xff]
      %v3041 = vld [vmem:[%s298 + $0x328] sm:$0xff]
      %v3042 = vld [vmem:[%s298 + $0x330] sm:$0xff]
      %v3043 = vld [vmem:[%s298 + $0x338] sm:$0xff]
      %v3044 = vld [vmem:[%s298 + $0x340] sm:$0xff]
      %v3045 = vld [vmem:[%s298 + $0x348] sm:$0xff]
      %v3046 = vld [vmem:[%s298 + $0x350] sm:$0xff]
      %v3047 = vld [vmem:[%s298 + $0x358] sm:$0xff]
      %v3048 = vld [vmem:[%s298 + $0x360] sm:$0xff]
      %v3049 = vld [vmem:[%s298 + $0x368] sm:$0xff]
      %v3050 = vld [vmem:[%s298 + $0x370] sm:$0xff]
      %v3051 = vld [vmem:[%s298 + $0x378] sm:$0xff]
      %v3052 = vld [vmem:[%s298 + $0x380] sm:$0xff]
      %v3053 = vld [vmem:[%s298 + $0x388] sm:$0xff]
      %v3054 = vld [vmem:[%s298 + $0x390] sm:$0xff]
      %v3055 = vld [vmem:[%s298 + $0x398] sm:$0xff]
      %v3056 = vld [vmem:[%s298 + $0x3a0] sm:$0xff]
      %v3057 = vld [vmem:[%s298 + $0x3a8] sm:$0xff]
      %v3058 = vld [vmem:[%s298 + $0x3b0] sm:$0xff]
      %v3059 = vld [vmem:[%s298 + $0x3b8] sm:$0xff]
      %v3060 = vld [vmem:[%s298 + $0x3c0] sm:$0xff]
      %v3061 = vld [vmem:[%s298 + $0x3c8] sm:$0xff]
      %v3062 = vld [vmem:[%s298 + $0x3d0] sm:$0xff]
      %v3063 = vld [vmem:[%s298 + $0x3d8] sm:$0xff]
      %v3064 = vld [vmem:[%s298 + $0x3e0] sm:$0xff]
      %v3065 = vld [vmem:[%s298 + $0x3e8] sm:$0xff]
      %v3066 = vld [vmem:[%s298 + $0x3f0] sm:$0xff]
      %v3067 = vld [vmem:[%s298 + $0x3f8] sm:$0xff]
      %v3068 = vmax.f32 %v2940, %v2558
      %v3069 = vmax.f32 %v2941, %v2561
      %v3070 = vmax.f32 %v2942, %v2564
      %v3071 = vmax.f32 %v2943, %v2567
      %v3072 = vmax.f32 %v2944, %v2570
      %v3073 = vmax.f32 %v2945, %v2573
      %v3074 = vmax.f32 %v2946, %v2576
      %v3075 = vmax.f32 %v2947, %v2579
      %v3076 = vmax.f32 %v2948, %v2582
      %v3077 = vmax.f32 %v2949, %v2585
      %v3078 = vmax.f32 %v2950, %v2588
      %v3079 = vmax.f32 %v2951, %v2591
      %v3080 = vmax.f32 %v2952, %v2594
      %v3081 = vmax.f32 %v2953, %v2597
      %v3082 = vmax.f32 %v2954, %v2600
      %v3083 = vmax.f32 %v2955, %v2603
      %v3084 = vmax.f32 %v2956, %v2606
      %v3085 = vmax.f32 %v2957, %v2609
      %v3086 = vmax.f32 %v2958, %v2612
      %v3087 = vmax.f32 %v2959, %v2615
      %v3088 = vmax.f32 %v2960, %v2618
      %v3089 = vmax.f32 %v2961, %v2621
      %v3090 = vmax.f32 %v2962, %v2624
      %v3091 = vmax.f32 %v2963, %v2627
      %v3092 = vmax.f32 %v2964, %v2630
      %v3093 = vmax.f32 %v2965, %v2633
      %v3094 = vmax.f32 %v2966, %v2636
      %v3095 = vmax.f32 %v2967, %v2639
      %v3096 = vmax.f32 %v2968, %v2642
      %v3097 = vmax.f32 %v2969, %v2645
      %v3098 = vmax.f32 %v2970, %v2648
      %v3099 = vmax.f32 %v2971, %v2651
      %v3100 = vmax.f32 %v2972, %v2654
      %v3101 = vmax.f32 %v2973, %v2657
      %v3102 = vmax.f32 %v2974, %v2660
      %v3103 = vmax.f32 %v2975, %v2663
      %v3104 = vmax.f32 %v2976, %v2666
      %v3105 = vmax.f32 %v2977, %v2669
      %v3106 = vmax.f32 %v2978, %v2672
      %v3107 = vmax.f32 %v2979, %v2675
      %v3108 = vmax.f32 %v2980, %v2678
      %v3109 = vmax.f32 %v2981, %v2681
      %v3110 = vmax.f32 %v2982, %v2684
      %v3111 = vmax.f32 %v2983, %v2687
      %v3112 = vmax.f32 %v2984, %v2690
      %v3113 = vmax.f32 %v2985, %v2693
      %v3114 = vmax.f32 %v2986, %v2696
      %v3115 = vmax.f32 %v2987, %v2699
      %v3116 = vmax.f32 %v2988, %v2702
      %v3117 = vmax.f32 %v2989, %v2705
      %v3118 = vmax.f32 %v2990, %v2708
      %v3119 = vmax.f32 %v2991, %v2711
      %v3120 = vmax.f32 %v2992, %v2714
      %v3121 = vmax.f32 %v2993, %v2717
      %v3122 = vmax.f32 %v2994, %v2720
      %v3123 = vmax.f32 %v2995, %v2723
      %v3124 = vmax.f32 %v2996, %v2726
      %v3125 = vmax.f32 %v2997, %v2729
      %v3126 = vmax.f32 %v2998, %v2732
      %v3127 = vmax.f32 %v2999, %v2735
      %v3128 = vmax.f32 %v3000, %v2738
      %v3129 = vmax.f32 %v3001, %v2741
      %v3130 = vmax.f32 %v3002, %v2744
      %v3131 = vmax.f32 %v3003, %v2747
      %v3132 = vmax.f32 %v3004, %v2750
      %v3133 = vmax.f32 %v3005, %v2753
      %v3134 = vmax.f32 %v3006, %v2756
      %v3135 = vmax.f32 %v3007, %v2759
      %v3136 = vmax.f32 %v3008, %v2762
      %v3137 = vmax.f32 %v3009, %v2765
      %v3138 = vmax.f32 %v3010, %v2768
      %v3139 = vmax.f32 %v3011, %v2771
      %v3140 = vmax.f32 %v3012, %v2774
      %v3141 = vmax.f32 %v3013, %v2777
      %v3142 = vmax.f32 %v3014, %v2780
      %v3143 = vmax.f32 %v3015, %v2783
      %v3144 = vmax.f32 %v3016, %v2786
      %v3145 = vmax.f32 %v3017, %v2789
      %v3146 = vmax.f32 %v3018, %v2792
      %v3147 = vmax.f32 %v3019, %v2795
      %v3148 = vmax.f32 %v3020, %v2798
      %v3149 = vmax.f32 %v3021, %v2801
      %v3150 = vmax.f32 %v3022, %v2804
      %v3151 = vmax.f32 %v3023, %v2807
      %v3152 = vmax.f32 %v3024, %v2810
      %v3153 = vmax.f32 %v3025, %v2813
      %v3154 = vmax.f32 %v3026, %v2816
      %v3155 = vmax.f32 %v3027, %v2819
      %v3156 = vmax.f32 %v3028, %v2822
      %v3157 = vmax.f32 %v3029, %v2825
      %v3158 = vmax.f32 %v3030, %v2828
      %v3159 = vmax.f32 %v3031, %v2831
      %v3160 = vmax.f32 %v3032, %v2834
      %v3161 = vmax.f32 %v3033, %v2837
      %v3162 = vmax.f32 %v3034, %v2840
      %v3163 = vmax.f32 %v3035, %v2843
      %v3164 = vmax.f32 %v3036, %v2846
      %v3165 = vmax.f32 %v3037, %v2849
      %v3166 = vmax.f32 %v3038, %v2852
      %v3167 = vmax.f32 %v3039, %v2855
      %v3168 = vmax.f32 %v3040, %v2858
      %v3169 = vmax.f32 %v3041, %v2861
      %v3170 = vmax.f32 %v3042, %v2864
      %v3171 = vmax.f32 %v3043, %v2867
      %v3172 = vmax.f32 %v3044, %v2870
      %v3173 = vmax.f32 %v3045, %v2873
      %v3174 = vmax.f32 %v3046, %v2876
      %v3175 = vmax.f32 %v3047, %v2879
      %v3176 = vmax.f32 %v3048, %v2882
      %v3177 = vmax.f32 %v3049, %v2885
      %v3178 = vmax.f32 %v3050, %v2888
      %v3179 = vmax.f32 %v3051, %v2891
      %v3180 = vmax.f32 %v3052, %v2894
      %v3181 = vmax.f32 %v3053, %v2897
      %v3182 = vmax.f32 %v3054, %v2900
      %v3183 = vmax.f32 %v3055, %v2903
      %v3184 = vmax.f32 %v3056, %v2906
      %v3185 = vmax.f32 %v3057, %v2909
      %v3186 = vmax.f32 %v3058, %v2912
      %v3187 = vmax.f32 %v3059, %v2915
      %v3188 = vmax.f32 %v3060, %v2918
      %v3189 = vmax.f32 %v3061, %v2921
      %v3190 = vmax.f32 %v3062, %v2924
      %v3191 = vmax.f32 %v3063, %v2927
      %v3192 = vmax.f32 %v3064, %v2930
      %v3193 = vmax.f32 %v3065, %v2933
      %v3194 = vmax.f32 %v3066, %v2936
      %v3195 = vmax.f32 %v3067, %v2939
      %vm3196 = vcmask 7168
      %3197 = vst.msk [vmem:[%s298] sm:$0xff] %vm3196, %v3068
      %3198 = vst.msk [vmem:[%s298 + $0x8] sm:$0xff] %vm3196, %v3069
      %3199 = vst.msk [vmem:[%s298 + $0x10] sm:$0xff] %vm3196, %v3070
      %3200 = vst.msk [vmem:[%s298 + $0x18] sm:$0xff] %vm3196, %v3071
      %3201 = vst.msk [vmem:[%s298 + $0x20] sm:$0xff] %vm3196, %v3072
      %3202 = vst.msk [vmem:[%s298 + $0x28] sm:$0xff] %vm3196, %v3073
      %3203 = vst.msk [vmem:[%s298 + $0x30] sm:$0xff] %vm3196, %v3074
      %3204 = vst.msk [vmem:[%s298 + $0x38] sm:$0xff] %vm3196, %v3075
      %3205 = vst.msk [vmem:[%s298 + $0x40] sm:$0xff] %vm3196, %v3076
      %3206 = vst.msk [vmem:[%s298 + $0x48] sm:$0xff] %vm3196, %v3077
      %3207 = vst.msk [vmem:[%s298 + $0x50] sm:$0xff] %vm3196, %v3078
      %3208 = vst.msk [vmem:[%s298 + $0x58] sm:$0xff] %vm3196, %v3079
      %3209 = vst.msk [vmem:[%s298 + $0x60] sm:$0xff] %vm3196, %v3080
      %3210 = vst.msk [vmem:[%s298 + $0x68] sm:$0xff] %vm3196, %v3081
      %3211 = vst.msk [vmem:[%s298 + $0x70] sm:$0xff] %vm3196, %v3082
      %3212 = vst.msk [vmem:[%s298 + $0x78] sm:$0xff] %vm3196, %v3083
      %3213 = vst.msk [vmem:[%s298 + $0x80] sm:$0xff] %vm3196, %v3084
      %3214 = vst.msk [vmem:[%s298 + $0x88] sm:$0xff] %vm3196, %v3085
      %3215 = vst.msk [vmem:[%s298 + $0x90] sm:$0xff] %vm3196, %v3086
      %3216 = vst.msk [vmem:[%s298 + $0x98] sm:$0xff] %vm3196, %v3087
      %3217 = vst.msk [vmem:[%s298 + $0xa0] sm:$0xff] %vm3196, %v3088
      %3218 = vst.msk [vmem:[%s298 + $0xa8] sm:$0xff] %vm3196, %v3089
      %3219 = vst.msk [vmem:[%s298 + $0xb0] sm:$0xff] %vm3196, %v3090
      %3220 = vst.msk [vmem:[%s298 + $0xb8] sm:$0xff] %vm3196, %v3091
      %3221 = vst.msk [vmem:[%s298 + $0xc0] sm:$0xff] %vm3196, %v3092
      %3222 = vst.msk [vmem:[%s298 + $0xc8] sm:$0xff] %vm3196, %v3093
      %3223 = vst.msk [vmem:[%s298 + $0xd0] sm:$0xff] %vm3196, %v3094
      %3224 = vst.msk [vmem:[%s298 + $0xd8] sm:$0xff] %vm3196, %v3095
      %3225 = vst.msk [vmem:[%s298 + $0xe0] sm:$0xff] %vm3196, %v3096
      %3226 = vst.msk [vmem:[%s298 + $0xe8] sm:$0xff] %vm3196, %v3097
      %3227 = vst.msk [vmem:[%s298 + $0xf0] sm:$0xff] %vm3196, %v3098
      %3228 = vst.msk [vmem:[%s298 + $0xf8] sm:$0xff] %vm3196, %v3099
      %3229 = vst.msk [vmem:[%s298 + $0x100] sm:$0xff] %vm3196, %v3100
      %3230 = vst.msk [vmem:[%s298 + $0x108] sm:$0xff] %vm3196, %v3101
      %3231 = vst.msk [vmem:[%s298 + $0x110] sm:$0xff] %vm3196, %v3102
      %3232 = vst.msk [vmem:[%s298 + $0x118] sm:$0xff] %vm3196, %v3103
      %3233 = vst.msk [vmem:[%s298 + $0x120] sm:$0xff] %vm3196, %v3104
      %3234 = vst.msk [vmem:[%s298 + $0x128] sm:$0xff] %vm3196, %v3105
      %3235 = vst.msk [vmem:[%s298 + $0x130] sm:$0xff] %vm3196, %v3106
      %3236 = vst.msk [vmem:[%s298 + $0x138] sm:$0xff] %vm3196, %v3107
      %3237 = vst.msk [vmem:[%s298 + $0x140] sm:$0xff] %vm3196, %v3108
      %3238 = vst.msk [vmem:[%s298 + $0x148] sm:$0xff] %vm3196, %v3109
      %3239 = vst.msk [vmem:[%s298 + $0x150] sm:$0xff] %vm3196, %v3110
      %3240 = vst.msk [vmem:[%s298 + $0x158] sm:$0xff] %vm3196, %v3111
      %3241 = vst.msk [vmem:[%s298 + $0x160] sm:$0xff] %vm3196, %v3112
      %3242 = vst.msk [vmem:[%s298 + $0x168] sm:$0xff] %vm3196, %v3113
      %3243 = vst.msk [vmem:[%s298 + $0x170] sm:$0xff] %vm3196, %v3114
      %3244 = vst.msk [vmem:[%s298 + $0x178] sm:$0xff] %vm3196, %v3115
      %3245 = vst.msk [vmem:[%s298 + $0x180] sm:$0xff] %vm3196, %v3116
      %3246 = vst.msk [vmem:[%s298 + $0x188] sm:$0xff] %vm3196, %v3117
      %3247 = vst.msk [vmem:[%s298 + $0x190] sm:$0xff] %vm3196, %v3118
      %3248 = vst.msk [vmem:[%s298 + $0x198] sm:$0xff] %vm3196, %v3119
      %3249 = vst.msk [vmem:[%s298 + $0x1a0] sm:$0xff] %vm3196, %v3120
      %3250 = vst.msk [vmem:[%s298 + $0x1a8] sm:$0xff] %vm3196, %v3121
      %3251 = vst.msk [vmem:[%s298 + $0x1b0] sm:$0xff] %vm3196, %v3122
      %3252 = vst.msk [vmem:[%s298 + $0x1b8] sm:$0xff] %vm3196, %v3123
      %3253 = vst.msk [vmem:[%s298 + $0x1c0] sm:$0xff] %vm3196, %v3124
      %3254 = vst.msk [vmem:[%s298 + $0x1c8] sm:$0xff] %vm3196, %v3125
      %3255 = vst.msk [vmem:[%s298 + $0x1d0] sm:$0xff] %vm3196, %v3126
      %3256 = vst.msk [vmem:[%s298 + $0x1d8] sm:$0xff] %vm3196, %v3127
      %3257 = vst.msk [vmem:[%s298 + $0x1e0] sm:$0xff] %vm3196, %v3128
      %3258 = vst.msk [vmem:[%s298 + $0x1e8] sm:$0xff] %vm3196, %v3129
      %3259 = vst.msk [vmem:[%s298 + $0x1f0] sm:$0xff] %vm3196, %v3130
      %3260 = vst.msk [vmem:[%s298 + $0x1f8] sm:$0xff] %vm3196, %v3131
      %3261 = vst.msk [vmem:[%s298 + $0x200] sm:$0xff] %vm3196, %v3132
      %3262 = vst.msk [vmem:[%s298 + $0x208] sm:$0xff] %vm3196, %v3133
      %3263 = vst.msk [vmem:[%s298 + $0x210] sm:$0xff] %vm3196, %v3134
      %3264 = vst.msk [vmem:[%s298 + $0x218] sm:$0xff] %vm3196, %v3135
      %3265 = vst.msk [vmem:[%s298 + $0x220] sm:$0xff] %vm3196, %v3136
      %3266 = vst.msk [vmem:[%s298 + $0x228] sm:$0xff] %vm3196, %v3137
      %3267 = vst.msk [vmem:[%s298 + $0x230] sm:$0xff] %vm3196, %v3138
      %3268 = vst.msk [vmem:[%s298 + $0x238] sm:$0xff] %vm3196, %v3139
      %3269 = vst.msk [vmem:[%s298 + $0x240] sm:$0xff] %vm3196, %v3140
      %3270 = vst.msk [vmem:[%s298 + $0x248] sm:$0xff] %vm3196, %v3141
      %3271 = vst.msk [vmem:[%s298 + $0x250] sm:$0xff] %vm3196, %v3142
      %3272 = vst.msk [vmem:[%s298 + $0x258] sm:$0xff] %vm3196, %v3143
      %3273 = vst.msk [vmem:[%s298 + $0x260] sm:$0xff] %vm3196, %v3144
      %3274 = vst.msk [vmem:[%s298 + $0x268] sm:$0xff] %vm3196, %v3145
      %3275 = vst.msk [vmem:[%s298 + $0x270] sm:$0xff] %vm3196, %v3146
      %3276 = vst.msk [vmem:[%s298 + $0x278] sm:$0xff] %vm3196, %v3147
      %3277 = vst.msk [vmem:[%s298 + $0x280] sm:$0xff] %vm3196, %v3148
      %3278 = vst.msk [vmem:[%s298 + $0x288] sm:$0xff] %vm3196, %v3149
      %3279 = vst.msk [vmem:[%s298 + $0x290] sm:$0xff] %vm3196, %v3150
      %3280 = vst.msk [vmem:[%s298 + $0x298] sm:$0xff] %vm3196, %v3151
      %3281 = vst.msk [vmem:[%s298 + $0x2a0] sm:$0xff] %vm3196, %v3152
      %3282 = vst.msk [vmem:[%s298 + $0x2a8] sm:$0xff] %vm3196, %v3153
      %3283 = vst.msk [vmem:[%s298 + $0x2b0] sm:$0xff] %vm3196, %v3154
      %3284 = vst.msk [vmem:[%s298 + $0x2b8] sm:$0xff] %vm3196, %v3155
      %3285 = vst.msk [vmem:[%s298 + $0x2c0] sm:$0xff] %vm3196, %v3156
      %3286 = vst.msk [vmem:[%s298 + $0x2c8] sm:$0xff] %vm3196, %v3157
      %3287 = vst.msk [vmem:[%s298 + $0x2d0] sm:$0xff] %vm3196, %v3158
      %3288 = vst.msk [vmem:[%s298 + $0x2d8] sm:$0xff] %vm3196, %v3159
      %3289 = vst.msk [vmem:[%s298 + $0x2e0] sm:$0xff] %vm3196, %v3160
      %3290 = vst.msk [vmem:[%s298 + $0x2e8] sm:$0xff] %vm3196, %v3161
      %3291 = vst.msk [vmem:[%s298 + $0x2f0] sm:$0xff] %vm3196, %v3162
      %3292 = vst.msk [vmem:[%s298 + $0x2f8] sm:$0xff] %vm3196, %v3163
      %3293 = vst.msk [vmem:[%s298 + $0x300] sm:$0xff] %vm3196, %v3164
      %3294 = vst.msk [vmem:[%s298 + $0x308] sm:$0xff] %vm3196, %v3165
      %3295 = vst.msk [vmem:[%s298 + $0x310] sm:$0xff] %vm3196, %v3166
      %3296 = vst.msk [vmem:[%s298 + $0x318] sm:$0xff] %vm3196, %v3167
      %3297 = vst.msk [vmem:[%s298 + $0x320] sm:$0xff] %vm3196, %v3168
      %3298 = vst.msk [vmem:[%s298 + $0x328] sm:$0xff] %vm3196, %v3169
      %3299 = vst.msk [vmem:[%s298 + $0x330] sm:$0xff] %vm3196, %v3170
      %3300 = vst.msk [vmem:[%s298 + $0x338] sm:$0xff] %vm3196, %v3171
      %3301 = vst.msk [vmem:[%s298 + $0x340] sm:$0xff] %vm3196, %v3172
      %3302 = vst.msk [vmem:[%s298 + $0x348] sm:$0xff] %vm3196, %v3173
      %3303 = vst.msk [vmem:[%s298 + $0x350] sm:$0xff] %vm3196, %v3174
      %3304 = vst.msk [vmem:[%s298 + $0x358] sm:$0xff] %vm3196, %v3175
      %3305 = vst.msk [vmem:[%s298 + $0x360] sm:$0xff] %vm3196, %v3176
      %3306 = vst.msk [vmem:[%s298 + $0x368] sm:$0xff] %vm3196, %v3177
      %3307 = vst.msk [vmem:[%s298 + $0x370] sm:$0xff] %vm3196, %v3178
      %3308 = vst.msk [vmem:[%s298 + $0x378] sm:$0xff] %vm3196, %v3179
      %3309 = vst.msk [vmem:[%s298 + $0x380] sm:$0xff] %vm3196, %v3180
      %3310 = vst.msk [vmem:[%s298 + $0x388] sm:$0xff] %vm3196, %v3181
      %3311 = vst.msk [vmem:[%s298 + $0x390] sm:$0xff] %vm3196, %v3182
      %3312 = vst.msk [vmem:[%s298 + $0x398] sm:$0xff] %vm3196, %v3183
      %3313 = vst.msk [vmem:[%s298 + $0x3a0] sm:$0xff] %vm3196, %v3184
      %3314 = vst.msk [vmem:[%s298 + $0x3a8] sm:$0xff] %vm3196, %v3185
      %3315 = vst.msk [vmem:[%s298 + $0x3b0] sm:$0xff] %vm3196, %v3186
      %3316 = vst.msk [vmem:[%s298 + $0x3b8] sm:$0xff] %vm3196, %v3187
      %3317 = vst.msk [vmem:[%s298 + $0x3c0] sm:$0xff] %vm3196, %v3188
      %3318 = vst.msk [vmem:[%s298 + $0x3c8] sm:$0xff] %vm3196, %v3189
      %3319 = vst.msk [vmem:[%s298 + $0x3d0] sm:$0xff] %vm3196, %v3190
      %3320 = vst.msk [vmem:[%s298 + $0x3d8] sm:$0xff] %vm3196, %v3191
      %3321 = vst.msk [vmem:[%s298 + $0x3e0] sm:$0xff] %vm3196, %v3192
      %3322 = vst.msk [vmem:[%s298 + $0x3e8] sm:$0xff] %vm3196, %v3193
      %3323 = vst.msk [vmem:[%s298 + $0x3f0] sm:$0xff] %vm3196, %v3194
      %3324 = vst.msk [vmem:[%s298 + $0x3f8] sm:$0xff] %vm3196, %v3195
      %p3325 = scmp.lt.s32.totalorder %s22, 1
      %s3326 = scalar_select %p3325, %s22, 1
      %s3327 = smul.addr %s3326, 128
      %s3328 = smul.addr %s3327, 8
      %s3329 = scalar_lea.vmem %s7, %s3328
      // Predicated region
      $region53: #{stnkd_forward.2} parent=47 // pred_check
        %p3330 = pneg %p202
      $region54: #{stnkd_forward.2} parent=47 // pred_check_branch
        %3332 = sbr.rel (%p3330) target = $region56
      $region55: #{stnkd_forward.2} parent=47 // pred_region
        _
      $region56: #{stnkd_forward.2} parent=47 // pred_fallthru
        _
    $region48: #{stnkd_forward.2} parent=5 // pred_fallthru
      _
    %p3333 = scmp.le.s32.totalorder 2, %s13
    // Predicated region
    $region57: #{stnkd_forward.2} parent=5 // pred_check
      %p3334 = pneg %p3333
    $region58: #{stnkd_forward.2} parent=5 // pred_check_branch
      %3336 = sbr.rel (%p3334) target = $region60
    $region59: #{stnkd_forward.2} parent=5 // pred_region
      %s3337 = ssub.s32 %s13, 2
      // Predicated region
      $region61: #{stnkd_forward.2} parent=59 // pred_check
        %p3338 = pneg %p208
      $region62: #{stnkd_forward.2} parent=59 // pred_check_branch
        %3340 = sbr.rel (%p3338) target = $region64
      $region63: #{stnkd_forward.2} parent=59 // pred_region
        %p3341 = scmp.lt.s32.totalorder %s24, 1
        %s3342 = scalar_select %p3341, %s24, 1
        %s3343 = smul.addr %s3342, 128
        %s3344 = smul.addr %s3343, 8
        %s3345 = scalar_lea.vmem %s7, %s3344
      $region64: #{stnkd_forward.2} parent=59 // pred_fallthru
        _
    $region60: #{stnkd_forward.2} parent=5 // pred_fallthru
      _
  $region6: #{stnkd_forward.2} parent=0 // loop_footer
    %s17 = sadd.s32 1, %s13
  $region7: #{stnkd_forward.2} parent=0 // loop_footer_branch
    %12 = sbr.rel target = $region3
  $region8: #{stnkd_forward.2} parent=0 // loop_exit
    _

// kernel: stnkd_forward.3
$region0: #{stnkd_forward.3}
  #allocation0 [shape = 'u32[]', space=smem, size = 0x4, offset = 0x4, fixed_abs, tag = 'smem constant byte address 0x4 - core index']
  #allocation1 [shape = 'u32[72,128]{1,0:T(1,128)}', space=vmem, size = 0x9000, scoped, tag = 'internal scratch']
  %s0 = inlined_call_operand.vmem [shape: bf16[2,1024], index: 0, kind: input, shape index: {}]
  %s1 = inlined_call_operand.vmem [shape: bf16[1024,512], index: 1, kind: input, shape index: {}]
  %s2 = inlined_call_operand.vmem [shape: f32[1,512], index: 2, kind: input, shape index: {}]
  %s3 = inlined_call_operand.vmem [shape: bf16[512,256], index: 3, kind: input, shape index: {}]
  %s4 = inlined_call_operand.vmem [shape: f32[1,256], index: 4, kind: input, shape index: {}]
  %s5 = inlined_call_operand.vmem [shape: bf16[256,128], index: 5, kind: input, shape index: {}]
  %s6 = inlined_call_operand.vmem [shape: f32[1,128], index: 6, kind: input, shape index: {}]
  %s7 = inlined_call_operand.vmem [shape: f32[2,128], index: 7, kind: output, shape index: {}]
  %s8 = sld [smem:[#allocation0]]
  $region38: #{stnkd_forward.3} parent=0
    _
  %s10 = ssub.s32 1, %s8
  %s11 = scalar_select 0, %s10, %s8
  // Predicated region
  $region2: #{stnkd_forward.3} parent=0 // pred_check
    _
  $region3: #{stnkd_forward.3} parent=0 // pred_check_branch
    %13 = sbr.rel (0) target = $region5
  $region4: #{stnkd_forward.3} parent=0 // pred_region
    _
  $region5: #{stnkd_forward.3} parent=0 // pred_fallthru
    _
  // Predicated region
  $region6: #{stnkd_forward.3} parent=0 // pred_check
    _
  $region7: #{stnkd_forward.3} parent=0 // pred_check_branch
    %15 = sbr.rel (0) target = $region9
  $region8: #{stnkd_forward.3} parent=0 // pred_region
    _
  $region9: #{stnkd_forward.3} parent=0 // pred_fallthru
    _
  // Predicated region
  $region10: #{stnkd_forward.3} parent=0 // pred_check
    _
  $region11: #{stnkd_forward.3} parent=0 // pred_check_branch
    %17 = sbr.rel (0) target = $region13
  $region12: #{stnkd_forward.3} parent=0 // pred_region
    _
  $region13: #{stnkd_forward.3} parent=0 // pred_fallthru
    _
  // Predicated region
  $region14: #{stnkd_forward.3} parent=0 // pred_check
    _
  $region15: #{stnkd_forward.3} parent=0 // pred_check_branch
    %19 = sbr.rel (0) target = $region17
  $region16: #{stnkd_forward.3} parent=0 // pred_region
    _
  $region17: #{stnkd_forward.3} parent=0 // pred_fallthru
    _
  // Predicated region
  $region18: #{stnkd_forward.3} parent=0 // pred_check
    _
  $region19: #{stnkd_forward.3} parent=0 // pred_check_branch
    %21 = sbr.rel (0) target = $region21
  $region20: #{stnkd_forward.3} parent=0 // pred_region
    _
  $region21: #{stnkd_forward.3} parent=0 // pred_fallthru
    _
  // Predicated region
  $region22: #{stnkd_forward.3} parent=0 // pred_check
    _
  $region23: #{stnkd_forward.3} parent=0 // pred_check_branch
    %23 = sbr.rel (0) target = $region25
  $region24: #{stnkd_forward.3} parent=0 // pred_region
    _
  $region25: #{stnkd_forward.3} parent=0 // pred_fallthru
    _
  // Predicated region
  $region26: #{stnkd_forward.3} parent=0 // pred_check
    _
  $region27: #{stnkd_forward.3} parent=0 // pred_check_branch
    %25 = sbr.rel (0) target = $region29
  $region28: #{stnkd_forward.3} parent=0 // pred_region
    _
  $region29: #{stnkd_forward.3} parent=0 // pred_fallthru
    _
  %v26 = vld [vmem:[%s0] sm:$0xff]
  %v27 = vld [vmem:[%s1] sm:$0xff]
  %v28 = vld [vmem:[%s1 + $0x8] sm:$0xff]
  %v29 = vld [vmem:[%s1 + $0x10] sm:$0xff]
  %v30 = vld [vmem:[%s1 + $0x18] sm:$0xff]
  %v31 = vld [vmem:[%s1 + $0x20] sm:$0xff]
  %v32 = vld [vmem:[%s1 + $0x28] sm:$0xff]
  %v33 = vld [vmem:[%s1 + $0x30] sm:$0xff]
  %v34 = vld [vmem:[%s1 + $0x38] sm:$0xff]
  %v35 = vld [vmem:[%s1 + $0x40] sm:$0xff]
  %v36 = vld [vmem:[%s1 + $0x48] sm:$0xff]
  %v37 = vld [vmem:[%s1 + $0x50] sm:$0xff]
  %v38 = vld [vmem:[%s1 + $0x58] sm:$0xff]
  %v39 = vld [vmem:[%s1 + $0x60] sm:$0xff]
  %v40 = vld [vmem:[%s1 + $0x68] sm:$0xff]
  %v41 = vld [vmem:[%s1 + $0x70] sm:$0xff]
  %v42 = vld [vmem:[%s1 + $0x78] sm:$0xff]
  %v43 = vld [vmem:[%s1 + $0x80] sm:$0xff]
  %v44 = vld [vmem:[%s1 + $0x88] sm:$0xff]
  %v45 = vld [vmem:[%s1 + $0x90] sm:$0xff]
  %v46 = vld [vmem:[%s1 + $0x98] sm:$0xff]
  %v47 = vld [vmem:[%s1 + $0xa0] sm:$0xff]
  %v48 = vld [vmem:[%s1 + $0xa8] sm:$0xff]
  %v49 = vld [vmem:[%s1 + $0xb0] sm:$0xff]
  %v50 = vld [vmem:[%s1 + $0xb8] sm:$0xff]
  %v51 = vld [vmem:[%s1 + $0xc0] sm:$0xff]
  %v52 = vld [vmem:[%s1 + $0xc8] sm:$0xff]
  %v53 = vld [vmem:[%s1 + $0xd0] sm:$0xff]
  %v54 = vld [vmem:[%s1 + $0xd8] sm:$0xff]
  %v55 = vld [vmem:[%s1 + $0xe0] sm:$0xff]
  %v56 = vld [vmem:[%s1 + $0xe8] sm:$0xff]
  %v57 = vld [vmem:[%s1 + $0xf0] sm:$0xff]
  %v58 = vld [vmem:[%s1 + $0xf8] sm:$0xff]
  %v59 = vld [vmem:[%s1 + $0x100] sm:$0xff]
  %v60 = vld [vmem:[%s1 + $0x108] sm:$0xff]
  %v61 = vld [vmem:[%s1 + $0x110] sm:$0xff]
  %v62 = vld [vmem:[%s1 + $0x118] sm:$0xff]
  %v63 = vld [vmem:[%s1 + $0x120] sm:$0xff]
  %v64 = vld [vmem:[%s1 + $0x128] sm:$0xff]
  %v65 = vld [vmem:[%s1 + $0x130] sm:$0xff]
  %v66 = vld [vmem:[%s1 + $0x138] sm:$0xff]
  %v67 = vld [vmem:[%s1 + $0x140] sm:$0xff]
  %v68 = vld [vmem:[%s1 + $0x148] sm:$0xff]
  %v69 = vld [vmem:[%s1 + $0x150] sm:$0xff]
  %v70 = vld [vmem:[%s1 + $0x158] sm:$0xff]
  %v71 = vld [vmem:[%s1 + $0x160] sm:$0xff]
  %v72 = vld [vmem:[%s1 + $0x168] sm:$0xff]
  %v73 = vld [vmem:[%s1 + $0x170] sm:$0xff]
  %v74 = vld [vmem:[%s1 + $0x178] sm:$0xff]
  %v75 = vld [vmem:[%s1 + $0x180] sm:$0xff]
  %v76 = vld [vmem:[%s1 + $0x188] sm:$0xff]
  %v77 = vld [vmem:[%s1 + $0x190] sm:$0xff]
  %v78 = vld [vmem:[%s1 + $0x198] sm:$0xff]
  %v79 = vld [vmem:[%s1 + $0x1a0] sm:$0xff]
  %v80 = vld [vmem:[%s1 + $0x1a8] sm:$0xff]
  %v81 = vld [vmem:[%s1 + $0x1b0] sm:$0xff]
  %v82 = vld [vmem:[%s1 + $0x1b8] sm:$0xff]
  %v83 = vld [vmem:[%s1 + $0x1c0] sm:$0xff]
  %v84 = vld [vmem:[%s1 + $0x1c8] sm:$0xff]
  %v85 = vld [vmem:[%s1 + $0x1d0] sm:$0xff]
  %v86 = vld [vmem:[%s1 + $0x1d8] sm:$0xff]
  %v87 = vld [vmem:[%s1 + $0x1e0] sm:$0xff]
  %v88 = vld [vmem:[%s1 + $0x1e8] sm:$0xff]
  %v89 = vld [vmem:[%s1 + $0x1f0] sm:$0xff]
  %v90 = vld [vmem:[%s1 + $0x1f8] sm:$0xff]
  %v91 = vld [vmem:[%s1 + $0x200] sm:$0xff]
  %v92 = vld [vmem:[%s1 + $0x208] sm:$0xff]
  %v93 = vld [vmem:[%s1 + $0x210] sm:$0xff]
  %v94 = vld [vmem:[%s1 + $0x218] sm:$0xff]
  %v95 = vld [vmem:[%s1 + $0x220] sm:$0xff]
  %v96 = vld [vmem:[%s1 + $0x228] sm:$0xff]
  %v97 = vld [vmem:[%s1 + $0x230] sm:$0xff]
  %v98 = vld [vmem:[%s1 + $0x238] sm:$0xff]
  %v99 = vld [vmem:[%s1 + $0x240] sm:$0xff]
  %v100 = vld [vmem:[%s1 + $0x248] sm:$0xff]
  %v101 = vld [vmem:[%s1 + $0x250] sm:$0xff]
  %v102 = vld [vmem:[%s1 + $0x258] sm:$0xff]
  %v103 = vld [vmem:[%s1 + $0x260] sm:$0xff]
  %v104 = vld [vmem:[%s1 + $0x268] sm:$0xff]
  %v105 = vld [vmem:[%s1 + $0x270] sm:$0xff]
  %v106 = vld [vmem:[%s1 + $0x278] sm:$0xff]
  %v107 = vld [vmem:[%s1 + $0x280] sm:$0xff]
  %v108 = vld [vmem:[%s1 + $0x288] sm:$0xff]
  %v109 = vld [vmem:[%s1 + $0x290] sm:$0xff]
  %v110 = vld [vmem:[%s1 + $0x298] sm:$0xff]
  %v111 = vld [vmem:[%s1 + $0x2a0] sm:$0xff]
  %v112 = vld [vmem:[%s1 + $0x2a8] sm:$0xff]
  %v113 = vld [vmem:[%s1 + $0x2b0] sm:$0xff]
  %v114 = vld [vmem:[%s1 + $0x2b8] sm:$0xff]
  %v115 = vld [vmem:[%s1 + $0x2c0] sm:$0xff]
  %v116 = vld [vmem:[%s1 + $0x2c8] sm:$0xff]
  %v117 = vld [vmem:[%s1 + $0x2d0] sm:$0xff]
  %v118 = vld [vmem:[%s1 + $0x2d8] sm:$0xff]
  %v119 = vld [vmem:[%s1 + $0x2e0] sm:$0xff]
  %v120 = vld [vmem:[%s1 + $0x2e8] sm:$0xff]
  %v121 = vld [vmem:[%s1 + $0x2f0] sm:$0xff]
  %v122 = vld [vmem:[%s1 + $0x2f8] sm:$0xff]
  %v123 = vld [vmem:[%s1 + $0x300] sm:$0xff]
  %v124 = vld [vmem:[%s1 + $0x308] sm:$0xff]
  %v125 = vld [vmem:[%s1 + $0x310] sm:$0xff]
  %v126 = vld [vmem:[%s1 + $0x318] sm:$0xff]
  %v127 = vld [vmem:[%s1 + $0x320] sm:$0xff]
  %v128 = vld [vmem:[%s1 + $0x328] sm:$0xff]
  %v129 = vld [vmem:[%s1 + $0x330] sm:$0xff]
  %v130 = vld [vmem:[%s1 + $0x338] sm:$0xff]
  %v131 = vld [vmem:[%s1 + $0x340] sm:$0xff]
  %v132 = vld [vmem:[%s1 + $0x348] sm:$0xff]
  %v133 = vld [vmem:[%s1 + $0x350] sm:$0xff]
  %v134 = vld [vmem:[%s1 + $0x358] sm:$0xff]
  %v135 = vld [vmem:[%s1 + $0x360] sm:$0xff]
  %v136 = vld [vmem:[%s1 + $0x368] sm:$0xff]
  %v137 = vld [vmem:[%s1 + $0x370] sm:$0xff]
  %v138 = vld [vmem:[%s1 + $0x378] sm:$0xff]
  %v139 = vld [vmem:[%s1 + $0x380] sm:$0xff]
  %v140 = vld [vmem:[%s1 + $0x388] sm:$0xff]
  %v141 = vld [vmem:[%s1 + $0x390] sm:$0xff]
  %v142 = vld [vmem:[%s1 + $0x398] sm:$0xff]
  %v143 = vld [vmem:[%s1 + $0x3a0] sm:$0xff]
  %v144 = vld [vmem:[%s1 + $0x3a8] sm:$0xff]
  %v145 = vld [vmem:[%s1 + $0x3b0] sm:$0xff]
  %v146 = vld [vmem:[%s1 + $0x3b8] sm:$0xff]
  %v147 = vld [vmem:[%s1 + $0x3c0] sm:$0xff]
  %v148 = vld [vmem:[%s1 + $0x3c8] sm:$0xff]
  %v149 = vld [vmem:[%s1 + $0x3d0] sm:$0xff]
  %v150 = vld [vmem:[%s1 + $0x3d8] sm:$0xff]
  %v151 = vld [vmem:[%s1 + $0x3e0] sm:$0xff]
  %v152 = vld [vmem:[%s1 + $0x3e8] sm:$0xff]
  %v153 = vld [vmem:[%s1 + $0x3f0] sm:$0xff]
  %v154 = vld [vmem:[%s1 + $0x3f8] sm:$0xff]
  %v155 = vld [vmem:[%s1 + $0x400] sm:$0xff]
  %v156 = vld [vmem:[%s1 + $0x408] sm:$0xff]
  %v157 = vld [vmem:[%s1 + $0x410] sm:$0xff]
  %v158 = vld [vmem:[%s1 + $0x418] sm:$0xff]
  %v159 = vld [vmem:[%s1 + $0x420] sm:$0xff]
  %v160 = vld [vmem:[%s1 + $0x428] sm:$0xff]
  %v161 = vld [vmem:[%s1 + $0x430] sm:$0xff]
  %v162 = vld [vmem:[%s1 + $0x438] sm:$0xff]
  %v163 = vld [vmem:[%s1 + $0x440] sm:$0xff]
  %v164 = vld [vmem:[%s1 + $0x448] sm:$0xff]
  %v165 = vld [vmem:[%s1 + $0x450] sm:$0xff]
  %v166 = vld [vmem:[%s1 + $0x458] sm:$0xff]
  %v167 = vld [vmem:[%s1 + $0x460] sm:$0xff]
  %v168 = vld [vmem:[%s1 + $0x468] sm:$0xff]
  %v169 = vld [vmem:[%s1 + $0x470] sm:$0xff]
  %v170 = vld [vmem:[%s1 + $0x478] sm:$0xff]
  %v171 = vld [vmem:[%s1 + $0x480] sm:$0xff]
  %v172 = vld [vmem:[%s1 + $0x488] sm:$0xff]
  %v173 = vld [vmem:[%s1 + $0x490] sm:$0xff]
  %v174 = vld [vmem:[%s1 + $0x498] sm:$0xff]
  %v175 = vld [vmem:[%s1 + $0x4a0] sm:$0xff]
  %v176 = vld [vmem:[%s1 + $0x4a8] sm:$0xff]
  %v177 = vld [vmem:[%s1 + $0x4b0] sm:$0xff]
  %v178 = vld [vmem:[%s1 + $0x4b8] sm:$0xff]
  %v179 = vld [vmem:[%s1 + $0x4c0] sm:$0xff]
  %v180 = vld [vmem:[%s1 + $0x4c8] sm:$0xff]
  %v181 = vld [vmem:[%s1 + $0x4d0] sm:$0xff]
  %v182 = vld [vmem:[%s1 + $0x4d8] sm:$0xff]
  %v183 = vld [vmem:[%s1 + $0x4e0] sm:$0xff]
  %v184 = vld [vmem:[%s1 + $0x4e8] sm:$0xff]
  %v185 = vld [vmem:[%s1 + $0x4f0] sm:$0xff]
  %v186 = vld [vmem:[%s1 + $0x4f8] sm:$0xff]
  %v187 = vld [vmem:[%s1 + $0x500] sm:$0xff]
  %v188 = vld [vmem:[%s1 + $0x508] sm:$0xff]
  %v189 = vld [vmem:[%s1 + $0x510] sm:$0xff]
  %v190 = vld [vmem:[%s1 + $0x518] sm:$0xff]
  %v191 = vld [vmem:[%s1 + $0x520] sm:$0xff]
  %v192 = vld [vmem:[%s1 + $0x528] sm:$0xff]
  %v193 = vld [vmem:[%s1 + $0x530] sm:$0xff]
  %v194 = vld [vmem:[%s1 + $0x538] sm:$0xff]
  %v195 = vld [vmem:[%s1 + $0x540] sm:$0xff]
  %v196 = vld [vmem:[%s1 + $0x548] sm:$0xff]
  %v197 = vld [vmem:[%s1 + $0x550] sm:$0xff]
  %v198 = vld [vmem:[%s1 + $0x558] sm:$0xff]
  %v199 = vld [vmem:[%s1 + $0x560] sm:$0xff]
  %v200 = vld [vmem:[%s1 + $0x568] sm:$0xff]
  %v201 = vld [vmem:[%s1 + $0x570] sm:$0xff]
  %v202 = vld [vmem:[%s1 + $0x578] sm:$0xff]
  %v203 = vld [vmem:[%s1 + $0x580] sm:$0xff]
  %v204 = vld [vmem:[%s1 + $0x588] sm:$0xff]
  %v205 = vld [vmem:[%s1 + $0x590] sm:$0xff]
  %v206 = vld [vmem:[%s1 + $0x598] sm:$0xff]
  %v207 = vld [vmem:[%s1 + $0x5a0] sm:$0xff]
  %v208 = vld [vmem:[%s1 + $0x5a8] sm:$0xff]
  %v209 = vld [vmem:[%s1 + $0x5b0] sm:$0xff]
  %v210 = vld [vmem:[%s1 + $0x5b8] sm:$0xff]
  %v211 = vld [vmem:[%s1 + $0x5c0] sm:$0xff]
  %v212 = vld [vmem:[%s1 + $0x5c8] sm:$0xff]
  %v213 = vld [vmem:[%s1 + $0x5d0] sm:$0xff]
  %v214 = vld [vmem:[%s1 + $0x5d8] sm:$0xff]
  %v215 = vld [vmem:[%s1 + $0x5e0] sm:$0xff]
  %v216 = vld [vmem:[%s1 + $0x5e8] sm:$0xff]
  %v217 = vld [vmem:[%s1 + $0x5f0] sm:$0xff]
  %v218 = vld [vmem:[%s1 + $0x5f8] sm:$0xff]
  %v219 = vld [vmem:[%s1 + $0x600] sm:$0xff]
  %v220 = vld [vmem:[%s1 + $0x608] sm:$0xff]
  %v221 = vld [vmem:[%s1 + $0x610] sm:$0xff]
  %v222 = vld [vmem:[%s1 + $0x618] sm:$0xff]
  %v223 = vld [vmem:[%s1 + $0x620] sm:$0xff]
  %v224 = vld [vmem:[%s1 + $0x628] sm:$0xff]
  %v225 = vld [vmem:[%s1 + $0x630] sm:$0xff]
  %v226 = vld [vmem:[%s1 + $0x638] sm:$0xff]
  %v227 = vld [vmem:[%s1 + $0x640] sm:$0xff]
  %v228 = vld [vmem:[%s1 + $0x648] sm:$0xff]
  %v229 = vld [vmem:[%s1 + $0x650] sm:$0xff]
  %v230 = vld [vmem:[%s1 + $0x658] sm:$0xff]
  %v231 = vld [vmem:[%s1 + $0x660] sm:$0xff]
  %v232 = vld [vmem:[%s1 + $0x668] sm:$0xff]
  %v233 = vld [vmem:[%s1 + $0x670] sm:$0xff]
  %v234 = vld [vmem:[%s1 + $0x678] sm:$0xff]
  %v235 = vld [vmem:[%s1 + $0x680] sm:$0xff]
  %v236 = vld [vmem:[%s1 + $0x688] sm:$0xff]
  %v237 = vld [vmem:[%s1 + $0x690] sm:$0xff]
  %v238 = vld [vmem:[%s1 + $0x698] sm:$0xff]
  %v239 = vld [vmem:[%s1 + $0x6a0] sm:$0xff]
  %v240 = vld [vmem:[%s1 + $0x6a8] sm:$0xff]
  %v241 = vld [vmem:[%s1 + $0x6b0] sm:$0xff]
  %v242 = vld [vmem:[%s1 + $0x6b8] sm:$0xff]
  %v243 = vld [vmem:[%s1 + $0x6c0] sm:$0xff]
  %v244 = vld [vmem:[%s1 + $0x6c8] sm:$0xff]
  %v245 = vld [vmem:[%s1 + $0x6d0] sm:$0xff]
  %v246 = vld [vmem:[%s1 + $0x6d8] sm:$0xff]
  %v247 = vld [vmem:[%s1 + $0x6e0] sm:$0xff]
  %v248 = vld [vmem:[%s1 + $0x6e8] sm:$0xff]
  %v249 = vld [vmem:[%s1 + $0x6f0] sm:$0xff]
  %v250 = vld [vmem:[%s1 + $0x6f8] sm:$0xff]
  %v251 = vld [vmem:[%s1 + $0x700] sm:$0xff]
  %v252 = vld [vmem:[%s1 + $0x708] sm:$0xff]
  %v253 = vld [vmem:[%s1 + $0x710] sm:$0xff]
  %v254 = vld [vmem:[%s1 + $0x718] sm:$0xff]
  %v255 = vld [vmem:[%s1 + $0x720] sm:$0xff]
  %v256 = vld [vmem:[%s1 + $0x728] sm:$0xff]
  %v257 = vld [vmem:[%s1 + $0x730] sm:$0xff]
  %v258 = vld [vmem:[%s1 + $0x738] sm:$0xff]
  %v259 = vld [vmem:[%s1 + $0x740] sm:$0xff]
  %v260 = vld [vmem:[%s1 + $0x748] sm:$0xff]
  %v261 = vld [vmem:[%s1 + $0x750] sm:$0xff]
  %v262 = vld [vmem:[%s1 + $0x758] sm:$0xff]
  %v263 = vld [vmem:[%s1 + $0x760] sm:$0xff]
  %v264 = vld [vmem:[%s1 + $0x768] sm:$0xff]
  %v265 = vld [vmem:[%s1 + $0x770] sm:$0xff]
  %v266 = vld [vmem:[%s1 + $0x778] sm:$0xff]
  %v267 = vld [vmem:[%s1 + $0x780] sm:$0xff]
  %v268 = vld [vmem:[%s1 + $0x788] sm:$0xff]
  %v269 = vld [vmem:[%s1 + $0x790] sm:$0xff]
  %v270 = vld [vmem:[%s1 + $0x798] sm:$0xff]
  %v271 = vld [vmem:[%s1 + $0x7a0] sm:$0xff]
  %v272 = vld [vmem:[%s1 + $0x7a8] sm:$0xff]
  %v273 = vld [vmem:[%s1 + $0x7b0] sm:$0xff]
  %v274 = vld [vmem:[%s1 + $0x7b8] sm:$0xff]
  %v275 = vld [vmem:[%s1 + $0x7c0] sm:$0xff]
  %v276 = vld [vmem:[%s1 + $0x7c8] sm:$0xff]
  %v277 = vld [vmem:[%s1 + $0x7d0] sm:$0xff]
  %v278 = vld [vmem:[%s1 + $0x7d8] sm:$0xff]
  %v279 = vld [vmem:[%s1 + $0x7e0] sm:$0xff]
  %v280 = vld [vmem:[%s1 + $0x7e8] sm:$0xff]
  %v281 = vld [vmem:[%s1 + $0x7f0] sm:$0xff]
  %v282 = vld [vmem:[%s1 + $0x7f8] sm:$0xff]
  %v283 = vld [vmem:[%s2] sm:$0xf]
  %v285 = vperm.slane %v283, 0
  %v286 = vperm.slane %v283, 1
  %v287 = vperm.slane %v283, 2
  %v288 = vperm.slane %v283, 3
  %294 = vst [vmem:[#allocation1] ss:$9 sm:$0xff] %v26
  %v295 = vld [vmem:[#allocation1] sm:$0xff]
  %v296 = vld [vmem:[#allocation1 + $0x9] sm:$0xff]
  %v297 = vld [vmem:[#allocation1 + $0x12] sm:$0xff]
  %v298 = vld [vmem:[#allocation1 + $0x1b] sm:$0xff]
  %v299 = vld [vmem:[#allocation1 + $0x24] sm:$0xff]
  %v300 = vld [vmem:[#allocation1 + $0x2d] sm:$0xff]
  %v301 = vld [vmem:[#allocation1 + $0x36] sm:$0xff]
  %v302 = vld [vmem:[#allocation1 + $0x3f] sm:$0xff]
  %v567 = vunpack.c.l.b16 %v27
  %v568 = vunpack.c.h.b16 %v27
  %v569 = vunpack.c.l.b16 %v28
  %v570 = vunpack.c.h.b16 %v28
  %v571 = vunpack.c.l.b16 %v29
  %v572 = vunpack.c.h.b16 %v29
  %v573 = vunpack.c.l.b16 %v30
  %v574 = vunpack.c.h.b16 %v30
  %v575 = vunpack.c.l.b16 %v31
  %v576 = vunpack.c.h.b16 %v31
  %v577 = vunpack.c.l.b16 %v32
  %v578 = vunpack.c.h.b16 %v32
  %v579 = vunpack.c.l.b16 %v33
  %v580 = vunpack.c.h.b16 %v33
  %v581 = vunpack.c.l.b16 %v34
  %v582 = vunpack.c.h.b16 %v34
  %v583 = vunpack.c.l.b16 %v35
  %v584 = vunpack.c.h.b16 %v35
  %v585 = vunpack.c.l.b16 %v36
  %v586 = vunpack.c.h.b16 %v36
  %v587 = vunpack.c.l.b16 %v37
  %v588 = vunpack.c.h.b16 %v37
  %v589 = vunpack.c.l.b16 %v38
  %v590 = vunpack.c.h.b16 %v38
  %v591 = vunpack.c.l.b16 %v39
  %v592 = vunpack.c.h.b16 %v39
  %v593 = vunpack.c.l.b16 %v40
  %v594 = vunpack.c.h.b16 %v40
  %v595 = vunpack.c.l.b16 %v41
  %v596 = vunpack.c.h.b16 %v41
  %v597 = vunpack.c.l.b16 %v42
  %v598 = vunpack.c.h.b16 %v42
  %v599 = vunpack.c.l.b16 %v43
  %v600 = vunpack.c.h.b16 %v43
  %v601 = vunpack.c.l.b16 %v44
  %v602 = vunpack.c.h.b16 %v44
  %v603 = vunpack.c.l.b16 %v45
  %v604 = vunpack.c.h.b16 %v45
  %v605 = vunpack.c.l.b16 %v46
  %v606 = vunpack.c.h.b16 %v46
  %v607 = vunpack.c.l.b16 %v47
  %v608 = vunpack.c.h.b16 %v47
  %v609 = vunpack.c.l.b16 %v48
  %v610 = vunpack.c.h.b16 %v48
  %v611 = vunpack.c.l.b16 %v49
  %v612 = vunpack.c.h.b16 %v49
  %v613 = vunpack.c.l.b16 %v50
  %v614 = vunpack.c.h.b16 %v50
  %v615 = vunpack.c.l.b16 %v51
  %v616 = vunpack.c.h.b16 %v51
  %v617 = vunpack.c.l.b16 %v52
  %v618 = vunpack.c.h.b16 %v52
  %v619 = vunpack.c.l.b16 %v53
  %v620 = vunpack.c.h.b16 %v53
  %v621 = vunpack.c.l.b16 %v54
  %v622 = vunpack.c.h.b16 %v54
  %v623 = vunpack.c.l.b16 %v55
  %v624 = vunpack.c.h.b16 %v55
  %v625 = vunpack.c.l.b16 %v56
  %v626 = vunpack.c.h.b16 %v56
  %v627 = vunpack.c.l.b16 %v57
  %v628 = vunpack.c.h.b16 %v57
  %v629 = vunpack.c.l.b16 %v58
  %v630 = vunpack.c.h.b16 %v58
  %v631 = vunpack.c.l.b16 %v59
  %v632 = vunpack.c.h.b16 %v59
  %v633 = vunpack.c.l.b16 %v60
  %v634 = vunpack.c.h.b16 %v60
  %v635 = vunpack.c.l.b16 %v61
  %v636 = vunpack.c.h.b16 %v61
  %v637 = vunpack.c.l.b16 %v62
  %v638 = vunpack.c.h.b16 %v62
  %v639 = vunpack.c.l.b16 %v63
  %v640 = vunpack.c.h.b16 %v63
  %v641 = vunpack.c.l.b16 %v64
  %v642 = vunpack.c.h.b16 %v64
  %v643 = vunpack.c.l.b16 %v65
  %v644 = vunpack.c.h.b16 %v65
  %v645 = vunpack.c.l.b16 %v66
  %v646 = vunpack.c.h.b16 %v66
  %v647 = vunpack.c.l.b16 %v67
  %v648 = vunpack.c.h.b16 %v67
  %v649 = vunpack.c.l.b16 %v68
  %v650 = vunpack.c.h.b16 %v68
  %v651 = vunpack.c.l.b16 %v69
  %v652 = vunpack.c.h.b16 %v69
  %v653 = vunpack.c.l.b16 %v70
  %v654 = vunpack.c.h.b16 %v70
  %v655 = vunpack.c.l.b16 %v71
  %v656 = vunpack.c.h.b16 %v71
  %v657 = vunpack.c.l.b16 %v72
  %v658 = vunpack.c.h.b16 %v72
  %v659 = vunpack.c.l.b16 %v73
  %v660 = vunpack.c.h.b16 %v73
  %v661 = vunpack.c.l.b16 %v74
  %v662 = vunpack.c.h.b16 %v74
  %v663 = vunpack.c.l.b16 %v75
  %v664 = vunpack.c.h.b16 %v75
  %v665 = vunpack.c.l.b16 %v76
  %v666 = vunpack.c.h.b16 %v76
  %v667 = vunpack.c.l.b16 %v77
  %v668 = vunpack.c.h.b16 %v77
  %v669 = vunpack.c.l.b16 %v78
  %v670 = vunpack.c.h.b16 %v78
  %v671 = vunpack.c.l.b16 %v79
  %v672 = vunpack.c.h.b16 %v79
  %v673 = vunpack.c.l.b16 %v80
  %v674 = vunpack.c.h.b16 %v80
  %v675 = vunpack.c.l.b16 %v81
  %v676 = vunpack.c.h.b16 %v81
  %v677 = vunpack.c.l.b16 %v82
  %v678 = vunpack.c.h.b16 %v82
  %v679 = vunpack.c.l.b16 %v83
  %v680 = vunpack.c.h.b16 %v83
  %v681 = vunpack.c.l.b16 %v84
  %v682 = vunpack.c.h.b16 %v84
  %v683 = vunpack.c.l.b16 %v85
  %v684 = vunpack.c.h.b16 %v85
  %v685 = vunpack.c.l.b16 %v86
  %v686 = vunpack.c.h.b16 %v86
  %v687 = vunpack.c.l.b16 %v87
  %v688 = vunpack.c.h.b16 %v87
  %v689 = vunpack.c.l.b16 %v88
  %v690 = vunpack.c.h.b16 %v88
  %v691 = vunpack.c.l.b16 %v89
  %v692 = vunpack.c.h.b16 %v89
  %v693 = vunpack.c.l.b16 %v90
  %v694 = vunpack.c.h.b16 %v90
  %v695 = vunpack.c.l.b16 %v91
  %v696 = vunpack.c.h.b16 %v91
  %v697 = vunpack.c.l.b16 %v92
  %v698 = vunpack.c.h.b16 %v92
  %v699 = vunpack.c.l.b16 %v93
  %v700 = vunpack.c.h.b16 %v93
  %v701 = vunpack.c.l.b16 %v94
  %v702 = vunpack.c.h.b16 %v94
  %v703 = vunpack.c.l.b16 %v95
  %v704 = vunpack.c.h.b16 %v95
  %v705 = vunpack.c.l.b16 %v96
  %v706 = vunpack.c.h.b16 %v96
  %v707 = vunpack.c.l.b16 %v97
  %v708 = vunpack.c.h.b16 %v97
  %v709 = vunpack.c.l.b16 %v98
  %v710 = vunpack.c.h.b16 %v98
  %v711 = vunpack.c.l.b16 %v99
  %v712 = vunpack.c.h.b16 %v99
  %v713 = vunpack.c.l.b16 %v100
  %v714 = vunpack.c.h.b16 %v100
  %v715 = vunpack.c.l.b16 %v101
  %v716 = vunpack.c.h.b16 %v101
  %v717 = vunpack.c.l.b16 %v102
  %v718 = vunpack.c.h.b16 %v102
  %v719 = vunpack.c.l.b16 %v103
  %v720 = vunpack.c.h.b16 %v103
  %v721 = vunpack.c.l.b16 %v104
  %v722 = vunpack.c.h.b16 %v104
  %v723 = vunpack.c.l.b16 %v105
  %v724 = vunpack.c.h.b16 %v105
  %v725 = vunpack.c.l.b16 %v106
  %v726 = vunpack.c.h.b16 %v106
  %v727 = vunpack.c.l.b16 %v107
  %v728 = vunpack.c.h.b16 %v107
  %v729 = vunpack.c.l.b16 %v108
  %v730 = vunpack.c.h.b16 %v108
  %v731 = vunpack.c.l.b16 %v109
  %v732 = vunpack.c.h.b16 %v109
  %v733 = vunpack.c.l.b16 %v110
  %v734 = vunpack.c.h.b16 %v110
  %v735 = vunpack.c.l.b16 %v111
  %v736 = vunpack.c.h.b16 %v111
  %v737 = vunpack.c.l.b16 %v112
  %v738 = vunpack.c.h.b16 %v112
  %v739 = vunpack.c.l.b16 %v113
  %v740 = vunpack.c.h.b16 %v113
  %v741 = vunpack.c.l.b16 %v114
  %v742 = vunpack.c.h.b16 %v114
  %v743 = vunpack.c.l.b16 %v115
  %v744 = vunpack.c.h.b16 %v115
  %v745 = vunpack.c.l.b16 %v116
  %v746 = vunpack.c.h.b16 %v116
  %v747 = vunpack.c.l.b16 %v117
  %v748 = vunpack.c.h.b16 %v117
  %v749 = vunpack.c.l.b16 %v118
  %v750 = vunpack.c.h.b16 %v118
  %v751 = vunpack.c.l.b16 %v119
  %v752 = vunpack.c.h.b16 %v119
  %v753 = vunpack.c.l.b16 %v120
  %v754 = vunpack.c.h.b16 %v120
  %v755 = vunpack.c.l.b16 %v121
  %v756 = vunpack.c.h.b16 %v121
  %v757 = vunpack.c.l.b16 %v122
  %v758 = vunpack.c.h.b16 %v122
  %v759 = vunpack.c.l.b16 %v123
  %v760 = vunpack.c.h.b16 %v123
  %v761 = vunpack.c.l.b16 %v124
  %v762 = vunpack.c.h.b16 %v124
  %v763 = vunpack.c.l.b16 %v125
  %v764 = vunpack.c.h.b16 %v125
  %v765 = vunpack.c.l.b16 %v126
  %v766 = vunpack.c.h.b16 %v126
  %v767 = vunpack.c.l.b16 %v127
  %v768 = vunpack.c.h.b16 %v127
  %v769 = vunpack.c.l.b16 %v128
  %v770 = vunpack.c.h.b16 %v128
  %v771 = vunpack.c.l.b16 %v129
  %v772 = vunpack.c.h.b16 %v129
  %v773 = vunpack.c.l.b16 %v130
  %v774 = vunpack.c.h.b16 %v130
  %v775 = vunpack.c.l.b16 %v131
  %v776 = vunpack.c.h.b16 %v131
  %v777 = vunpack.c.l.b16 %v132
  %v778 = vunpack.c.h.b16 %v132
  %v779 = vunpack.c.l.b16 %v133
  %v780 = vunpack.c.h.b16 %v133
  %v781 = vunpack.c.l.b16 %v134
  %v782 = vunpack.c.h.b16 %v134
  %v783 = vunpack.c.l.b16 %v135
  %v784 = vunpack.c.h.b16 %v135
  %v785 = vunpack.c.l.b16 %v136
  %v786 = vunpack.c.h.b16 %v136
  %v787 = vunpack.c.l.b16 %v137
  %v788 = vunpack.c.h.b16 %v137
  %v789 = vunpack.c.l.b16 %v138
  %v790 = vunpack.c.h.b16 %v138
  %v791 = vunpack.c.l.b16 %v139
  %v792 = vunpack.c.h.b16 %v139
  %v793 = vunpack.c.l.b16 %v140
  %v794 = vunpack.c.h.b16 %v140
  %v795 = vunpack.c.l.b16 %v141
  %v796 = vunpack.c.h.b16 %v141
  %v797 = vunpack.c.l.b16 %v142
  %v798 = vunpack.c.h.b16 %v142
  %v799 = vunpack.c.l.b16 %v143
  %v800 = vunpack.c.h.b16 %v143
  %v801 = vunpack.c.l.b16 %v144
  %v802 = vunpack.c.h.b16 %v144
  %v803 = vunpack.c.l.b16 %v145
  %v804 = vunpack.c.h.b16 %v145
  %v805 = vunpack.c.l.b16 %v146
  %v806 = vunpack.c.h.b16 %v146
  %v807 = vunpack.c.l.b16 %v147
  %v808 = vunpack.c.h.b16 %v147
  %v809 = vunpack.c.l.b16 %v148
  %v810 = vunpack.c.h.b16 %v148
  %v811 = vunpack.c.l.b16 %v149
  %v812 = vunpack.c.h.b16 %v149
  %v813 = vunpack.c.l.b16 %v150
  %v814 = vunpack.c.h.b16 %v150
  %v815 = vunpack.c.l.b16 %v151
  %v816 = vunpack.c.h.b16 %v151
  %v817 = vunpack.c.l.b16 %v152
  %v818 = vunpack.c.h.b16 %v152
  %v819 = vunpack.c.l.b16 %v153
  %v820 = vunpack.c.h.b16 %v153
  %v821 = vunpack.c.l.b16 %v154
  %v822 = vunpack.c.h.b16 %v154
  %v823 = vunpack.c.l.b16 %v155
  %v824 = vunpack.c.h.b16 %v155
  %v825 = vunpack.c.l.b16 %v156
  %v826 = vunpack.c.h.b16 %v156
  %v827 = vunpack.c.l.b16 %v157
  %v828 = vunpack.c.h.b16 %v157
  %v829 = vunpack.c.l.b16 %v158
  %v830 = vunpack.c.h.b16 %v158
  %v831 = vunpack.c.l.b16 %v159
  %v832 = vunpack.c.h.b16 %v159
  %v833 = vunpack.c.l.b16 %v160
  %v834 = vunpack.c.h.b16 %v160
  %v835 = vunpack.c.l.b16 %v161
  %v836 = vunpack.c.h.b16 %v161
  %v837 = vunpack.c.l.b16 %v162
  %v838 = vunpack.c.h.b16 %v162
  %v839 = vunpack.c.l.b16 %v163
  %v840 = vunpack.c.h.b16 %v163
  %v841 = vunpack.c.l.b16 %v164
  %v842 = vunpack.c.h.b16 %v164
  %v843 = vunpack.c.l.b16 %v165
  %v844 = vunpack.c.h.b16 %v165
  %v845 = vunpack.c.l.b16 %v166
  %v846 = vunpack.c.h.b16 %v166
  %v847 = vunpack.c.l.b16 %v167
  %v848 = vunpack.c.h.b16 %v167
  %v849 = vunpack.c.l.b16 %v168
  %v850 = vunpack.c.h.b16 %v168
  %v851 = vunpack.c.l.b16 %v169
  %v852 = vunpack.c.h.b16 %v169
  %v853 = vunpack.c.l.b16 %v170
  %v854 = vunpack.c.h.b16 %v170
  %v855 = vunpack.c.l.b16 %v171
  %v856 = vunpack.c.h.b16 %v171
  %v857 = vunpack.c.l.b16 %v172
  %v858 = vunpack.c.h.b16 %v172
  %v859 = vunpack.c.l.b16 %v173
  %v860 = vunpack.c.h.b16 %v173
  %v861 = vunpack.c.l.b16 %v174
  %v862 = vunpack.c.h.b16 %v174
  %v863 = vunpack.c.l.b16 %v175
  %v864 = vunpack.c.h.b16 %v175
  %v865 = vunpack.c.l.b16 %v176
  %v866 = vunpack.c.h.b16 %v176
  %v867 = vunpack.c.l.b16 %v177
  %v868 = vunpack.c.h.b16 %v177
  %v869 = vunpack.c.l.b16 %v178
  %v870 = vunpack.c.h.b16 %v178
  %v871 = vunpack.c.l.b16 %v179
  %v872 = vunpack.c.h.b16 %v179
  %v873 = vunpack.c.l.b16 %v180
  %v874 = vunpack.c.h.b16 %v180
  %v875 = vunpack.c.l.b16 %v181
  %v876 = vunpack.c.h.b16 %v181
  %v877 = vunpack.c.l.b16 %v182
  %v878 = vunpack.c.h.b16 %v182
  %v879 = vunpack.c.l.b16 %v183
  %v880 = vunpack.c.h.b16 %v183
  %v881 = vunpack.c.l.b16 %v184
  %v882 = vunpack.c.h.b16 %v184
  %v883 = vunpack.c.l.b16 %v185
  %v884 = vunpack.c.h.b16 %v185
  %v885 = vunpack.c.l.b16 %v186
  %v886 = vunpack.c.h.b16 %v186
  %v887 = vunpack.c.l.b16 %v187
  %v888 = vunpack.c.h.b16 %v187
  %v889 = vunpack.c.l.b16 %v188
  %v890 = vunpack.c.h.b16 %v188
  %v891 = vunpack.c.l.b16 %v189
  %v892 = vunpack.c.h.b16 %v189
  %v893 = vunpack.c.l.b16 %v190
  %v894 = vunpack.c.h.b16 %v190
  %v895 = vunpack.c.l.b16 %v191
  %v896 = vunpack.c.h.b16 %v191
  %v897 = vunpack.c.l.b16 %v192
  %v898 = vunpack.c.h.b16 %v192
  %v899 = vunpack.c.l.b16 %v193
  %v900 = vunpack.c.h.b16 %v193
  %v901 = vunpack.c.l.b16 %v194
  %v902 = vunpack.c.h.b16 %v194
  %v903 = vunpack.c.l.b16 %v195
  %v904 = vunpack.c.h.b16 %v195
  %v905 = vunpack.c.l.b16 %v196
  %v906 = vunpack.c.h.b16 %v196
  %v907 = vunpack.c.l.b16 %v197
  %v908 = vunpack.c.h.b16 %v197
  %v909 = vunpack.c.l.b16 %v198
  %v910 = vunpack.c.h.b16 %v198
  %v911 = vunpack.c.l.b16 %v199
  %v912 = vunpack.c.h.b16 %v199
  %v913 = vunpack.c.l.b16 %v200
  %v914 = vunpack.c.h.b16 %v200
  %v915 = vunpack.c.l.b16 %v201
  %v916 = vunpack.c.h.b16 %v201
  %v917 = vunpack.c.l.b16 %v202
  %v918 = vunpack.c.h.b16 %v202
  %v919 = vunpack.c.l.b16 %v203
  %v920 = vunpack.c.h.b16 %v203
  %v921 = vunpack.c.l.b16 %v204
  %v922 = vunpack.c.h.b16 %v204
  %v923 = vunpack.c.l.b16 %v205
  %v924 = vunpack.c.h.b16 %v205
  %v925 = vunpack.c.l.b16 %v206
  %v926 = vunpack.c.h.b16 %v206
  %v927 = vunpack.c.l.b16 %v207
  %v928 = vunpack.c.h.b16 %v207
  %v929 = vunpack.c.l.b16 %v208
  %v930 = vunpack.c.h.b16 %v208
  %v931 = vunpack.c.l.b16 %v209
  %v932 = vunpack.c.h.b16 %v209
  %v933 = vunpack.c.l.b16 %v210
  %v934 = vunpack.c.h.b16 %v210
  %v935 = vunpack.c.l.b16 %v211
  %v936 = vunpack.c.h.b16 %v211
  %v937 = vunpack.c.l.b16 %v212
  %v938 = vunpack.c.h.b16 %v212
  %v939 = vunpack.c.l.b16 %v213
  %v940 = vunpack.c.h.b16 %v213
  %v941 = vunpack.c.l.b16 %v214
  %v942 = vunpack.c.h.b16 %v214
  %v943 = vunpack.c.l.b16 %v215
  %v944 = vunpack.c.h.b16 %v215
  %v945 = vunpack.c.l.b16 %v216
  %v946 = vunpack.c.h.b16 %v216
  %v947 = vunpack.c.l.b16 %v217
  %v948 = vunpack.c.h.b16 %v217
  %v949 = vunpack.c.l.b16 %v218
  %v950 = vunpack.c.h.b16 %v218
  %v951 = vunpack.c.l.b16 %v219
  %v952 = vunpack.c.h.b16 %v219
  %v953 = vunpack.c.l.b16 %v220
  %v954 = vunpack.c.h.b16 %v220
  %v955 = vunpack.c.l.b16 %v221
  %v956 = vunpack.c.h.b16 %v221
  %v957 = vunpack.c.l.b16 %v222
  %v958 = vunpack.c.h.b16 %v222
  %v959 = vunpack.c.l.b16 %v223
  %v960 = vunpack.c.h.b16 %v223
  %v961 = vunpack.c.l.b16 %v224
  %v962 = vunpack.c.h.b16 %v224
  %v963 = vunpack.c.l.b16 %v225
  %v964 = vunpack.c.h.b16 %v225
  %v965 = vunpack.c.l.b16 %v226
  %v966 = vunpack.c.h.b16 %v226
  %v967 = vunpack.c.l.b16 %v227
  %v968 = vunpack.c.h.b16 %v227
  %v969 = vunpack.c.l.b16 %v228
  %v970 = vunpack.c.h.b16 %v228
  %v971 = vunpack.c.l.b16 %v229
  %v972 = vunpack.c.h.b16 %v229
  %v973 = vunpack.c.l.b16 %v230
  %v974 = vunpack.c.h.b16 %v230
  %v975 = vunpack.c.l.b16 %v231
  %v976 = vunpack.c.h.b16 %v231
  %v977 = vunpack.c.l.b16 %v232
  %v978 = vunpack.c.h.b16 %v232
  %v979 = vunpack.c.l.b16 %v233
  %v980 = vunpack.c.h.b16 %v233
  %v981 = vunpack.c.l.b16 %v234
  %v982 = vunpack.c.h.b16 %v234
  %v983 = vunpack.c.l.b16 %v235
  %v984 = vunpack.c.h.b16 %v235
  %v985 = vunpack.c.l.b16 %v236
  %v986 = vunpack.c.h.b16 %v236
  %v987 = vunpack.c.l.b16 %v237
  %v988 = vunpack.c.h.b16 %v237
  %v989 = vunpack.c.l.b16 %v238
  %v990 = vunpack.c.h.b16 %v238
  %v991 = vunpack.c.l.b16 %v239
  %v992 = vunpack.c.h.b16 %v239
  %v993 = vunpack.c.l.b16 %v240
  %v994 = vunpack.c.h.b16 %v240
  %v995 = vunpack.c.l.b16 %v241
  %v996 = vunpack.c.h.b16 %v241
  %v997 = vunpack.c.l.b16 %v242
  %v998 = vunpack.c.h.b16 %v242
  %v999 = vunpack.c.l.b16 %v243
  %v1000 = vunpack.c.h.b16 %v243
  %v1001 = vunpack.c.l.b16 %v244
  %v1002 = vunpack.c.h.b16 %v244
  %v1003 = vunpack.c.l.b16 %v245
  %v1004 = vunpack.c.h.b16 %v245
  %v1005 = vunpack.c.l.b16 %v246
  %v1006 = vunpack.c.h.b16 %v246
  %v1007 = vunpack.c.l.b16 %v247
  %v1008 = vunpack.c.h.b16 %v247
  %v1009 = vunpack.c.l.b16 %v248
  %v1010 = vunpack.c.h.b16 %v248
  %v1011 = vunpack.c.l.b16 %v249
  %v1012 = vunpack.c.h.b16 %v249
  %v1013 = vunpack.c.l.b16 %v250
  %v1014 = vunpack.c.h.b16 %v250
  %v1015 = vunpack.c.l.b16 %v251
  %v1016 = vunpack.c.h.b16 %v251
  %v1017 = vunpack.c.l.b16 %v252
  %v1018 = vunpack.c.h.b16 %v252
  %v1019 = vunpack.c.l.b16 %v253
  %v1020 = vunpack.c.h.b16 %v253
  %v1021 = vunpack.c.l.b16 %v254
  %v1022 = vunpack.c.h.b16 %v254
  %v1023 = vunpack.c.l.b16 %v255
  %v1024 = vunpack.c.h.b16 %v255
  %v1025 = vunpack.c.l.b16 %v256
  %v1026 = vunpack.c.h.b16 %v256
  %v1027 = vunpack.c.l.b16 %v257
  %v1028 = vunpack.c.h.b16 %v257
  %v1029 = vunpack.c.l.b16 %v258
  %v1030 = vunpack.c.h.b16 %v258
  %v1031 = vunpack.c.l.b16 %v259
  %v1032 = vunpack.c.h.b16 %v259
  %v1033 = vunpack.c.l.b16 %v260
  %v1034 = vunpack.c.h.b16 %v260
  %v1035 = vunpack.c.l.b16 %v261
  %v1036 = vunpack.c.h.b16 %v261
  %v1037 = vunpack.c.l.b16 %v262
  %v1038 = vunpack.c.h.b16 %v262
  %v1039 = vunpack.c.l.b16 %v263
  %v1040 = vunpack.c.h.b16 %v263
  %v1041 = vunpack.c.l.b16 %v264
  %v1042 = vunpack.c.h.b16 %v264
  %v1043 = vunpack.c.l.b16 %v265
  %v1044 = vunpack.c.h.b16 %v265
  %v1045 = vunpack.c.l.b16 %v266
  %v1046 = vunpack.c.h.b16 %v266
  %v1047 = vunpack.c.l.b16 %v267
  %v1048 = vunpack.c.h.b16 %v267
  %v1049 = vunpack.c.l.b16 %v268
  %v1050 = vunpack.c.h.b16 %v268
  %v1051 = vunpack.c.l.b16 %v269
  %v1052 = vunpack.c.h.b16 %v269
  %v1053 = vunpack.c.l.b16 %v270
  %v1054 = vunpack.c.h.b16 %v270
  %v1055 = vunpack.c.l.b16 %v271
  %v1056 = vunpack.c.h.b16 %v271
  %v1057 = vunpack.c.l.b16 %v272
  %v1058 = vunpack.c.h.b16 %v272
  %v1059 = vunpack.c.l.b16 %v273
  %v1060 = vunpack.c.h.b16 %v273
  %v1061 = vunpack.c.l.b16 %v274
  %v1062 = vunpack.c.h.b16 %v274
  %v1063 = vunpack.c.l.b16 %v275
  %v1064 = vunpack.c.h.b16 %v275
  %v1065 = vunpack.c.l.b16 %v276
  %v1066 = vunpack.c.h.b16 %v276
  %v1067 = vunpack.c.l.b16 %v277
  %v1068 = vunpack.c.h.b16 %v277
  %v1069 = vunpack.c.l.b16 %v278
  %v1070 = vunpack.c.h.b16 %v278
  %v1071 = vunpack.c.l.b16 %v279
  %v1072 = vunpack.c.h.b16 %v279
  %v1073 = vunpack.c.l.b16 %v280
  %v1074 = vunpack.c.h.b16 %v280
  %v1075 = vunpack.c.l.b16 %v281
  %v1076 = vunpack.c.h.b16 %v281
  %v1077 = vunpack.c.l.b16 %v282
  %v1078 = vunpack.c.h.b16 %v282
  %v1079 = vpack.c.b16 %v571, %v567
  %v1080 = vpack.c.b16 %v572, %v568
  %v1081 = vpack.c.b16 %v573, %v569
  %v1082 = vpack.c.b16 %v574, %v570
  %v1083 = vpack.c.b16 %v579, %v575
  %v1084 = vpack.c.b16 %v580, %v576
  %v1085 = vpack.c.b16 %v581, %v577
  %v1086 = vpack.c.b16 %v582, %v578
  %v1087 = vpack.c.b16 %v587, %v583
  %v1088 = vpack.c.b16 %v588, %v584
  %v1089 = vpack.c.b16 %v589, %v585
  %v1090 = vpack.c.b16 %v590, %v586
  %v1091 = vpack.c.b16 %v595, %v591
  %v1092 = vpack.c.b16 %v596, %v592
  %v1093 = vpack.c.b16 %v597, %v593
  %v1094 = vpack.c.b16 %v598, %v594
  %v1095 = vpack.c.b16 %v603, %v599
  %v1096 = vpack.c.b16 %v604, %v600
  %v1097 = vpack.c.b16 %v605, %v601
  %v1098 = vpack.c.b16 %v606, %v602
  %v1099 = vpack.c.b16 %v611, %v607
  %v1100 = vpack.c.b16 %v612, %v608
  %v1101 = vpack.c.b16 %v613, %v609
  %v1102 = vpack.c.b16 %v614, %v610
  %v1103 = vpack.c.b16 %v619, %v615
  %v1104 = vpack.c.b16 %v620, %v616
  %v1105 = vpack.c.b16 %v621, %v617
  %v1106 = vpack.c.b16 %v622, %v618
  %v1107 = vpack.c.b16 %v627, %v623
  %v1108 = vpack.c.b16 %v628, %v624
  %v1109 = vpack.c.b16 %v629, %v625
  %v1110 = vpack.c.b16 %v630, %v626
  %v1111 = vpack.c.b16 %v635, %v631
  %v1112 = vpack.c.b16 %v636, %v632
  %v1113 = vpack.c.b16 %v637, %v633
  %v1114 = vpack.c.b16 %v638, %v634
  %v1115 = vpack.c.b16 %v643, %v639
  %v1116 = vpack.c.b16 %v644, %v640
  %v1117 = vpack.c.b16 %v645, %v641
  %v1118 = vpack.c.b16 %v646, %v642
  %v1119 = vpack.c.b16 %v651, %v647
  %v1120 = vpack.c.b16 %v652, %v648
  %v1121 = vpack.c.b16 %v653, %v649
  %v1122 = vpack.c.b16 %v654, %v650
  %v1123 = vpack.c.b16 %v659, %v655
  %v1124 = vpack.c.b16 %v660, %v656
  %v1125 = vpack.c.b16 %v661, %v657
  %v1126 = vpack.c.b16 %v662, %v658
  %v1127 = vpack.c.b16 %v667, %v663
  %v1128 = vpack.c.b16 %v668, %v664
  %v1129 = vpack.c.b16 %v669, %v665
  %v1130 = vpack.c.b16 %v670, %v666
  %v1131 = vpack.c.b16 %v675, %v671
  %v1132 = vpack.c.b16 %v676, %v672
  %v1133 = vpack.c.b16 %v677, %v673
  %v1134 = vpack.c.b16 %v678, %v674
  %v1135 = vpack.c.b16 %v683, %v679
  %v1136 = vpack.c.b16 %v684, %v680
  %v1137 = vpack.c.b16 %v685, %v681
  %v1138 = vpack.c.b16 %v686, %v682
  %v1139 = vpack.c.b16 %v691, %v687
  %v1140 = vpack.c.b16 %v692, %v688
  %v1141 = vpack.c.b16 %v693, %v689
  %v1142 = vpack.c.b16 %v694, %v690
  %v1143 = vpack.c.b16 %v699, %v695
  %v1144 = vpack.c.b16 %v700, %v696
  %v1145 = vpack.c.b16 %v701, %v697
  %v1146 = vpack.c.b16 %v702, %v698
  %v1147 = vpack.c.b16 %v707, %v703
  %v1148 = vpack.c.b16 %v708, %v704
  %v1149 = vpack.c.b16 %v709, %v705
  %v1150 = vpack.c.b16 %v710, %v706
  %v1151 = vpack.c.b16 %v715, %v711
  %v1152 = vpack.c.b16 %v716, %v712
  %v1153 = vpack.c.b16 %v717, %v713
  %v1154 = vpack.c.b16 %v718, %v714
  %v1155 = vpack.c.b16 %v723, %v719
  %v1156 = vpack.c.b16 %v724, %v720
  %v1157 = vpack.c.b16 %v725, %v721
  %v1158 = vpack.c.b16 %v726, %v722
  %v1159 = vpack.c.b16 %v731, %v727
  %v1160 = vpack.c.b16 %v732, %v728
  %v1161 = vpack.c.b16 %v733, %v729
  %v1162 = vpack.c.b16 %v734, %v730
  %v1163 = vpack.c.b16 %v739, %v735
  %v1164 = vpack.c.b16 %v740, %v736
  %v1165 = vpack.c.b16 %v741, %v737
  %v1166 = vpack.c.b16 %v742, %v738
  %v1167 = vpack.c.b16 %v747, %v743
  %v1168 = vpack.c.b16 %v748, %v744
  %v1169 = vpack.c.b16 %v749, %v745
  %v1170 = vpack.c.b16 %v750, %v746
  %v1171 = vpack.c.b16 %v755, %v751
  %v1172 = vpack.c.b16 %v756, %v752
  %v1173 = vpack.c.b16 %v757, %v753
  %v1174 = vpack.c.b16 %v758, %v754
  %v1175 = vpack.c.b16 %v763, %v759
  %v1176 = vpack.c.b16 %v764, %v760
  %v1177 = vpack.c.b16 %v765, %v761
  %v1178 = vpack.c.b16 %v766, %v762
  %v1179 = vpack.c.b16 %v771, %v767
  %v1180 = vpack.c.b16 %v772, %v768
  %v1181 = vpack.c.b16 %v773, %v769
  %v1182 = vpack.c.b16 %v774, %v770
  %v1183 = vpack.c.b16 %v779, %v775
  %v1184 = vpack.c.b16 %v780, %v776
  %v1185 = vpack.c.b16 %v781, %v777
  %v1186 = vpack.c.b16 %v782, %v778
  %v1187 = vpack.c.b16 %v787, %v783
  %v1188 = vpack.c.b16 %v788, %v784
  %v1189 = vpack.c.b16 %v789, %v785
  %v1190 = vpack.c.b16 %v790, %v786
  %v1191 = vpack.c.b16 %v795, %v791
  %v1192 = vpack.c.b16 %v796, %v792
  %v1193 = vpack.c.b16 %v797, %v793
  %v1194 = vpack.c.b16 %v798, %v794
  %v1195 = vpack.c.b16 %v803, %v799
  %v1196 = vpack.c.b16 %v804, %v800
  %v1197 = vpack.c.b16 %v805, %v801
  %v1198 = vpack.c.b16 %v806, %v802
  %v1199 = vpack.c.b16 %v811, %v807
  %v1200 = vpack.c.b16 %v812, %v808
  %v1201 = vpack.c.b16 %v813, %v809
  %v1202 = vpack.c.b16 %v814, %v810
  %v1203 = vpack.c.b16 %v819, %v815
  %v1204 = vpack.c.b16 %v820, %v816
  %v1205 = vpack.c.b16 %v821, %v817
  %v1206 = vpack.c.b16 %v822, %v818
  %v1207 = vpack.c.b16 %v827, %v823
  %v1208 = vpack.c.b16 %v828, %v824
  %v1209 = vpack.c.b16 %v829, %v825
  %v1210 = vpack.c.b16 %v830, %v826
  %v1211 = vpack.c.b16 %v835, %v831
  %v1212 = vpack.c.b16 %v836, %v832
  %v1213 = vpack.c.b16 %v837, %v833
  %v1214 = vpack.c.b16 %v838, %v834
  %v1215 = vpack.c.b16 %v843, %v839
  %v1216 = vpack.c.b16 %v844, %v840
  %v1217 = vpack.c.b16 %v845, %v841
  %v1218 = vpack.c.b16 %v846, %v842
  %v1219 = vpack.c.b16 %v851, %v847
  %v1220 = vpack.c.b16 %v852, %v848
  %v1221 = vpack.c.b16 %v853, %v849
  %v1222 = vpack.c.b16 %v854, %v850
  %v1223 = vpack.c.b16 %v859, %v855
  %v1224 = vpack.c.b16 %v860, %v856
  %v1225 = vpack.c.b16 %v861, %v857
  %v1226 = vpack.c.b16 %v862, %v858
  %v1227 = vpack.c.b16 %v867, %v863
  %v1228 = vpack.c.b16 %v868, %v864
  %v1229 = vpack.c.b16 %v869, %v865
  %v1230 = vpack.c.b16 %v870, %v866
  %v1231 = vpack.c.b16 %v875, %v871
  %v1232 = vpack.c.b16 %v876, %v872
  %v1233 = vpack.c.b16 %v877, %v873
  %v1234 = vpack.c.b16 %v878, %v874
  %v1235 = vpack.c.b16 %v883, %v879
  %v1236 = vpack.c.b16 %v884, %v880
  %v1237 = vpack.c.b16 %v885, %v881
  %v1238 = vpack.c.b16 %v886, %v882
  %v1239 = vpack.c.b16 %v891, %v887
  %v1240 = vpack.c.b16 %v892, %v888
  %v1241 = vpack.c.b16 %v893, %v889
  %v1242 = vpack.c.b16 %v894, %v890
  %v1243 = vpack.c.b16 %v899, %v895
  %v1244 = vpack.c.b16 %v900, %v896
  %v1245 = vpack.c.b16 %v901, %v897
  %v1246 = vpack.c.b16 %v902, %v898
  %v1247 = vpack.c.b16 %v907, %v903
  %v1248 = vpack.c.b16 %v908, %v904
  %v1249 = vpack.c.b16 %v909, %v905
  %v1250 = vpack.c.b16 %v910, %v906
  %v1251 = vpack.c.b16 %v915, %v911
  %v1252 = vpack.c.b16 %v916, %v912
  %v1253 = vpack.c.b16 %v917, %v913
  %v1254 = vpack.c.b16 %v918, %v914
  %v1255 = vpack.c.b16 %v923, %v919
  %v1256 = vpack.c.b16 %v924, %v920
  %v1257 = vpack.c.b16 %v925, %v921
  %v1258 = vpack.c.b16 %v926, %v922
  %v1259 = vpack.c.b16 %v931, %v927
  %v1260 = vpack.c.b16 %v932, %v928
  %v1261 = vpack.c.b16 %v933, %v929
  %v1262 = vpack.c.b16 %v934, %v930
  %v1263 = vpack.c.b16 %v939, %v935
  %v1264 = vpack.c.b16 %v940, %v936
  %v1265 = vpack.c.b16 %v941, %v937
  %v1266 = vpack.c.b16 %v942, %v938
  %v1267 = vpack.c.b16 %v947, %v943
  %v1268 = vpack.c.b16 %v948, %v944
  %v1269 = vpack.c.b16 %v949, %v945
  %v1270 = vpack.c.b16 %v950, %v946
  %v1271 = vpack.c.b16 %v955, %v951
  %v1272 = vpack.c.b16 %v956, %v952
  %v1273 = vpack.c.b16 %v957, %v953
  %v1274 = vpack.c.b16 %v958, %v954
  %v1275 = vpack.c.b16 %v963, %v959
  %v1276 = vpack.c.b16 %v964, %v960
  %v1277 = vpack.c.b16 %v965, %v961
  %v1278 = vpack.c.b16 %v966, %v962
  %v1279 = vpack.c.b16 %v971, %v967
  %v1280 = vpack.c.b16 %v972, %v968
  %v1281 = vpack.c.b16 %v973, %v969
  %v1282 = vpack.c.b16 %v974, %v970
  %v1283 = vpack.c.b16 %v979, %v975
  %v1284 = vpack.c.b16 %v980, %v976
  %v1285 = vpack.c.b16 %v981, %v977
  %v1286 = vpack.c.b16 %v982, %v978
  %v1287 = vpack.c.b16 %v987, %v983
  %v1288 = vpack.c.b16 %v988, %v984
  %v1289 = vpack.c.b16 %v989, %v985
  %v1290 = vpack.c.b16 %v990, %v986
  %v1291 = vpack.c.b16 %v995, %v991
  %v1292 = vpack.c.b16 %v996, %v992
  %v1293 = vpack.c.b16 %v997, %v993
  %v1294 = vpack.c.b16 %v998, %v994
  %v1295 = vpack.c.b16 %v1003, %v999
  %v1296 = vpack.c.b16 %v1004, %v1000
  %v1297 = vpack.c.b16 %v1005, %v1001
  %v1298 = vpack.c.b16 %v1006, %v1002
  %v1299 = vpack.c.b16 %v1011, %v1007
  %v1300 = vpack.c.b16 %v1012, %v1008
  %v1301 = vpack.c.b16 %v1013, %v1009
  %v1302 = vpack.c.b16 %v1014, %v1010
  %v1303 = vpack.c.b16 %v1019, %v1015
  %v1304 = vpack.c.b16 %v1020, %v1016
  %v1305 = vpack.c.b16 %v1021, %v1017
  %v1306 = vpack.c.b16 %v1022, %v1018
  %v1307 = vpack.c.b16 %v1027, %v1023
  %v1308 = vpack.c.b16 %v1028, %v1024
  %v1309 = vpack.c.b16 %v1029, %v1025
  %v1310 = vpack.c.b16 %v1030, %v1026
  %v1311 = vpack.c.b16 %v1035, %v1031
  %v1312 = vpack.c.b16 %v1036, %v1032
  %v1313 = vpack.c.b16 %v1037, %v1033
  %v1314 = vpack.c.b16 %v1038, %v1034
  %v1315 = vpack.c.b16 %v1043, %v1039
  %v1316 = vpack.c.b16 %v1044, %v1040
  %v1317 = vpack.c.b16 %v1045, %v1041
  %v1318 = vpack.c.b16 %v1046, %v1042
  %v1319 = vpack.c.b16 %v1051, %v1047
  %v1320 = vpack.c.b16 %v1052, %v1048
  %v1321 = vpack.c.b16 %v1053, %v1049
  %v1322 = vpack.c.b16 %v1054, %v1050
  %v1323 = vpack.c.b16 %v1059, %v1055
  %v1324 = vpack.c.b16 %v1060, %v1056
  %v1325 = vpack.c.b16 %v1061, %v1057
  %v1326 = vpack.c.b16 %v1062, %v1058
  %v1327 = vpack.c.b16 %v1067, %v1063
  %v1328 = vpack.c.b16 %v1068, %v1064
  %v1329 = vpack.c.b16 %v1069, %v1065
  %v1330 = vpack.c.b16 %v1070, %v1066
  %v1331 = vpack.c.b16 %v1075, %v1071
  %v1332 = vpack.c.b16 %v1076, %v1072
  %v1333 = vpack.c.b16 %v1077, %v1073
  %v1334 = vpack.c.b16 %v1078, %v1074
  %1591 = vmatpush.bf16.msra.mxu0 %v1107
  %1592 = vmatpush.bf16.msra.mxu0 %v1103
  %1593 = vmatpush.bf16.msra.mxu0 %v1099
  %1594 = vmatpush.bf16.msra.mxu0 %v1095
  %1595 = vmatpush.bf16.msra.mxu0 %v1091
  %1596 = vmatpush.bf16.msra.mxu0 %v1087
  %1597 = vmatpush.bf16.msra.mxu0 %v1083
  %1598 = vmatpush.bf16.msra.mxu0 %v1079
  %1599 = vmatmul.bf16.gmra.mxu0 %v295
  %v1600 = vpop.f32.mrf.mxu0
  %v1601 = vadd.f32 %v285, %v1600
  %v1602 = vpop.f32.mrf.mxu0
  %1603 = vdwg.mxu0
  %1604 = vmatpush.bf16.msra.mxu0 %v1139
  %1605 = vmatpush.bf16.msra.mxu0 %v1135
  %1606 = vmatpush.bf16.msra.mxu0 %v1131
  %1607 = vmatpush.bf16.msra.mxu0 %v1127
  %1608 = vmatpush.bf16.msra.mxu0 %v1123
  %1609 = vmatpush.bf16.msra.mxu0 %v1119
  %1610 = vmatpush.bf16.msra.mxu0 %v1115
  %1611 = vmatpush.bf16.msra.mxu0 %v1111
  %1612 = vmatmul.bf16.gmra.mxu0 %v296
  %v1613 = vpop.f32.mrf.mxu0
  %v1614 = vadd.f32 %v1601, %v1613
  %v1615 = vpop.f32.mrf.mxu0
  %1616 = vdwg.mxu0
  %1617 = vmatpush.bf16.msra.mxu0 %v1171
  %1618 = vmatpush.bf16.msra.mxu0 %v1167
  %1619 = vmatpush.bf16.msra.mxu0 %v1163
  %1620 = vmatpush.bf16.msra.mxu0 %v1159
  %1621 = vmatpush.bf16.msra.mxu0 %v1155
  %1622 = vmatpush.bf16.msra.mxu0 %v1151
  %1623 = vmatpush.bf16.msra.mxu0 %v1147
  %1624 = vmatpush.bf16.msra.mxu0 %v1143
  %1625 = vmatmul.bf16.gmra.mxu0 %v297
  %v1626 = vpop.f32.mrf.mxu0
  %v1627 = vadd.f32 %v1614, %v1626
  %v1628 = vpop.f32.mrf.mxu0
  %1629 = vdwg.mxu0
  %1630 = vmatpush.bf16.msra.mxu0 %v1203
  %1631 = vmatpush.bf16.msra.mxu0 %v1199
  %1632 = vmatpush.bf16.msra.mxu0 %v1195
  %1633 = vmatpush.bf16.msra.mxu0 %v1191
  %1634 = vmatpush.bf16.msra.mxu0 %v1187
  %1635 = vmatpush.bf16.msra.mxu0 %v1183
  %1636 = vmatpush.bf16.msra.mxu0 %v1179
  %1637 = vmatpush.bf16.msra.mxu0 %v1175
  %1638 = vmatmul.bf16.gmra.mxu0 %v298
  %v1639 = vpop.f32.mrf.mxu0
  %v1640 = vadd.f32 %v1627, %v1639
  %v1641 = vpop.f32.mrf.mxu0
  %1642 = vdwg.mxu0
  %1643 = vmatpush.bf16.msra.mxu0 %v1235
  %1644 = vmatpush.bf16.msra.mxu0 %v1231
  %1645 = vmatpush.bf16.msra.mxu0 %v1227
  %1646 = vmatpush.bf16.msra.mxu0 %v1223
  %1647 = vmatpush.bf16.msra.mxu0 %v1219
  %1648 = vmatpush.bf16.msra.mxu0 %v1215
  %1649 = vmatpush.bf16.msra.mxu0 %v1211
  %1650 = vmatpush.bf16.msra.mxu0 %v1207
  %1651 = vmatmul.bf16.gmra.mxu0 %v299
  %v1652 = vpop.f32.mrf.mxu0
  %v1653 = vadd.f32 %v1640, %v1652
  %v1654 = vpop.f32.mrf.mxu0
  %1655 = vdwg.mxu0
  %1656 = vmatpush.bf16.msra.mxu0 %v1267
  %1657 = vmatpush.bf16.msra.mxu0 %v1263
  %1658 = vmatpush.bf16.msra.mxu0 %v1259
  %1659 = vmatpush.bf16.msra.mxu0 %v1255
  %1660 = vmatpush.bf16.msra.mxu0 %v1251
  %1661 = vmatpush.bf16.msra.mxu0 %v1247
  %1662 = vmatpush.bf16.msra.mxu0 %v1243
  %1663 = vmatpush.bf16.msra.mxu0 %v1239
  %1664 = vmatmul.bf16.gmra.mxu0 %v300
  %v1665 = vpop.f32.mrf.mxu0
  %v1666 = vadd.f32 %v1653, %v1665
  %v1667 = vpop.f32.mrf.mxu0
  %1668 = vdwg.mxu0
  %1669 = vmatpush.bf16.msra.mxu0 %v1299
  %1670 = vmatpush.bf16.msra.mxu0 %v1295
  %1671 = vmatpush.bf16.msra.mxu0 %v1291
  %1672 = vmatpush.bf16.msra.mxu0 %v1287
  %1673 = vmatpush.bf16.msra.mxu0 %v1283
  %1674 = vmatpush.bf16.msra.mxu0 %v1279
  %1675 = vmatpush.bf16.msra.mxu0 %v1275
  %1676 = vmatpush.bf16.msra.mxu0 %v1271
  %1677 = vmatmul.bf16.gmra.mxu0 %v301
  %v1678 = vpop.f32.mrf.mxu0
  %v1679 = vadd.f32 %v1666, %v1678
  %v1680 = vpop.f32.mrf.mxu0
  %1681 = vdwg.mxu0
  %1682 = vmatpush.bf16.msra.mxu0 %v1331
  %1683 = vmatpush.bf16.msra.mxu0 %v1327
  %1684 = vmatpush.bf16.msra.mxu0 %v1323
  %1685 = vmatpush.bf16.msra.mxu0 %v1319
  %1686 = vmatpush.bf16.msra.mxu0 %v1315
  %1687 = vmatpush.bf16.msra.mxu0 %v1311
  %1688 = vmatpush.bf16.msra.mxu0 %v1307
  %1689 = vmatpush.bf16.msra.mxu0 %v1303
  %1690 = vmatmul.bf16.gmra.mxu0 %v302
  %v1691 = vpop.f32.mrf.mxu0
  %v1692 = vadd.f32 %v1679, %v1691
  %v1693 = vpop.f32.mrf.mxu0
  %1694 = vdwg.mxu0
  %1695 = vmatpush.bf16.msra.mxu0 %v1108
  %1696 = vmatpush.bf16.msra.mxu0 %v1104
  %1697 = vmatpush.bf16.msra.mxu0 %v1100
  %1698 = vmatpush.bf16.msra.mxu0 %v1096
  %1699 = vmatpush.bf16.msra.mxu0 %v1092
  %1700 = vmatpush.bf16.msra.mxu0 %v1088
  %1701 = vmatpush.bf16.msra.mxu0 %v1084
  %1702 = vmatpush.bf16.msra.mxu0 %v1080
  %1703 = vmatmul.bf16.gmra.mxu0 %v295
  %v1704 = vpop.f32.mrf.mxu0
  %v1705 = vadd.f32 %v286, %v1704
  %v1706 = vpop.f32.mrf.mxu0
  %1707 = vdwg.mxu0
  %1708 = vmatpush.bf16.msra.mxu0 %v1140
  %1709 = vmatpush.bf16.msra.mxu0 %v1136
  %1710 = vmatpush.bf16.msra.mxu0 %v1132
  %1711 = vmatpush.bf16.msra.mxu0 %v1128
  %1712 = vmatpush.bf16.msra.mxu0 %v1124
  %1713 = vmatpush.bf16.msra.mxu0 %v1120
  %1714 = vmatpush.bf16.msra.mxu0 %v1116
  %1715 = vmatpush.bf16.msra.mxu0 %v1112
  %1716 = vmatmul.bf16.gmra.mxu0 %v296
  %v1717 = vpop.f32.mrf.mxu0
  %v1718 = vadd.f32 %v1705, %v1717
  %v1719 = vpop.f32.mrf.mxu0
  %1720 = vdwg.mxu0
  %1721 = vmatpush.bf16.msra.mxu0 %v1172
  %1722 = vmatpush.bf16.msra.mxu0 %v1168
  %1723 = vmatpush.bf16.msra.mxu0 %v1164
  %1724 = vmatpush.bf16.msra.mxu0 %v1160
  %1725 = vmatpush.bf16.msra.mxu0 %v1156
  %1726 = vmatpush.bf16.msra.mxu0 %v1152
  %1727 = vmatpush.bf16.msra.mxu0 %v1148
  %1728 = vmatpush.bf16.msra.mxu0 %v1144
  %1729 = vmatmul.bf16.gmra.mxu0 %v297
  %v1730 = vpop.f32.mrf.mxu0
  %v1731 = vadd.f32 %v1718, %v1730
  %v1732 = vpop.f32.mrf.mxu0
  %1733 = vdwg.mxu0
  %1734 = vmatpush.bf16.msra.mxu0 %v1204
  %1735 = vmatpush.bf16.msra.mxu0 %v1200
  %1736 = vmatpush.bf16.msra.mxu0 %v1196
  %1737 = vmatpush.bf16.msra.mxu0 %v1192
  %1738 = vmatpush.bf16.msra.mxu0 %v1188
  %1739 = vmatpush.bf16.msra.mxu0 %v1184
  %1740 = vmatpush.bf16.msra.mxu0 %v1180
  %1741 = vmatpush.bf16.msra.mxu0 %v1176
  %1742 = vmatmul.bf16.gmra.mxu0 %v298
  %v1743 = vpop.f32.mrf.mxu0
  %v1744 = vadd.f32 %v1731, %v1743
  %v1745 = vpop.f32.mrf.mxu0
  %1746 = vdwg.mxu0
  %1747 = vmatpush.bf16.msra.mxu0 %v1236
  %1748 = vmatpush.bf16.msra.mxu0 %v1232
  %1749 = vmatpush.bf16.msra.mxu0 %v1228
  %1750 = vmatpush.bf16.msra.mxu0 %v1224
  %1751 = vmatpush.bf16.msra.mxu0 %v1220
  %1752 = vmatpush.bf16.msra.mxu0 %v1216
  %1753 = vmatpush.bf16.msra.mxu0 %v1212
  %1754 = vmatpush.bf16.msra.mxu0 %v1208
  %1755 = vmatmul.bf16.gmra.mxu0 %v299
  %v1756 = vpop.f32.mrf.mxu0
  %v1757 = vadd.f32 %v1744, %v1756
  %v1758 = vpop.f32.mrf.mxu0
  %1759 = vdwg.mxu0
  %1760 = vmatpush.bf16.msra.mxu0 %v1268
  %1761 = vmatpush.bf16.msra.mxu0 %v1264
  %1762 = vmatpush.bf16.msra.mxu0 %v1260
  %1763 = vmatpush.bf16.msra.mxu0 %v1256
  %1764 = vmatpush.bf16.msra.mxu0 %v1252
  %1765 = vmatpush.bf16.msra.mxu0 %v1248
  %1766 = vmatpush.bf16.msra.mxu0 %v1244
  %1767 = vmatpush.bf16.msra.mxu0 %v1240
  %1768 = vmatmul.bf16.gmra.mxu0 %v300
  %v1769 = vpop.f32.mrf.mxu0
  %v1770 = vadd.f32 %v1757, %v1769
  %v1771 = vpop.f32.mrf.mxu0
  %1772 = vdwg.mxu0
  %1773 = vmatpush.bf16.msra.mxu0 %v1300
  %1774 = vmatpush.bf16.msra.mxu0 %v1296
  %1775 = vmatpush.bf16.msra.mxu0 %v1292
  %1776 = vmatpush.bf16.msra.mxu0 %v1288
  %1777 = vmatpush.bf16.msra.mxu0 %v1284
  %1778 = vmatpush.bf16.msra.mxu0 %v1280
  %1779 = vmatpush.bf16.msra.mxu0 %v1276
  %1780 = vmatpush.bf16.msra.mxu0 %v1272
  %1781 = vmatmul.bf16.gmra.mxu0 %v301
  %v1782 = vpop.f32.mrf.mxu0
  %v1783 = vadd.f32 %v1770, %v1782
  %v1784 = vpop.f32.mrf.mxu0
  %1785 = vdwg.mxu0
  %1786 = vmatpush.bf16.msra.mxu0 %v1332
  %1787 = vmatpush.bf16.msra.mxu0 %v1328
  %1788 = vmatpush.bf16.msra.mxu0 %v1324
  %1789 = vmatpush.bf16.msra.mxu0 %v1320
  %1790 = vmatpush.bf16.msra.mxu0 %v1316
  %1791 = vmatpush.bf16.msra.mxu0 %v1312
  %1792 = vmatpush.bf16.msra.mxu0 %v1308
  %1793 = vmatpush.bf16.msra.mxu0 %v1304
  %1794 = vmatmul.bf16.gmra.mxu0 %v302
  %v1795 = vpop.f32.mrf.mxu0
  %v1796 = vadd.f32 %v1783, %v1795
  %v1797 = vpop.f32.mrf.mxu0
  %1798 = vdwg.mxu0
  %1799 = vmatpush.bf16.msra.mxu0 %v1109
  %1800 = vmatpush.bf16.msra.mxu0 %v1105
  %1801 = vmatpush.bf16.msra.mxu0 %v1101
  %1802 = vmatpush.bf16.msra.mxu0 %v1097
  %1803 = vmatpush.bf16.msra.mxu0 %v1093
  %1804 = vmatpush.bf16.msra.mxu0 %v1089
  %1805 = vmatpush.bf16.msra.mxu0 %v1085
  %1806 = vmatpush.bf16.msra.mxu0 %v1081
  %1807 = vmatmul.bf16.gmra.mxu0 %v295
  %v1808 = vpop.f32.mrf.mxu0
  %v1809 = vadd.f32 %v287, %v1808
  %v1810 = vpop.f32.mrf.mxu0
  %1811 = vdwg.mxu0
  %1812 = vmatpush.bf16.msra.mxu0 %v1141
  %1813 = vmatpush.bf16.msra.mxu0 %v1137
  %1814 = vmatpush.bf16.msra.mxu0 %v1133
  %1815 = vmatpush.bf16.msra.mxu0 %v1129
  %1816 = vmatpush.bf16.msra.mxu0 %v1125
  %1817 = vmatpush.bf16.msra.mxu0 %v1121
  %1818 = vmatpush.bf16.msra.mxu0 %v1117
  %1819 = vmatpush.bf16.msra.mxu0 %v1113
  %1820 = vmatmul.bf16.gmra.mxu0 %v296
  %v1821 = vpop.f32.mrf.mxu0
  %v1822 = vadd.f32 %v1809, %v1821
  %v1823 = vpop.f32.mrf.mxu0
  %1824 = vdwg.mxu0
  %1825 = vmatpush.bf16.msra.mxu0 %v1173
  %1826 = vmatpush.bf16.msra.mxu0 %v1169
  %1827 = vmatpush.bf16.msra.mxu0 %v1165
  %1828 = vmatpush.bf16.msra.mxu0 %v1161
  %1829 = vmatpush.bf16.msra.mxu0 %v1157
  %1830 = vmatpush.bf16.msra.mxu0 %v1153
  %1831 = vmatpush.bf16.msra.mxu0 %v1149
  %1832 = vmatpush.bf16.msra.mxu0 %v1145
  %1833 = vmatmul.bf16.gmra.mxu0 %v297
  %v1834 = vpop.f32.mrf.mxu0
  %v1835 = vadd.f32 %v1822, %v1834
  %v1836 = vpop.f32.mrf.mxu0
  %1837 = vdwg.mxu0
  %1838 = vmatpush.bf16.msra.mxu0 %v1205
  %1839 = vmatpush.bf16.msra.mxu0 %v1201
  %1840 = vmatpush.bf16.msra.mxu0 %v1197
  %1841 = vmatpush.bf16.msra.mxu0 %v1193
  %1842 = vmatpush.bf16.msra.mxu0 %v1189
  %1843 = vmatpush.bf16.msra.mxu0 %v1185
  %1844 = vmatpush.bf16.msra.mxu0 %v1181
  %1845 = vmatpush.bf16.msra.mxu0 %v1177
  %1846 = vmatmul.bf16.gmra.mxu0 %v298
  %v1847 = vpop.f32.mrf.mxu0
  %v1848 = vadd.f32 %v1835, %v1847
  %v1849 = vpop.f32.mrf.mxu0
  %1850 = vdwg.mxu0
  %1851 = vmatpush.bf16.msra.mxu0 %v1237
  %1852 = vmatpush.bf16.msra.mxu0 %v1233
  %1853 = vmatpush.bf16.msra.mxu0 %v1229
  %1854 = vmatpush.bf16.msra.mxu0 %v1225
  %1855 = vmatpush.bf16.msra.mxu0 %v1221
  %1856 = vmatpush.bf16.msra.mxu0 %v1217
  %1857 = vmatpush.bf16.msra.mxu0 %v1213
  %1858 = vmatpush.bf16.msra.mxu0 %v1209
  %1859 = vmatmul.bf16.gmra.mxu0 %v299
  %v1860 = vpop.f32.mrf.mxu0
  %v1861 = vadd.f32 %v1848, %v1860
  %v1862 = vpop.f32.mrf.mxu0
  %1863 = vdwg.mxu0
  %1864 = vmatpush.bf16.msra.mxu0 %v1269
  %1865 = vmatpush.bf16.msra.mxu0 %v1265
  %1866 = vmatpush.bf16.msra.mxu0 %v1261
  %1867 = vmatpush.bf16.msra.mxu0 %v1257
  %1868 = vmatpush.bf16.msra.mxu0 %v1253
  %1869 = vmatpush.bf16.msra.mxu0 %v1249
  %1870 = vmatpush.bf16.msra.mxu0 %v1245
  %1871 = vmatpush.bf16.msra.mxu0 %v1241
  %1872 = vmatmul.bf16.gmra.mxu0 %v300
  %v1873 = vpop.f32.mrf.mxu0
  %v1874 = vadd.f32 %v1861, %v1873
  %v1875 = vpop.f32.mrf.mxu0
  %1876 = vdwg.mxu0
  %1877 = vmatpush.bf16.msra.mxu0 %v1301
  %1878 = vmatpush.bf16.msra.mxu0 %v1297
  %1879 = vmatpush.bf16.msra.mxu0 %v1293
  %1880 = vmatpush.bf16.msra.mxu0 %v1289
  %1881 = vmatpush.bf16.msra.mxu0 %v1285
  %1882 = vmatpush.bf16.msra.mxu0 %v1281
  %1883 = vmatpush.bf16.msra.mxu0 %v1277
  %1884 = vmatpush.bf16.msra.mxu0 %v1273
  %1885 = vmatmul.bf16.gmra.mxu0 %v301
  %v1886 = vpop.f32.mrf.mxu0
  %v1887 = vadd.f32 %v1874, %v1886
  %v1888 = vpop.f32.mrf.mxu0
  %1889 = vdwg.mxu0
  %1890 = vmatpush.bf16.msra.mxu0 %v1333
  %1891 = vmatpush.bf16.msra.mxu0 %v1329
  %1892 = vmatpush.bf16.msra.mxu0 %v1325
  %1893 = vmatpush.bf16.msra.mxu0 %v1321
  %1894 = vmatpush.bf16.msra.mxu0 %v1317
  %1895 = vmatpush.bf16.msra.mxu0 %v1313
  %1896 = vmatpush.bf16.msra.mxu0 %v1309
  %1897 = vmatpush.bf16.msra.mxu0 %v1305
  %1898 = vmatmul.bf16.gmra.mxu0 %v302
  %v1899 = vpop.f32.mrf.mxu0
  %v1900 = vadd.f32 %v1887, %v1899
  %v1901 = vpop.f32.mrf.mxu0
  %1902 = vdwg.mxu0
  %1903 = vmatpush.bf16.msra.mxu0 %v1110
  %1904 = vmatpush.bf16.msra.mxu0 %v1106
  %1905 = vmatpush.bf16.msra.mxu0 %v1102
  %1906 = vmatpush.bf16.msra.mxu0 %v1098
  %1907 = vmatpush.bf16.msra.mxu0 %v1094
  %1908 = vmatpush.bf16.msra.mxu0 %v1090
  %1909 = vmatpush.bf16.msra.mxu0 %v1086
  %1910 = vmatpush.bf16.msra.mxu0 %v1082
  %1911 = vmatmul.bf16.gmra.mxu0 %v295
  %v1912 = vpop.f32.mrf.mxu0
  %v1913 = vadd.f32 %v288, %v1912
  %v1914 = vpop.f32.mrf.mxu0
  %1915 = vdwg.mxu0
  %1916 = vmatpush.bf16.msra.mxu0 %v1142
  %1917 = vmatpush.bf16.msra.mxu0 %v1138
  %1918 = vmatpush.bf16.msra.mxu0 %v1134
  %1919 = vmatpush.bf16.msra.mxu0 %v1130
  %1920 = vmatpush.bf16.msra.mxu0 %v1126
  %1921 = vmatpush.bf16.msra.mxu0 %v1122
  %1922 = vmatpush.bf16.msra.mxu0 %v1118
  %1923 = vmatpush.bf16.msra.mxu0 %v1114
  %1924 = vmatmul.bf16.gmra.mxu0 %v296
  %v1925 = vpop.f32.mrf.mxu0
  %v1926 = vadd.f32 %v1913, %v1925
  %v1927 = vpop.f32.mrf.mxu0
  %1928 = vdwg.mxu0
  %1929 = vmatpush.bf16.msra.mxu0 %v1174
  %1930 = vmatpush.bf16.msra.mxu0 %v1170
  %1931 = vmatpush.bf16.msra.mxu0 %v1166
  %1932 = vmatpush.bf16.msra.mxu0 %v1162
  %1933 = vmatpush.bf16.msra.mxu0 %v1158
  %1934 = vmatpush.bf16.msra.mxu0 %v1154
  %1935 = vmatpush.bf16.msra.mxu0 %v1150
  %1936 = vmatpush.bf16.msra.mxu0 %v1146
  %1937 = vmatmul.bf16.gmra.mxu0 %v297
  %v1938 = vpop.f32.mrf.mxu0
  %v1939 = vadd.f32 %v1926, %v1938
  %v1940 = vpop.f32.mrf.mxu0
  %1941 = vdwg.mxu0
  %1942 = vmatpush.bf16.msra.mxu0 %v1206
  %1943 = vmatpush.bf16.msra.mxu0 %v1202
  %1944 = vmatpush.bf16.msra.mxu0 %v1198
  %1945 = vmatpush.bf16.msra.mxu0 %v1194
  %1946 = vmatpush.bf16.msra.mxu0 %v1190
  %1947 = vmatpush.bf16.msra.mxu0 %v1186
  %1948 = vmatpush.bf16.msra.mxu0 %v1182
  %1949 = vmatpush.bf16.msra.mxu0 %v1178
  %1950 = vmatmul.bf16.gmra.mxu0 %v298
  %v1951 = vpop.f32.mrf.mxu0
  %v1952 = vadd.f32 %v1939, %v1951
  %v1953 = vpop.f32.mrf.mxu0
  %1954 = vdwg.mxu0
  %1955 = vmatpush.bf16.msra.mxu0 %v1238
  %1956 = vmatpush.bf16.msra.mxu0 %v1234
  %1957 = vmatpush.bf16.msra.mxu0 %v1230
  %1958 = vmatpush.bf16.msra.mxu0 %v1226
  %1959 = vmatpush.bf16.msra.mxu0 %v1222
  %1960 = vmatpush.bf16.msra.mxu0 %v1218
  %1961 = vmatpush.bf16.msra.mxu0 %v1214
  %1962 = vmatpush.bf16.msra.mxu0 %v1210
  %1963 = vmatmul.bf16.gmra.mxu0 %v299
  %v1964 = vpop.f32.mrf.mxu0
  %v1965 = vadd.f32 %v1952, %v1964
  %v1966 = vpop.f32.mrf.mxu0
  %1967 = vdwg.mxu0
  %1968 = vmatpush.bf16.msra.mxu0 %v1270
  %1969 = vmatpush.bf16.msra.mxu0 %v1266
  %1970 = vmatpush.bf16.msra.mxu0 %v1262
  %1971 = vmatpush.bf16.msra.mxu0 %v1258
  %1972 = vmatpush.bf16.msra.mxu0 %v1254
  %1973 = vmatpush.bf16.msra.mxu0 %v1250
  %1974 = vmatpush.bf16.msra.mxu0 %v1246
  %1975 = vmatpush.bf16.msra.mxu0 %v1242
  %1976 = vmatmul.bf16.gmra.mxu0 %v300
  %v1977 = vpop.f32.mrf.mxu0
  %v1978 = vadd.f32 %v1965, %v1977
  %v1979 = vpop.f32.mrf.mxu0
  %1980 = vdwg.mxu0
  %1981 = vmatpush.bf16.msra.mxu0 %v1302
  %1982 = vmatpush.bf16.msra.mxu0 %v1298
  %1983 = vmatpush.bf16.msra.mxu0 %v1294
  %1984 = vmatpush.bf16.msra.mxu0 %v1290
  %1985 = vmatpush.bf16.msra.mxu0 %v1286
  %1986 = vmatpush.bf16.msra.mxu0 %v1282
  %1987 = vmatpush.bf16.msra.mxu0 %v1278
  %1988 = vmatpush.bf16.msra.mxu0 %v1274
  %1989 = vmatmul.bf16.gmra.mxu0 %v301
  %v1990 = vpop.f32.mrf.mxu0
  %v1991 = vadd.f32 %v1978, %v1990
  %v1992 = vpop.f32.mrf.mxu0
  %1993 = vdwg.mxu0
  %1994 = vmatpush.bf16.msra.mxu0 %v1334
  %1995 = vmatpush.bf16.msra.mxu0 %v1330
  %1996 = vmatpush.bf16.msra.mxu0 %v1326
  %1997 = vmatpush.bf16.msra.mxu0 %v1322
  %1998 = vmatpush.bf16.msra.mxu0 %v1318
  %1999 = vmatpush.bf16.msra.mxu0 %v1314
  %2000 = vmatpush.bf16.msra.mxu0 %v1310
  %2001 = vmatpush.bf16.msra.mxu0 %v1306
  %2002 = vmatmul.bf16.gmra.mxu0 %v302
  %v2003 = vpop.f32.mrf.mxu0
  %v2004 = vadd.f32 %v1991, %v2003
  %v2005 = vpop.f32.mrf.mxu0
  %2006 = vdwg.mxu0
  %v2007 = vmax.f32 %v1692, 0.0
  %v2008 = vmax.f32 %v1796, 0.0
  %v2009 = vmax.f32 %v1900, 0.0
  %v2010 = vmax.f32 %v2004, 0.0
  %v2011 = vpack.c.bf16 %v2007, %v2007
  %v2012 = vpack.c.bf16 %v2008, %v2008
  %v2013 = vpack.c.bf16 %v2009, %v2009
  %v2014 = vpack.c.bf16 %v2010, %v2010
  %v2015 = vld [vmem:[%s3] sm:$0xff]
  %v2016 = vld [vmem:[%s3 + $0x8] sm:$0xff]
  %v2017 = vld [vmem:[%s3 + $0x10] sm:$0xff]
  %v2018 = vld [vmem:[%s3 + $0x18] sm:$0xff]
  %v2019 = vld [vmem:[%s3 + $0x20] sm:$0xff]
  %v2020 = vld [vmem:[%s3 + $0x28] sm:$0xff]
  %v2021 = vld [vmem:[%s3 + $0x30] sm:$0xff]
  %v2022 = vld [vmem:[%s3 + $0x38] sm:$0xff]
  %v2023 = vld [vmem:[%s3 + $0x40] sm:$0xff]
  %v2024 = vld [vmem:[%s3 + $0x48] sm:$0xff]
  %v2025 = vld [vmem:[%s3 + $0x50] sm:$0xff]
  %v2026 = vld [vmem:[%s3 + $0x58] sm:$0xff]
  %v2027 = vld [vmem:[%s3 + $0x60] sm:$0xff]
  %v2028 = vld [vmem:[%s3 + $0x68] sm:$0xff]
  %v2029 = vld [vmem:[%s3 + $0x70] sm:$0xff]
  %v2030 = vld [vmem:[%s3 + $0x78] sm:$0xff]
  %v2031 = vld [vmem:[%s3 + $0x80] sm:$0xff]
  %v2032 = vld [vmem:[%s3 + $0x88] sm:$0xff]
  %v2033 = vld [vmem:[%s3 + $0x90] sm:$0xff]
  %v2034 = vld [vmem:[%s3 + $0x98] sm:$0xff]
  %v2035 = vld [vmem:[%s3 + $0xa0] sm:$0xff]
  %v2036 = vld [vmem:[%s3 + $0xa8] sm:$0xff]
  %v2037 = vld [vmem:[%s3 + $0xb0] sm:$0xff]
  %v2038 = vld [vmem:[%s3 + $0xb8] sm:$0xff]
  %v2039 = vld [vmem:[%s3 + $0xc0] sm:$0xff]
  %v2040 = vld [vmem:[%s3 + $0xc8] sm:$0xff]
  %v2041 = vld [vmem:[%s3 + $0xd0] sm:$0xff]
  %v2042 = vld [vmem:[%s3 + $0xd8] sm:$0xff]
  %v2043 = vld [vmem:[%s3 + $0xe0] sm:$0xff]
  %v2044 = vld [vmem:[%s3 + $0xe8] sm:$0xff]
  %v2045 = vld [vmem:[%s3 + $0xf0] sm:$0xff]
  %v2046 = vld [vmem:[%s3 + $0xf8] sm:$0xff]
  %v2047 = vld [vmem:[%s3 + $0x100] sm:$0xff]
  %v2048 = vld [vmem:[%s3 + $0x108] sm:$0xff]
  %v2049 = vld [vmem:[%s3 + $0x110] sm:$0xff]
  %v2050 = vld [vmem:[%s3 + $0x118] sm:$0xff]
  %v2051 = vld [vmem:[%s3 + $0x120] sm:$0xff]
  %v2052 = vld [vmem:[%s3 + $0x128] sm:$0xff]
  %v2053 = vld [vmem:[%s3 + $0x130] sm:$0xff]
  %v2054 = vld [vmem:[%s3 + $0x138] sm:$0xff]
  %v2055 = vld [vmem:[%s3 + $0x140] sm:$0xff]
  %v2056 = vld [vmem:[%s3 + $0x148] sm:$0xff]
  %v2057 = vld [vmem:[%s3 + $0x150] sm:$0xff]
  %v2058 = vld [vmem:[%s3 + $0x158] sm:$0xff]
  %v2059 = vld [vmem:[%s3 + $0x160] sm:$0xff]
  %v2060 = vld [vmem:[%s3 + $0x168] sm:$0xff]
  %v2061 = vld [vmem:[%s3 + $0x170] sm:$0xff]
  %v2062 = vld [vmem:[%s3 + $0x178] sm:$0xff]
  %v2063 = vld [vmem:[%s3 + $0x180] sm:$0xff]
  %v2064 = vld [vmem:[%s3 + $0x188] sm:$0xff]
  %v2065 = vld [vmem:[%s3 + $0x190] sm:$0xff]
  %v2066 = vld [vmem:[%s3 + $0x198] sm:$0xff]
  %v2067 = vld [vmem:[%s3 + $0x1a0] sm:$0xff]
  %v2068 = vld [vmem:[%s3 + $0x1a8] sm:$0xff]
  %v2069 = vld [vmem:[%s3 + $0x1b0] sm:$0xff]
  %v2070 = vld [vmem:[%s3 + $0x1b8] sm:$0xff]
  %v2071 = vld [vmem:[%s3 + $0x1c0] sm:$0xff]
  %v2072 = vld [vmem:[%s3 + $0x1c8] sm:$0xff]
  %v2073 = vld [vmem:[%s3 + $0x1d0] sm:$0xff]
  %v2074 = vld [vmem:[%s3 + $0x1d8] sm:$0xff]
  %v2075 = vld [vmem:[%s3 + $0x1e0] sm:$0xff]
  %v2076 = vld [vmem:[%s3 + $0x1e8] sm:$0xff]
  %v2077 = vld [vmem:[%s3 + $0x1f0] sm:$0xff]
  %v2078 = vld [vmem:[%s3 + $0x1f8] sm:$0xff]
  %v2079 = vld [vmem:[%s4] sm:$0x3]
  %v2081 = vperm.slane %v2079, 0
  %v2082 = vperm.slane %v2079, 1
  %v2149 = vunpack.c.l.b16 %v2015
  %v2150 = vunpack.c.h.b16 %v2015
  %v2151 = vunpack.c.l.b16 %v2016
  %v2152 = vunpack.c.h.b16 %v2016
  %v2153 = vunpack.c.l.b16 %v2017
  %v2154 = vunpack.c.h.b16 %v2017
  %v2155 = vunpack.c.l.b16 %v2018
  %v2156 = vunpack.c.h.b16 %v2018
  %v2157 = vunpack.c.l.b16 %v2019
  %v2158 = vunpack.c.h.b16 %v2019
  %v2159 = vunpack.c.l.b16 %v2020
  %v2160 = vunpack.c.h.b16 %v2020
  %v2161 = vunpack.c.l.b16 %v2021
  %v2162 = vunpack.c.h.b16 %v2021
  %v2163 = vunpack.c.l.b16 %v2022
  %v2164 = vunpack.c.h.b16 %v2022
  %v2165 = vunpack.c.l.b16 %v2023
  %v2166 = vunpack.c.h.b16 %v2023
  %v2167 = vunpack.c.l.b16 %v2024
  %v2168 = vunpack.c.h.b16 %v2024
  %v2169 = vunpack.c.l.b16 %v2025
  %v2170 = vunpack.c.h.b16 %v2025
  %v2171 = vunpack.c.l.b16 %v2026
  %v2172 = vunpack.c.h.b16 %v2026
  %v2173 = vunpack.c.l.b16 %v2027
  %v2174 = vunpack.c.h.b16 %v2027
  %v2175 = vunpack.c.l.b16 %v2028
  %v2176 = vunpack.c.h.b16 %v2028
  %v2177 = vunpack.c.l.b16 %v2029
  %v2178 = vunpack.c.h.b16 %v2029
  %v2179 = vunpack.c.l.b16 %v2030
  %v2180 = vunpack.c.h.b16 %v2030
  %v2181 = vunpack.c.l.b16 %v2031
  %v2182 = vunpack.c.h.b16 %v2031
  %v2183 = vunpack.c.l.b16 %v2032
  %v2184 = vunpack.c.h.b16 %v2032
  %v2185 = vunpack.c.l.b16 %v2033
  %v2186 = vunpack.c.h.b16 %v2033
  %v2187 = vunpack.c.l.b16 %v2034
  %v2188 = vunpack.c.h.b16 %v2034
  %v2189 = vunpack.c.l.b16 %v2035
  %v2190 = vunpack.c.h.b16 %v2035
  %v2191 = vunpack.c.l.b16 %v2036
  %v2192 = vunpack.c.h.b16 %v2036
  %v2193 = vunpack.c.l.b16 %v2037
  %v2194 = vunpack.c.h.b16 %v2037
  %v2195 = vunpack.c.l.b16 %v2038
  %v2196 = vunpack.c.h.b16 %v2038
  %v2197 = vunpack.c.l.b16 %v2039
  %v2198 = vunpack.c.h.b16 %v2039
  %v2199 = vunpack.c.l.b16 %v2040
  %v2200 = vunpack.c.h.b16 %v2040
  %v2201 = vunpack.c.l.b16 %v2041
  %v2202 = vunpack.c.h.b16 %v2041
  %v2203 = vunpack.c.l.b16 %v2042
  %v2204 = vunpack.c.h.b16 %v2042
  %v2205 = vunpack.c.l.b16 %v2043
  %v2206 = vunpack.c.h.b16 %v2043
  %v2207 = vunpack.c.l.b16 %v2044
  %v2208 = vunpack.c.h.b16 %v2044
  %v2209 = vunpack.c.l.b16 %v2045
  %v2210 = vunpack.c.h.b16 %v2045
  %v2211 = vunpack.c.l.b16 %v2046
  %v2212 = vunpack.c.h.b16 %v2046
  %v2213 = vunpack.c.l.b16 %v2047
  %v2214 = vunpack.c.h.b16 %v2047
  %v2215 = vunpack.c.l.b16 %v2048
  %v2216 = vunpack.c.h.b16 %v2048
  %v2217 = vunpack.c.l.b16 %v2049
  %v2218 = vunpack.c.h.b16 %v2049
  %v2219 = vunpack.c.l.b16 %v2050
  %v2220 = vunpack.c.h.b16 %v2050
  %v2221 = vunpack.c.l.b16 %v2051
  %v2222 = vunpack.c.h.b16 %v2051
  %v2223 = vunpack.c.l.b16 %v2052
  %v2224 = vunpack.c.h.b16 %v2052
  %v2225 = vunpack.c.l.b16 %v2053
  %v2226 = vunpack.c.h.b16 %v2053
  %v2227 = vunpack.c.l.b16 %v2054
  %v2228 = vunpack.c.h.b16 %v2054
  %v2229 = vunpack.c.l.b16 %v2055
  %v2230 = vunpack.c.h.b16 %v2055
  %v2231 = vunpack.c.l.b16 %v2056
  %v2232 = vunpack.c.h.b16 %v2056
  %v2233 = vunpack.c.l.b16 %v2057
  %v2234 = vunpack.c.h.b16 %v2057
  %v2235 = vunpack.c.l.b16 %v2058
  %v2236 = vunpack.c.h.b16 %v2058
  %v2237 = vunpack.c.l.b16 %v2059
  %v2238 = vunpack.c.h.b16 %v2059
  %v2239 = vunpack.c.l.b16 %v2060
  %v2240 = vunpack.c.h.b16 %v2060
  %v2241 = vunpack.c.l.b16 %v2061
  %v2242 = vunpack.c.h.b16 %v2061
  %v2243 = vunpack.c.l.b16 %v2062
  %v2244 = vunpack.c.h.b16 %v2062
  %v2245 = vunpack.c.l.b16 %v2063
  %v2246 = vunpack.c.h.b16 %v2063
  %v2247 = vunpack.c.l.b16 %v2064
  %v2248 = vunpack.c.h.b16 %v2064
  %v2249 = vunpack.c.l.b16 %v2065
  %v2250 = vunpack.c.h.b16 %v2065
  %v2251 = vunpack.c.l.b16 %v2066
  %v2252 = vunpack.c.h.b16 %v2066
  %v2253 = vunpack.c.l.b16 %v2067
  %v2254 = vunpack.c.h.b16 %v2067
  %v2255 = vunpack.c.l.b16 %v2068
  %v2256 = vunpack.c.h.b16 %v2068
  %v2257 = vunpack.c.l.b16 %v2069
  %v2258 = vunpack.c.h.b16 %v2069
  %v2259 = vunpack.c.l.b16 %v2070
  %v2260 = vunpack.c.h.b16 %v2070
  %v2261 = vunpack.c.l.b16 %v2071
  %v2262 = vunpack.c.h.b16 %v2071
  %v2263 = vunpack.c.l.b16 %v2072
  %v2264 = vunpack.c.h.b16 %v2072
  %v2265 = vunpack.c.l.b16 %v2073
  %v2266 = vunpack.c.h.b16 %v2073
  %v2267 = vunpack.c.l.b16 %v2074
  %v2268 = vunpack.c.h.b16 %v2074
  %v2269 = vunpack.c.l.b16 %v2075
  %v2270 = vunpack.c.h.b16 %v2075
  %v2271 = vunpack.c.l.b16 %v2076
  %v2272 = vunpack.c.h.b16 %v2076
  %v2273 = vunpack.c.l.b16 %v2077
  %v2274 = vunpack.c.h.b16 %v2077
  %v2275 = vunpack.c.l.b16 %v2078
  %v2276 = vunpack.c.h.b16 %v2078
  %v2277 = vpack.c.b16 %v2151, %v2149
  %v2278 = vpack.c.b16 %v2152, %v2150
  %v2279 = vpack.c.b16 %v2155, %v2153
  %v2280 = vpack.c.b16 %v2156, %v2154
  %v2281 = vpack.c.b16 %v2159, %v2157
  %v2282 = vpack.c.b16 %v2160, %v2158
  %v2283 = vpack.c.b16 %v2163, %v2161
  %v2284 = vpack.c.b16 %v2164, %v2162
  %v2285 = vpack.c.b16 %v2167, %v2165
  %v2286 = vpack.c.b16 %v2168, %v2166
  %v2287 = vpack.c.b16 %v2171, %v2169
  %v2288 = vpack.c.b16 %v2172, %v2170
  %v2289 = vpack.c.b16 %v2175, %v2173
  %v2290 = vpack.c.b16 %v2176, %v2174
  %v2291 = vpack.c.b16 %v2179, %v2177
  %v2292 = vpack.c.b16 %v2180, %v2178
  %v2293 = vpack.c.b16 %v2183, %v2181
  %v2294 = vpack.c.b16 %v2184, %v2182
  %v2295 = vpack.c.b16 %v2187, %v2185
  %v2296 = vpack.c.b16 %v2188, %v2186
  %v2297 = vpack.c.b16 %v2191, %v2189
  %v2298 = vpack.c.b16 %v2192, %v2190
  %v2299 = vpack.c.b16 %v2195, %v2193
  %v2300 = vpack.c.b16 %v2196, %v2194
  %v2301 = vpack.c.b16 %v2199, %v2197
  %v2302 = vpack.c.b16 %v2200, %v2198
  %v2303 = vpack.c.b16 %v2203, %v2201
  %v2304 = vpack.c.b16 %v2204, %v2202
  %v2305 = vpack.c.b16 %v2207, %v2205
  %v2306 = vpack.c.b16 %v2208, %v2206
  %v2307 = vpack.c.b16 %v2211, %v2209
  %v2308 = vpack.c.b16 %v2212, %v2210
  %v2309 = vpack.c.b16 %v2215, %v2213
  %v2310 = vpack.c.b16 %v2216, %v2214
  %v2311 = vpack.c.b16 %v2219, %v2217
  %v2312 = vpack.c.b16 %v2220, %v2218
  %v2313 = vpack.c.b16 %v2223, %v2221
  %v2314 = vpack.c.b16 %v2224, %v2222
  %v2315 = vpack.c.b16 %v2227, %v2225
  %v2316 = vpack.c.b16 %v2228, %v2226
  %v2317 = vpack.c.b16 %v2231, %v2229
  %v2318 = vpack.c.b16 %v2232, %v2230
  %v2319 = vpack.c.b16 %v2235, %v2233
  %v2320 = vpack.c.b16 %v2236, %v2234
  %v2321 = vpack.c.b16 %v2239, %v2237
  %v2322 = vpack.c.b16 %v2240, %v2238
  %v2323 = vpack.c.b16 %v2243, %v2241
  %v2324 = vpack.c.b16 %v2244, %v2242
  %v2325 = vpack.c.b16 %v2247, %v2245
  %v2326 = vpack.c.b16 %v2248, %v2246
  %v2327 = vpack.c.b16 %v2251, %v2249
  %v2328 = vpack.c.b16 %v2252, %v2250
  %v2329 = vpack.c.b16 %v2255, %v2253
  %v2330 = vpack.c.b16 %v2256, %v2254
  %v2331 = vpack.c.b16 %v2259, %v2257
  %v2332 = vpack.c.b16 %v2260, %v2258
  %v2333 = vpack.c.b16 %v2263, %v2261
  %v2334 = vpack.c.b16 %v2264, %v2262
  %v2335 = vpack.c.b16 %v2267, %v2265
  %v2336 = vpack.c.b16 %v2268, %v2266
  %v2337 = vpack.c.b16 %v2271, %v2269
  %v2338 = vpack.c.b16 %v2272, %v2270
  %v2339 = vpack.c.b16 %v2275, %v2273
  %v2340 = vpack.c.b16 %v2276, %v2274
  %2405 = vmatpush.bf16.msra.mxu0 %v2291
  %2406 = vmatpush.bf16.msra.mxu0 %v2289
  %2407 = vmatpush.bf16.msra.mxu0 %v2287
  %2408 = vmatpush.bf16.msra.mxu0 %v2285
  %2409 = vmatpush.bf16.msra.mxu0 %v2283
  %2410 = vmatpush.bf16.msra.mxu0 %v2281
  %2411 = vmatpush.bf16.msra.mxu0 %v2279
  %2412 = vmatpush.bf16.msra.mxu0 %v2277
  %2413 = vmatmul.bf16.gmra.mxu0 %v2011
  %v2414 = vpop.f32.mrf.mxu0
  %v2415 = vadd.f32 %v2081, %v2414
  %v2416 = vpop.f32.mrf.mxu0
  %2417 = vdwg.mxu0
  %2418 = vmatpush.bf16.msra.mxu0 %v2307
  %2419 = vmatpush.bf16.msra.mxu0 %v2305
  %2420 = vmatpush.bf16.msra.mxu0 %v2303
  %2421 = vmatpush.bf16.msra.mxu0 %v2301
  %2422 = vmatpush.bf16.msra.mxu0 %v2299
  %2423 = vmatpush.bf16.msra.mxu0 %v2297
  %2424 = vmatpush.bf16.msra.mxu0 %v2295
  %2425 = vmatpush.bf16.msra.mxu0 %v2293
  %2426 = vmatmul.bf16.gmra.mxu0 %v2012
  %v2427 = vpop.f32.mrf.mxu0
  %v2428 = vadd.f32 %v2415, %v2427
  %v2429 = vpop.f32.mrf.mxu0
  %2430 = vdwg.mxu0
  %2431 = vmatpush.bf16.msra.mxu0 %v2323
  %2432 = vmatpush.bf16.msra.mxu0 %v2321
  %2433 = vmatpush.bf16.msra.mxu0 %v2319
  %2434 = vmatpush.bf16.msra.mxu0 %v2317
  %2435 = vmatpush.bf16.msra.mxu0 %v2315
  %2436 = vmatpush.bf16.msra.mxu0 %v2313
  %2437 = vmatpush.bf16.msra.mxu0 %v2311
  %2438 = vmatpush.bf16.msra.mxu0 %v2309
  %2439 = vmatmul.bf16.gmra.mxu0 %v2013
  %v2440 = vpop.f32.mrf.mxu0
  %v2441 = vadd.f32 %v2428, %v2440
  %v2442 = vpop.f32.mrf.mxu0
  %2443 = vdwg.mxu0
  %2444 = vmatpush.bf16.msra.mxu0 %v2339
  %2445 = vmatpush.bf16.msra.mxu0 %v2337
  %2446 = vmatpush.bf16.msra.mxu0 %v2335
  %2447 = vmatpush.bf16.msra.mxu0 %v2333
  %2448 = vmatpush.bf16.msra.mxu0 %v2331
  %2449 = vmatpush.bf16.msra.mxu0 %v2329
  %2450 = vmatpush.bf16.msra.mxu0 %v2327
  %2451 = vmatpush.bf16.msra.mxu0 %v2325
  %2452 = vmatmul.bf16.gmra.mxu0 %v2014
  %v2453 = vpop.f32.mrf.mxu0
  %v2454 = vadd.f32 %v2441, %v2453
  %v2455 = vpop.f32.mrf.mxu0
  %2456 = vdwg.mxu0
  %2457 = vmatpush.bf16.msra.mxu0 %v2292
  %2458 = vmatpush.bf16.msra.mxu0 %v2290
  %2459 = vmatpush.bf16.msra.mxu0 %v2288
  %2460 = vmatpush.bf16.msra.mxu0 %v2286
  %2461 = vmatpush.bf16.msra.mxu0 %v2284
  %2462 = vmatpush.bf16.msra.mxu0 %v2282
  %2463 = vmatpush.bf16.msra.mxu0 %v2280
  %2464 = vmatpush.bf16.msra.mxu0 %v2278
  %2465 = vmatmul.bf16.gmra.mxu0 %v2011
  %v2466 = vpop.f32.mrf.mxu0
  %v2467 = vadd.f32 %v2082, %v2466
  %v2468 = vpop.f32.mrf.mxu0
  %2469 = vdwg.mxu0
  %2470 = vmatpush.bf16.msra.mxu0 %v2308
  %2471 = vmatpush.bf16.msra.mxu0 %v2306
  %2472 = vmatpush.bf16.msra.mxu0 %v2304
  %2473 = vmatpush.bf16.msra.mxu0 %v2302
  %2474 = vmatpush.bf16.msra.mxu0 %v2300
  %2475 = vmatpush.bf16.msra.mxu0 %v2298
  %2476 = vmatpush.bf16.msra.mxu0 %v2296
  %2477 = vmatpush.bf16.msra.mxu0 %v2294
  %2478 = vmatmul.bf16.gmra.mxu0 %v2012
  %v2479 = vpop.f32.mrf.mxu0
  %v2480 = vadd.f32 %v2467, %v2479
  %v2481 = vpop.f32.mrf.mxu0
  %2482 = vdwg.mxu0
  %2483 = vmatpush.bf16.msra.mxu0 %v2324
  %2484 = vmatpush.bf16.msra.mxu0 %v2322
  %2485 = vmatpush.bf16.msra.mxu0 %v2320
  %2486 = vmatpush.bf16.msra.mxu0 %v2318
  %2487 = vmatpush.bf16.msra.mxu0 %v2316
  %2488 = vmatpush.bf16.msra.mxu0 %v2314
  %2489 = vmatpush.bf16.msra.mxu0 %v2312
  %2490 = vmatpush.bf16.msra.mxu0 %v2310
  %2491 = vmatmul.bf16.gmra.mxu0 %v2013
  %v2492 = vpop.f32.mrf.mxu0
  %v2493 = vadd.f32 %v2480, %v2492
  %v2494 = vpop.f32.mrf.mxu0
  %2495 = vdwg.mxu0
  %2496 = vmatpush.bf16.msra.mxu0 %v2340
  %2497 = vmatpush.bf16.msra.mxu0 %v2338
  %2498 = vmatpush.bf16.msra.mxu0 %v2336
  %2499 = vmatpush.bf16.msra.mxu0 %v2334
  %2500 = vmatpush.bf16.msra.mxu0 %v2332
  %2501 = vmatpush.bf16.msra.mxu0 %v2330
  %2502 = vmatpush.bf16.msra.mxu0 %v2328
  %2503 = vmatpush.bf16.msra.mxu0 %v2326
  %2504 = vmatmul.bf16.gmra.mxu0 %v2014
  %v2505 = vpop.f32.mrf.mxu0
  %v2506 = vadd.f32 %v2493, %v2505
  %v2507 = vpop.f32.mrf.mxu0
  %2508 = vdwg.mxu0
  %v2509 = vmax.f32 %v2454, 0.0
  %v2510 = vmax.f32 %v2506, 0.0
  %v2511 = vpack.c.bf16 %v2509, %v2509
  %v2512 = vpack.c.bf16 %v2510, %v2510
  %v2513 = vld [vmem:[%s5] sm:$0xf]
  %v2514 = vld [vmem:[%s5 + $0x4] sm:$0xf]
  %v2515 = vld [vmem:[%s5 + $0x8] sm:$0xf]
  %v2516 = vld [vmem:[%s5 + $0xc] sm:$0xf]
  %v2517 = vld [vmem:[%s5 + $0x10] sm:$0xf]
  %v2518 = vld [vmem:[%s5 + $0x14] sm:$0xf]
  %v2519 = vld [vmem:[%s5 + $0x18] sm:$0xf]
  %v2520 = vld [vmem:[%s5 + $0x1c] sm:$0xf]
  %v2521 = vld [vmem:[%s5 + $0x20] sm:$0xf]
  %v2522 = vld [vmem:[%s5 + $0x24] sm:$0xf]
  %v2523 = vld [vmem:[%s5 + $0x28] sm:$0xf]
  %v2524 = vld [vmem:[%s5 + $0x2c] sm:$0xf]
  %v2525 = vld [vmem:[%s5 + $0x30] sm:$0xf]
  %v2526 = vld [vmem:[%s5 + $0x34] sm:$0xf]
  %v2527 = vld [vmem:[%s5 + $0x38] sm:$0xf]
  %v2528 = vld [vmem:[%s5 + $0x3c] sm:$0xf]
  %v2529 = vld [vmem:[%s5 + $0x40] sm:$0xf]
  %v2530 = vld [vmem:[%s5 + $0x44] sm:$0xf]
  %v2531 = vld [vmem:[%s5 + $0x48] sm:$0xf]
  %v2532 = vld [vmem:[%s5 + $0x4c] sm:$0xf]
  %v2533 = vld [vmem:[%s5 + $0x50] sm:$0xf]
  %v2534 = vld [vmem:[%s5 + $0x54] sm:$0xf]
  %v2535 = vld [vmem:[%s5 + $0x58] sm:$0xf]
  %v2536 = vld [vmem:[%s5 + $0x5c] sm:$0xf]
  %v2537 = vld [vmem:[%s5 + $0x60] sm:$0xf]
  %v2538 = vld [vmem:[%s5 + $0x64] sm:$0xf]
  %v2539 = vld [vmem:[%s5 + $0x68] sm:$0xf]
  %v2540 = vld [vmem:[%s5 + $0x6c] sm:$0xf]
  %v2541 = vld [vmem:[%s5 + $0x70] sm:$0xf]
  %v2542 = vld [vmem:[%s5 + $0x74] sm:$0xf]
  %v2543 = vld [vmem:[%s5 + $0x78] sm:$0xf]
  %v2544 = vld [vmem:[%s5 + $0x7c] sm:$0xf]
  %v2545 = vld [vmem:[%s6] sm:$0x1]
  %v2547 = vperm.slane %v2545, 0
  %v2581 = vunpack.c.l.b16 %v2513
  %v2582 = vunpack.c.l.b16 %v2514
  %v2583 = vunpack.c.l.b16 %v2515
  %v2584 = vunpack.c.l.b16 %v2516
  %v2585 = vunpack.c.l.b16 %v2517
  %v2586 = vunpack.c.l.b16 %v2518
  %v2587 = vunpack.c.l.b16 %v2519
  %v2588 = vunpack.c.l.b16 %v2520
  %v2589 = vunpack.c.l.b16 %v2521
  %v2590 = vunpack.c.l.b16 %v2522
  %v2591 = vunpack.c.l.b16 %v2523
  %v2592 = vunpack.c.l.b16 %v2524
  %v2593 = vunpack.c.l.b16 %v2525
  %v2594 = vunpack.c.l.b16 %v2526
  %v2595 = vunpack.c.l.b16 %v2527
  %v2596 = vunpack.c.l.b16 %v2528
  %v2597 = vunpack.c.l.b16 %v2529
  %v2598 = vunpack.c.l.b16 %v2530
  %v2599 = vunpack.c.l.b16 %v2531
  %v2600 = vunpack.c.l.b16 %v2532
  %v2601 = vunpack.c.l.b16 %v2533
  %v2602 = vunpack.c.l.b16 %v2534
  %v2603 = vunpack.c.l.b16 %v2535
  %v2604 = vunpack.c.l.b16 %v2536
  %v2605 = vunpack.c.l.b16 %v2537
  %v2606 = vunpack.c.l.b16 %v2538
  %v2607 = vunpack.c.l.b16 %v2539
  %v2608 = vunpack.c.l.b16 %v2540
  %v2609 = vunpack.c.l.b16 %v2541
  %v2610 = vunpack.c.l.b16 %v2542
  %v2611 = vunpack.c.l.b16 %v2543
  %v2612 = vunpack.c.l.b16 %v2544
  %v2613 = vpack.c.b16 %v2582, %v2581
  %v2614 = vpack.c.b16 %v2584, %v2583
  %v2615 = vpack.c.b16 %v2586, %v2585
  %v2616 = vpack.c.b16 %v2588, %v2587
  %v2617 = vpack.c.b16 %v2590, %v2589
  %v2618 = vpack.c.b16 %v2592, %v2591
  %v2619 = vpack.c.b16 %v2594, %v2593
  %v2620 = vpack.c.b16 %v2596, %v2595
  %v2621 = vpack.c.b16 %v2598, %v2597
  %v2622 = vpack.c.b16 %v2600, %v2599
  %v2623 = vpack.c.b16 %v2602, %v2601
  %v2624 = vpack.c.b16 %v2604, %v2603
  %v2625 = vpack.c.b16 %v2606, %v2605
  %v2626 = vpack.c.b16 %v2608, %v2607
  %v2627 = vpack.c.b16 %v2610, %v2609
  %v2628 = vpack.c.b16 %v2612, %v2611
  %2645 = vmatpush.bf16.msra.mxu0 %v2620
  %2646 = vmatpush.bf16.msra.mxu0 %v2619
  %2647 = vmatpush.bf16.msra.mxu0 %v2618
  %2648 = vmatpush.bf16.msra.mxu0 %v2617
  %2649 = vmatpush.bf16.msra.mxu0 %v2616
  %2650 = vmatpush.bf16.msra.mxu0 %v2615
  %2651 = vmatpush.bf16.msra.mxu0 %v2614
  %2652 = vmatpush.bf16.msra.mxu0 %v2613
  %2653 = vmatmul.bf16.gmra.mxu0 %v2511
  %v2654 = vpop.f32.mrf.mxu0
  %v2655 = vadd.f32 %v2547, %v2654
  %v2656 = vpop.f32.mrf.mxu0
  %2657 = vdwg.mxu0
  %2658 = vmatpush.bf16.msra.mxu0 %v2628
  %2659 = vmatpush.bf16.msra.mxu0 %v2627
  %2660 = vmatpush.bf16.msra.mxu0 %v2626
  %2661 = vmatpush.bf16.msra.mxu0 %v2625
  %2662 = vmatpush.bf16.msra.mxu0 %v2624
  %2663 = vmatpush.bf16.msra.mxu0 %v2623
  %2664 = vmatpush.bf16.msra.mxu0 %v2622
  %2665 = vmatpush.bf16.msra.mxu0 %v2621
  %2666 = vmatmul.bf16.gmra.mxu0 %v2512
  %v2667 = vpop.f32.mrf.mxu0
  %v2668 = vadd.f32 %v2655, %v2667
  %v2669 = vpop.f32.mrf.mxu0
  %2670 = vdwg.mxu0
  %2671 = vst [vmem:[%s7] sm:$0x3] %v2668
  // Predicated region
  $region30: #{stnkd_forward.3} parent=0 // pred_check
    _
  $region31: #{stnkd_forward.3} parent=0 // pred_check_branch
    %2673 = sbr.rel (0) target = $region33
  $region32: #{stnkd_forward.3} parent=0 // pred_region
    _
  $region33: #{stnkd_forward.3} parent=0 // pred_fallthru
    _
  // Predicated region
  $region34: #{stnkd_forward.3} parent=0 // pred_check
    _
  $region35: #{stnkd_forward.3} parent=0 // pred_check_branch
    %2675 = sbr.rel (0) target = $region37
  $region36: #{stnkd_forward.3} parent=0 // pred_region
    _
  $region37: #{stnkd_forward.3} parent=0 // pred_fallthru
    _

</llo_original>
